<compile_context>
chip_gen: v7x
topology: tpu7x:2x2x1
jax: 0.10.0
libtpu: 0.0.40
codegen_flags: <defaults>
</compile_context>

<pallas_src>
import functools

import jax
import jax.numpy as jnp
import numpy as np
from jax.experimental import pallas as pl
from jax.experimental.pallas import tpu as pltpu


# --------------------------------------------------------------------------
# Fused kernel: one grid step == one batch element.
# --------------------------------------------------------------------------
def _fused_kernel(xe_ref, side_ref, w1sc_ref, w11_ref, w2_ref,
                  b1sc_ref, b11_ref, b2_ref, m5_ref, m3_ref,
                  o_ref, pbuf, cat_ext, out2_ext,
                  *, Cin, Cout, Ho, Wo, E5, E3):
    HW = Ho * Wo
    f32 = jnp.float32

    # The extended staging buffers only need well-defined (non-NaN) edge columns
    # (the masks zero every out-of-image contribution); zeroing the tiny buffers
    # outright is the simplest safe choice.
    cat_ext[...] = jnp.zeros_like(cat_ext)
    out2_ext[...] = jnp.zeros_like(out2_ext)

    def im2col(read, mask_ref, K, C):
        """Fill pbuf[0:K*K*C] with the masked im2col matrix (tap-major, then channel).

        read(shift) returns the (C, HW) lane-dense window whose entry at flat
        position p is the source at flat position p + shift; the per-tap mask
        zeroes every position whose 2-D source index falls outside the image,
        which implements SAME zero-padding exactly."""
        half = K // 2
        for dy in range(K):
            for dx in range(K):
                t = dy * K + dx
                s = (dy - half) * Wo + (dx - half)
                win = read(s) * mask_ref[t:t + 1, :]          # (C, HW)
                pbuf[t * C:(t + 1) * C, :] = win
        return K * K * C

    # ---- stage 1: conv1(5x5)+bn1 and sc_conv1(5x5)+sc_bn1 share one im2col and
    #      run as a single (2*Cout, 25*Cin) x (25*Cin, HW) MXU matmul.
    nrows = im2col(lambda s: xe_ref[0, :, E5 + s:E5 + s + HW], m5_ref, 5, Cin)
    r = jnp.dot(w1sc_ref[...], pbuf[0:nrows, :],
                preferred_element_type=f32) + b1sc_ref[...]
    out1 = jnp.maximum(r[0:Cout, :], 0.0)        # relu(bn1(conv1(x_up)))
    sc = r[Cout:2 * Cout, :]                     # sc_bn1(sc_conv1(x_up))

    # ---- stage 2: conv1_1(3x3)+bn1_1 over channel-concat([out1, side_input]).
    cat_ext[0:Cout, E3:E3 + HW] = out1
    cat_ext[Cout:2 * Cout, E3:E3 + HW] = side_ref[0].astype(f32)
    nrows = im2col(lambda s: cat_ext[:, E3 + s:E3 + s + HW], m3_ref, 3, 2 * Cout)
    r = jnp.dot(w11_ref[...], pbuf[0:nrows, :],
                preferred_element_type=f32) + b11_ref[...]
    out2 = jnp.maximum(r, 0.0)                   # relu(bn1_1(conv1_1(cat)))

    # ---- stage 3: conv2(3x3)+bn2, residual add, final relu.
    out2_ext[:, E3:E3 + HW] = out2
    nrows = im2col(lambda s: out2_ext[:, E3 + s:E3 + s + HW], m3_ref, 3, Cout)
    r = jnp.dot(w2_ref[...], pbuf[0:nrows, :],
                preferred_element_type=f32) + b2_ref[...]
    o_ref[0] = jnp.maximum(r + sc, 0.0).astype(o_ref.dtype)


# --------------------------------------------------------------------------
# Host-side helpers.
# --------------------------------------------------------------------------
def _weight_matrix(w_oihw, scale):
    """(Cout, Cin, K, K) PyTorch-layout weights -> (Cout, K*K*Cin) im2col matrix
    (tap-major, then channel) with the folded-BN scale multiplied in."""
    co, ci, k, _ = w_oihw.shape
    wm = jnp.transpose(w_oihw, (0, 2, 3, 1)).reshape(co, k * k * ci)
    return wm * scale[:, None]


def _conv_masks(K, H, W):
    """Per-tap 0/1 validity masks over the flattened (H, W) grid (SAME padding)."""
    P = K // 2
    r = np.arange(H * W) // W
    c = np.arange(H * W) % W
    m = np.zeros((K * K, H * W), np.float32)
    for dy in range(K):
        for dx in range(K):
            ok = ((r + dy - P >= 0) & (r + dy - P < H) &
                  (c + dx - P >= 0) & (c + dx - P < W))
            m[dy * K + dx] = ok
    return m


def up_pooling(x_nchw, oheight, owidth):
    """Unpool (zero-stuffing transposed conv, stride 2) + optional crop."""
    N, C, H, W = x_nchw.shape
    up = jnp.zeros((N, C, H, 2, W, 2), x_nchw.dtype)
    up = up.at[:, :, :, 0, :, 0].set(x_nchw).reshape(N, C, 2 * H, 2 * W)
    if oheight != 0 and owidth != 0:
        up = up[:, :, :oheight, :owidth]
    return up


def fold_bn(gamma, beta, mean, var, eps=1e-5):
    scale = gamma / jnp.sqrt(var + eps)
    return scale, beta - mean * scale


def init_params(key, in_channels, out_channels):
    ks = jax.random.split(key, 8)
    p = {}
    # conv weights in PyTorch OIHW layout
    p["w1"] = 0.1 * jax.random.normal(ks[0], (out_channels, in_channels, 5, 5), jnp.float32)
    p["w11"] = 0.1 * jax.random.normal(ks[1], (out_channels, 2 * out_channels, 3, 3), jnp.float32)
    p["w2"] = 0.1 * jax.random.normal(ks[2], (out_channels, out_channels, 3, 3), jnp.float32)
    p["wsc"] = 0.1 * jax.random.normal(ks[3], (out_channels, in_channels, 5, 5), jnp.float32)

    def bn(k):
        k0, k1, k2, k3 = jax.random.split(k, 4)
        gamma = 0.5 + jax.random.uniform(k0, (out_channels,), jnp.float32)
        beta = 0.1 * jax.random.normal(k1, (out_channels,), jnp.float32)
        mean = 0.1 * jax.random.normal(k2, (out_channels,), jnp.float32)
        var = 0.5 + jax.random.uniform(k3, (out_channels,), jnp.float32)
        return fold_bn(gamma, beta, mean, var)

    p["s1"], p["b1"] = bn(ks[4])
    p["s11"], p["b11"] = bn(ks[5])
    p["s2"], p["b2"] = bn(ks[6])
    p["ssc"], p["bsc"] = bn(ks[7])
    return p


# --------------------------------------------------------------------------
# Public forward: NCHW in / NCHW out (PyTorch convention).
# --------------------------------------------------------------------------
def gudi_upproj_block_cat(x_nchw, side_nchw, params, oheight, owidth):
    xu = up_pooling(x_nchw, oheight, owidth)           # (N, Cin, Ho, Wo)
    N, Cin, Ho, Wo = xu.shape
    Cout = params["w1"].shape[0]
    HW = Ho * Wo
    E5 = 2 * Wo + 2      # max |flat shift| of a 5x5 tap
    E3 = Wo + 1          # max |flat shift| of a 3x3 tap

    # Lane-dense flattened inputs; x gets a small flat zero extension so every
    # tap window is an in-bounds slice.
    xe = jnp.pad(xu.reshape(N, Cin, HW), ((0, 0), (0, 0), (E5, E5)))
    side_f = side_nchw.reshape(N, Cout, HW)

    # Fold BN scale into the im2col weight matrices; conv1 & sc_conv1 stacked.
    w1sc = jnp.concatenate([_weight_matrix(params["w1"], params["s1"]),
                            _weight_matrix(params["wsc"], params["ssc"])], axis=0)
    b1sc = jnp.concatenate([params["b1"], params["bsc"]])[:, None]
    w11 = _weight_matrix(params["w11"], params["s11"])
    b11 = params["b11"][:, None]
    w2 = _weight_matrix(params["w2"], params["s2"])
    b2 = params["b2"][:, None]

    m5 = jnp.asarray(_conv_masks(5, Ho, Wo))
    m3 = jnp.asarray(_conv_masks(3, Ho, Wo))

    kernel = functools.partial(_fused_kernel, Cin=Cin, Cout=Cout,
                               Ho=Ho, Wo=Wo, E5=E5, E3=E3)

    def full2d(arr):
        return pl.BlockSpec(arr.shape, lambda n: (0, 0))

    prows = max(25 * Cin, 9 * 2 * Cout)   # shared im2col scratch row count

    out_flat = pl.pallas_call(
        kernel,
        out_shape=jax.ShapeDtypeStruct((N, Cout, HW), x_nchw.dtype),
        grid=(N,),
        in_specs=[
            pl.BlockSpec((1, Cin, HW + 2 * E5), lambda n: (n, 0, 0)),
            pl.BlockSpec((1, Cout, HW), lambda n: (n, 0, 0)),
            full2d(w1sc), full2d(w11), full2d(w2),
            full2d(b1sc), full2d(b11), full2d(b2),
            full2d(m5), full2d(m3),
        ],
        out_specs=pl.BlockSpec((1, Cout, HW), lambda n: (n, 0, 0)),
        scratch_shapes=[
            pltpu.VMEM((prows, HW), jnp.float32),             # shared im2col matrix
            pltpu.VMEM((2 * Cout, HW + 2 * E3), jnp.float32),  # concat(out1, side), extended
            pltpu.VMEM((Cout, HW + 2 * E3), jnp.float32),      # out2, extended
        ],
        compiler_params=pltpu.CompilerParams(dimension_semantics=("parallel",)),
    )(xe, side_f, w1sc, w11, w2, b1sc, b11, b2, m5, m3)

    return out_flat.reshape(N, Cout, Ho, Wo)


# --------------------------------------------------------------------------
# Pure-JAX reference (sanity check).
# --------------------------------------------------------------------------
def ref_forward(x, side, params, oheight, owidth):
    xu = up_pooling(x, oheight, owidth)

    def conv(inp, w, pad):
        return jax.lax.conv_general_dilated(
            inp, w, (1, 1), [(pad, pad), (pad, pad)],
            dimension_numbers=("NCHW", "OIHW", "NCHW"),
            precision=jax.lax.Precision.HIGHEST)

    def bn(y, s, b):
        return y * s[None, :, None, None] + b[None, :, None, None]

    out = jnp.maximum(bn(conv(xu, params["w1"], 2), params["s1"], params["b1"]), 0.0)
    out = jnp.concatenate([out, side], axis=1)
    out = jnp.maximum(bn(conv(out, params["w11"], 1), params["s11"], params["b11"]), 0.0)
    out = bn(conv(out, params["w2"], 1), params["s2"], params["b2"])
    sc = bn(conv(xu, params["wsc"], 2), params["ssc"], params["bsc"])
    return jnp.maximum(out + sc, 0.0)


if __name__ == "__main__":
    key = jax.random.PRNGKey(0)
    kx, ks, kp = jax.random.split(key, 3)

    N, Cin, Cout, H, W = 2, 4, 8, 8, 8
    oheight, owidth = 2 * H, 2 * W      # 16x16 after up-pooling -> H*W = 256 (lane-dense)

    x = jax.random.normal(kx, (N, Cin, H, W), jnp.float32)          # NCHW, like PyTorch
    side = jax.random.normal(ks, (N, Cout, oheight, owidth), jnp.float32)
    params = init_params(kp, Cin, Cout)

    fwd = jax.jit(lambda a, b: gudi_upproj_block_cat(a, b, params, oheight, owidth))
    out = jax.block_until_ready(fwd(x, side))

    ref = jax.block_until_ready(ref_forward(x, side, params, oheight, owidth))
    np.testing.assert_allclose(np.asarray(out), np.asarray(ref), atol=5e-3, rtol=5e-3)

    assert out.shape == (N, Cout, oheight, owidth)
    print("KERNEL_OK")
</pallas_src>

<mosaic_0001>
module attributes {stable_mosaic.version = 11 : i64} {
  func.func @_fused_kernel(%arg0: i32, %arg1: memref<1x4x324xf32, #tpu.memory_space<vmem>>, %arg2: memref<1x8x256xf32, #tpu.memory_space<vmem>>, %arg3: memref<16x100xf32, #tpu.memory_space<vmem>>, %arg4: memref<8x144xf32, #tpu.memory_space<vmem>>, %arg5: memref<8x72xf32, #tpu.memory_space<vmem>>, %arg6: memref<16x1xf32, #tpu.memory_space<vmem>>, %arg7: memref<8x1xf32, #tpu.memory_space<vmem>>, %arg8: memref<8x1xf32, #tpu.memory_space<vmem>>, %arg9: memref<25x256xf32, #tpu.memory_space<vmem>>, %arg10: memref<9x256xf32, #tpu.memory_space<vmem>>, %arg11: memref<1x8x256xf32, #tpu.memory_space<vmem>>, %arg12: memref<144x256xf32, #tpu.memory_space<vmem>>, %arg13: memref<16x290xf32, #tpu.memory_space<vmem>>, %arg14: memref<8x290xf32, #tpu.memory_space<vmem>>) attributes {dimension_semantics = [#tpu.dimension_semantics<parallel>], iteration_bounds = array<i64: 2>, scalar_prefetch = 0 : i64, scratch_operands = 3 : i64, tpu.core_type = #tpu.core_type<tc>, window_params = [{transform_indices = @transform_0, window_bounds = array<i64: 1, 4, 324>}, {transform_indices = @transform_1, window_bounds = array<i64: 1, 8, 256>}, {pipeline_mode = #tpu.pipeline_mode<synchronous>, transform_indices = @transform_2, window_bounds = array<i64: 16, 100>}, {pipeline_mode = #tpu.pipeline_mode<synchronous>, transform_indices = @transform_3, window_bounds = array<i64: 8, 144>}, {pipeline_mode = #tpu.pipeline_mode<synchronous>, transform_indices = @transform_4, window_bounds = array<i64: 8, 72>}, {pipeline_mode = #tpu.pipeline_mode<synchronous>, transform_indices = @transform_5, window_bounds = array<i64: 16, 1>}, {pipeline_mode = #tpu.pipeline_mode<synchronous>, transform_indices = @transform_6, window_bounds = array<i64: 8, 1>}, {pipeline_mode = #tpu.pipeline_mode<synchronous>, transform_indices = @transform_7, window_bounds = array<i64: 8, 1>}, {pipeline_mode = #tpu.pipeline_mode<synchronous>, transform_indices = @transform_8, window_bounds = array<i64: 25, 256>}, {pipeline_mode = #tpu.pipeline_mode<synchronous>, transform_indices = @transform_9, window_bounds = array<i64: 9, 256>}, {transform_indices = @transform_10, window_bounds = array<i64: 1, 8, 256>}]} {
    %cst = arith.constant 0.000000e+00 : f32
    %0 = vector.broadcast %cst : f32 to vector<16x290xf32>
    %c0 = arith.constant 0 : index
    %c0_0 = arith.constant 0 : index
    %1 = vector.load %arg13[%c0, %c0_0] : memref<16x290xf32, #tpu.memory_space<vmem>>, vector<16x290xf32>
    tpu.vector_store %arg13[%c0, %c0_0], %0 {strides = array<i32>} : memref<16x290xf32, #tpu.memory_space<vmem>>, vector<16x290xf32>,
    %cst_1 = arith.constant 0.000000e+00 : f32
    %2 = vector.broadcast %cst_1 : f32 to vector<8x290xf32>
    %c0_2 = arith.constant 0 : index
    %c0_3 = arith.constant 0 : index
    %3 = vector.load %arg14[%c0_2, %c0_3] : memref<8x290xf32, #tpu.memory_space<vmem>>, vector<8x290xf32>
    tpu.vector_store %arg14[%c0_2, %c0_3], %2 {strides = array<i32>} : memref<8x290xf32, #tpu.memory_space<vmem>>, vector<8x290xf32>,
    %c0_4 = arith.constant 0 : index
    %c0_5 = arith.constant 0 : index
    %c0_6 = arith.constant 0 : index
    %4 = vector.load %arg1[%c0_4, %c0_5, %c0_6] : memref<1x4x324xf32, #tpu.memory_space<vmem>>, vector<1x4x256xf32>
    %5 = vector.shape_cast %4 : vector<1x4x256xf32> to vector<4x256xf32>
    %c0_7 = arith.constant 0 : index
    %c0_8 = arith.constant 0 : index
    %6 = vector.load %arg9[%c0_7, %c0_8] : memref<25x256xf32, #tpu.memory_space<vmem>>, vector<1x256xf32>
    %7 = vector.broadcast %6 : vector<1x256xf32> to vector<4x256xf32>
    %8 = arith.mulf %5, %7 : vector<4x256xf32>
    %c0_9 = arith.constant 0 : index
    %c0_10 = arith.constant 0 : index
    %9 = vector.load %arg12[%c0_9, %c0_10] : memref<144x256xf32, #tpu.memory_space<vmem>>, vector<4x256xf32>
    tpu.vector_store %arg12[%c0_9, %c0_10], %8 {strides = array<i32>} : memref<144x256xf32, #tpu.memory_space<vmem>>, vector<4x256xf32>,
    %c0_11 = arith.constant 0 : index
    %c0_12 = arith.constant 0 : index
    %c1 = arith.constant 1 : index
    %10 = vector.load %arg1[%c0_11, %c0_12, %c1] : memref<1x4x324xf32, #tpu.memory_space<vmem>>, vector<1x4x256xf32>
    %11 = vector.shape_cast %10 : vector<1x4x256xf32> to vector<4x256xf32>
    %c1_13 = arith.constant 1 : index
    %c0_14 = arith.constant 0 : index
    %12 = vector.load %arg9[%c1_13, %c0_14] : memref<25x256xf32, #tpu.memory_space<vmem>>, vector<1x256xf32>
    %13 = vector.broadcast %12 : vector<1x256xf32> to vector<4x256xf32>
    %14 = arith.mulf %11, %13 : vector<4x256xf32>
    %c4 = arith.constant 4 : index
    %c0_15 = arith.constant 0 : index
    %15 = vector.load %arg12[%c4, %c0_15] : memref<144x256xf32, #tpu.memory_space<vmem>>, vector<4x256xf32>
    tpu.vector_store %arg12[%c4, %c0_15], %14 {strides = array<i32>} : memref<144x256xf32, #tpu.memory_space<vmem>>, vector<4x256xf32>,
    %c0_16 = arith.constant 0 : index
    %c0_17 = arith.constant 0 : index
    %c2 = arith.constant 2 : index
    %16 = vector.load %arg1[%c0_16, %c0_17, %c2] : memref<1x4x324xf32, #tpu.memory_space<vmem>>, vector<1x4x256xf32>
    %17 = vector.shape_cast %16 : vector<1x4x256xf32> to vector<4x256xf32>
    %c2_18 = arith.constant 2 : index
    %c0_19 = arith.constant 0 : index
    %18 = vector.load %arg9[%c2_18, %c0_19] : memref<25x256xf32, #tpu.memory_space<vmem>>, vector<1x256xf32>
    %19 = vector.broadcast %18 : vector<1x256xf32> to vector<4x256xf32>
    %20 = arith.mulf %17, %19 : vector<4x256xf32>
    %c8 = arith.constant 8 : index
    %c0_20 = arith.constant 0 : index
    %21 = vector.load %arg12[%c8, %c0_20] : memref<144x256xf32, #tpu.memory_space<vmem>>, vector<4x256xf32>
    tpu.vector_store %arg12[%c8, %c0_20], %20 {strides = array<i32>} : memref<144x256xf32, #tpu.memory_space<vmem>>, vector<4x256xf32>,
    %c0_21 = arith.constant 0 : index
    %c0_22 = arith.constant 0 : index
    %c3 = arith.constant 3 : index
    %22 = vector.load %arg1[%c0_21, %c0_22, %c3] : memref<1x4x324xf32, #tpu.memory_space<vmem>>, vector<1x4x256xf32>
    %23 = vector.shape_cast %22 : vector<1x4x256xf32> to vector<4x256xf32>
    %c3_23 = arith.constant 3 : index
    %c0_24 = arith.constant 0 : index
    %24 = vector.load %arg9[%c3_23, %c0_24] : memref<25x256xf32, #tpu.memory_space<vmem>>, vector<1x256xf32>
    %25 = vector.broadcast %24 : vector<1x256xf32> to vector<4x256xf32>
    %26 = arith.mulf %23, %25 : vector<4x256xf32>
    %c12 = arith.constant 12 : index
    %c0_25 = arith.constant 0 : index
    %27 = vector.load %arg12[%c12, %c0_25] : memref<144x256xf32, #tpu.memory_space<vmem>>, vector<4x256xf32>
    tpu.vector_store %arg12[%c12, %c0_25], %26 {strides = array<i32>} : memref<144x256xf32, #tpu.memory_space<vmem>>, vector<4x256xf32>,
    %c0_26 = arith.constant 0 : index
    %c0_27 = arith.constant 0 : index
    %c4_28 = arith.constant 4 : index
    %28 = vector.load %arg1[%c0_26, %c0_27, %c4_28] : memref<1x4x324xf32, #tpu.memory_space<vmem>>, vector<1x4x256xf32>
    %29 = vector.shape_cast %28 : vector<1x4x256xf32> to vector<4x256xf32>
    %c4_29 = arith.constant 4 : index
    %c0_30 = arith.constant 0 : index
    %30 = vector.load %arg9[%c4_29, %c0_30] : memref<25x256xf32, #tpu.memory_space<vmem>>, vector<1x256xf32>
    %31 = vector.broadcast %30 : vector<1x256xf32> to vector<4x256xf32>
    %32 = arith.mulf %29, %31 : vector<4x256xf32>
    %c16 = arith.constant 16 : index
    %c0_31 = arith.constant 0 : index
    %33 = vector.load %arg12[%c16, %c0_31] : memref<144x256xf32, #tpu.memory_space<vmem>>, vector<4x256xf32>
    tpu.vector_store %arg12[%c16, %c0_31], %32 {strides = array<i32>} : memref<144x256xf32, #tpu.memory_space<vmem>>, vector<4x256xf32>,
    %c0_32 = arith.constant 0 : index
    %c0_33 = arith.constant 0 : index
    %c16_34 = arith.constant 16 : index
    %34 = vector.load %arg1[%c0_32, %c0_33, %c16_34] : memref<1x4x324xf32, #tpu.memory_space<vmem>>, vector<1x4x256xf32>
    %35 = vector.shape_cast %34 : vector<1x4x256xf32> to vector<4x256xf32>
    %c5 = arith.constant 5 : index
    %c0_35 = arith.constant 0 : index
    %36 = vector.load %arg9[%c5, %c0_35] : memref<25x256xf32, #tpu.memory_space<vmem>>, vector<1x256xf32>
    %37 = vector.broadcast %36 : vector<1x256xf32> to vector<4x256xf32>
    %38 = arith.mulf %35, %37 : vector<4x256xf32>
    %c20 = arith.constant 20 : index
    %c0_36 = arith.constant 0 : index
    %39 = vector.load %arg12[%c20, %c0_36] : memref<144x256xf32, #tpu.memory_space<vmem>>, vector<4x256xf32>
    tpu.vector_store %arg12[%c20, %c0_36], %38 {strides = array<i32>} : memref<144x256xf32, #tpu.memory_space<vmem>>, vector<4x256xf32>,
    %c0_37 = arith.constant 0 : index
    %c0_38 = arith.constant 0 : index
    %c17 = arith.constant 17 : index
    %40 = vector.load %arg1[%c0_37, %c0_38, %c17] : memref<1x4x324xf32, #tpu.memory_space<vmem>>, vector<1x4x256xf32>
    %41 = vector.shape_cast %40 : vector<1x4x256xf32> to vector<4x256xf32>
    %c6 = arith.constant 6 : index
    %c0_39 = arith.constant 0 : index
    %42 = vector.load %arg9[%c6, %c0_39] : memref<25x256xf32, #tpu.memory_space<vmem>>, vector<1x256xf32>
    %43 = vector.broadcast %42 : vector<1x256xf32> to vector<4x256xf32>
    %44 = arith.mulf %41, %43 : vector<4x256xf32>
    %c24 = arith.constant 24 : index
    %c0_40 = arith.constant 0 : index
    %45 = vector.load %arg12[%c24, %c0_40] : memref<144x256xf32, #tpu.memory_space<vmem>>, vector<4x256xf32>
    tpu.vector_store %arg12[%c24, %c0_40], %44 {strides = array<i32>} : memref<144x256xf32, #tpu.memory_space<vmem>>, vector<4x256xf32>,
    %c0_41 = arith.constant 0 : index
    %c0_42 = arith.constant 0 : index
    %c18 = arith.constant 18 : index
    %46 = vector.load %arg1[%c0_41, %c0_42, %c18] : memref<1x4x324xf32, #tpu.memory_space<vmem>>, vector<1x4x256xf32>
    %47 = vector.shape_cast %46 : vector<1x4x256xf32> to vector<4x256xf32>
    %c7 = arith.constant 7 : index
    %c0_43 = arith.constant 0 : index
    %48 = vector.load %arg9[%c7, %c0_43] : memref<25x256xf32, #tpu.memory_space<vmem>>, vector<1x256xf32>
    %49 = vector.broadcast %48 : vector<1x256xf32> to vector<4x256xf32>
    %50 = arith.mulf %47, %49 : vector<4x256xf32>
    %c28 = arith.constant 28 : index
    %c0_44 = arith.constant 0 : index
    %51 = vector.load %arg12[%c28, %c0_44] : memref<144x256xf32, #tpu.memory_space<vmem>>, vector<4x256xf32>
    tpu.vector_store %arg12[%c28, %c0_44], %50 {strides = array<i32>} : memref<144x256xf32, #tpu.memory_space<vmem>>, vector<4x256xf32>,
    %c0_45 = arith.constant 0 : index
    %c0_46 = arith.constant 0 : index
    %c19 = arith.constant 19 : index
    %52 = vector.load %arg1[%c0_45, %c0_46, %c19] : memref<1x4x324xf32, #tpu.memory_space<vmem>>, vector<1x4x256xf32>
    %53 = vector.shape_cast %52 : vector<1x4x256xf32> to vector<4x256xf32>
    %c8_47 = arith.constant 8 : index
    %c0_48 = arith.constant 0 : index
    %54 = vector.load %arg9[%c8_47, %c0_48] : memref<25x256xf32, #tpu.memory_space<vmem>>, vector<1x256xf32>
    %55 = vector.broadcast %54 : vector<1x256xf32> to vector<4x256xf32>
    %56 = arith.mulf %53, %55 : vector<4x256xf32>
    %c32 = arith.constant 32 : index
    %c0_49 = arith.constant 0 : index
    %57 = vector.load %arg12[%c32, %c0_49] : memref<144x256xf32, #tpu.memory_space<vmem>>, vector<4x256xf32>
    tpu.vector_store %arg12[%c32, %c0_49], %56 {strides = array<i32>} : memref<144x256xf32, #tpu.memory_space<vmem>>, vector<4x256xf32>,
    %c0_50 = arith.constant 0 : index
    %c0_51 = arith.constant 0 : index
    %c20_52 = arith.constant 20 : index
    %58 = vector.load %arg1[%c0_50, %c0_51, %c20_52] : memref<1x4x324xf32, #tpu.memory_space<vmem>>, vector<1x4x256xf32>
    %59 = vector.shape_cast %58 : vector<1x4x256xf32> to vector<4x256xf32>
    %c9 = arith.constant 9 : index
    %c0_53 = arith.constant 0 : index
    %60 = vector.load %arg9[%c9, %c0_53] : memref<25x256xf32, #tpu.memory_space<vmem>>, vector<1x256xf32>
    %61 = vector.broadcast %60 : vector<1x256xf32> to vector<4x256xf32>
    %62 = arith.mulf %59, %61 : vector<4x256xf32>
    %c36 = arith.constant 36 : index
    %c0_54 = arith.constant 0 : index
    %63 = vector.load %arg12[%c36, %c0_54] : memref<144x256xf32, #tpu.memory_space<vmem>>, vector<4x256xf32>
    tpu.vector_store %arg12[%c36, %c0_54], %62 {strides = array<i32>} : memref<144x256xf32, #tpu.memory_space<vmem>>, vector<4x256xf32>,
    %c0_55 = arith.constant 0 : index
    %c0_56 = arith.constant 0 : index
    %c32_57 = arith.constant 32 : index
    %64 = vector.load %arg1[%c0_55, %c0_56, %c32_57] : memref<1x4x324xf32, #tpu.memory_space<vmem>>, vector<1x4x256xf32>
    %65 = vector.shape_cast %64 : vector<1x4x256xf32> to vector<4x256xf32>
    %c10 = arith.constant 10 : index
    %c0_58 = arith.constant 0 : index
    %66 = vector.load %arg9[%c10, %c0_58] : memref<25x256xf32, #tpu.memory_space<vmem>>, vector<1x256xf32>
    %67 = vector.broadcast %66 : vector<1x256xf32> to vector<4x256xf32>
    %68 = arith.mulf %65, %67 : vector<4x256xf32>
    %c40 = arith.constant 40 : index
    %c0_59 = arith.constant 0 : index
    %69 = vector.load %arg12[%c40, %c0_59] : memref<144x256xf32, #tpu.memory_space<vmem>>, vector<4x256xf32>
    tpu.vector_store %arg12[%c40, %c0_59], %68 {strides = array<i32>} : memref<144x256xf32, #tpu.memory_space<vmem>>, vector<4x256xf32>,
    %c0_60 = arith.constant 0 : index
    %c0_61 = arith.constant 0 : index
    %c33 = arith.constant 33 : index
    %70 = vector.load %arg1[%c0_60, %c0_61, %c33] : memref<1x4x324xf32, #tpu.memory_space<vmem>>, vector<1x4x256xf32>
    %71 = vector.shape_cast %70 : vector<1x4x256xf32> to vector<4x256xf32>
    %c11 = arith.constant 11 : index
    %c0_62 = arith.constant 0 : index
    %72 = vector.load %arg9[%c11, %c0_62] : memref<25x256xf32, #tpu.memory_space<vmem>>, vector<1x256xf32>
    %73 = vector.broadcast %72 : vector<1x256xf32> to vector<4x256xf32>
    %74 = arith.mulf %71, %73 : vector<4x256xf32>
    %c44 = arith.constant 44 : index
    %c0_63 = arith.constant 0 : index
    %75 = vector.load %arg12[%c44, %c0_63] : memref<144x256xf32, #tpu.memory_space<vmem>>, vector<4x256xf32>
    tpu.vector_store %arg12[%c44, %c0_63], %74 {strides = array<i32>} : memref<144x256xf32, #tpu.memory_space<vmem>>, vector<4x256xf32>,
    %c0_64 = arith.constant 0 : index
    %c0_65 = arith.constant 0 : index
    %c34 = arith.constant 34 : index
    %76 = vector.load %arg1[%c0_64, %c0_65, %c34] : memref<1x4x324xf32, #tpu.memory_space<vmem>>, vector<1x4x256xf32>
    %77 = vector.shape_cast %76 : vector<1x4x256xf32> to vector<4x256xf32>
    %c12_66 = arith.constant 12 : index
    %c0_67 = arith.constant 0 : index
    %78 = vector.load %arg9[%c12_66, %c0_67] : memref<25x256xf32, #tpu.memory_space<vmem>>, vector<1x256xf32>
    %79 = vector.broadcast %78 : vector<1x256xf32> to vector<4x256xf32>
    %80 = arith.mulf %77, %79 : vector<4x256xf32>
    %c48 = arith.constant 48 : index
    %c0_68 = arith.constant 0 : index
    %81 = vector.load %arg12[%c48, %c0_68] : memref<144x256xf32, #tpu.memory_space<vmem>>, vector<4x256xf32>
    tpu.vector_store %arg12[%c48, %c0_68], %80 {strides = array<i32>} : memref<144x256xf32, #tpu.memory_space<vmem>>, vector<4x256xf32>,
    %c0_69 = arith.constant 0 : index
    %c0_70 = arith.constant 0 : index
    %c35 = arith.constant 35 : index
    %82 = vector.load %arg1[%c0_69, %c0_70, %c35] : memref<1x4x324xf32, #tpu.memory_space<vmem>>, vector<1x4x256xf32>
    %83 = vector.shape_cast %82 : vector<1x4x256xf32> to vector<4x256xf32>
    %c13 = arith.constant 13 : index
    %c0_71 = arith.constant 0 : index
    %84 = vector.load %arg9[%c13, %c0_71] : memref<25x256xf32, #tpu.memory_space<vmem>>, vector<1x256xf32>
    %85 = vector.broadcast %84 : vector<1x256xf32> to vector<4x256xf32>
    %86 = arith.mulf %83, %85 : vector<4x256xf32>
    %c52 = arith.constant 52 : index
    %c0_72 = arith.constant 0 : index
    %87 = vector.load %arg12[%c52, %c0_72] : memref<144x256xf32, #tpu.memory_space<vmem>>, vector<4x256xf32>
    tpu.vector_store %arg12[%c52, %c0_72], %86 {strides = array<i32>} : memref<144x256xf32, #tpu.memory_space<vmem>>, vector<4x256xf32>,
    %c0_73 = arith.constant 0 : index
    %c0_74 = arith.constant 0 : index
    %c36_75 = arith.constant 36 : index
    %88 = vector.load %arg1[%c0_73, %c0_74, %c36_75] : memref<1x4x324xf32, #tpu.memory_space<vmem>>, vector<1x4x256xf32>
    %89 = vector.shape_cast %88 : vector<1x4x256xf32> to vector<4x256xf32>
    %c14 = arith.constant 14 : index
    %c0_76 = arith.constant 0 : index
    %90 = vector.load %arg9[%c14, %c0_76] : memref<25x256xf32, #tpu.memory_space<vmem>>, vector<1x256xf32>
    %91 = vector.broadcast %90 : vector<1x256xf32> to vector<4x256xf32>
    %92 = arith.mulf %89, %91 : vector<4x256xf32>
    %c56 = arith.constant 56 : index
    %c0_77 = arith.constant 0 : index
    %93 = vector.load %arg12[%c56, %c0_77] : memref<144x256xf32, #tpu.memory_space<vmem>>, vector<4x256xf32>
    tpu.vector_store %arg12[%c56, %c0_77], %92 {strides = array<i32>} : memref<144x256xf32, #tpu.memory_space<vmem>>, vector<4x256xf32>,
    %c0_78 = arith.constant 0 : index
    %c0_79 = arith.constant 0 : index
    %c48_80 = arith.constant 48 : index
    %94 = vector.load %arg1[%c0_78, %c0_79, %c48_80] : memref<1x4x324xf32, #tpu.memory_space<vmem>>, vector<1x4x256xf32>
    %95 = vector.shape_cast %94 : vector<1x4x256xf32> to vector<4x256xf32>
    %c15 = arith.constant 15 : index
    %c0_81 = arith.constant 0 : index
    %96 = vector.load %arg9[%c15, %c0_81] : memref<25x256xf32, #tpu.memory_space<vmem>>, vector<1x256xf32>
    %97 = vector.broadcast %96 : vector<1x256xf32> to vector<4x256xf32>
    %98 = arith.mulf %95, %97 : vector<4x256xf32>
    %c60 = arith.constant 60 : index
    %c0_82 = arith.constant 0 : index
    %99 = vector.load %arg12[%c60, %c0_82] : memref<144x256xf32, #tpu.memory_space<vmem>>, vector<4x256xf32>
    tpu.vector_store %arg12[%c60, %c0_82], %98 {strides = array<i32>} : memref<144x256xf32, #tpu.memory_space<vmem>>, vector<4x256xf32>,
    %c0_83 = arith.constant 0 : index
    %c0_84 = arith.constant 0 : index
    %c49 = arith.constant 49 : index
    %100 = vector.load %arg1[%c0_83, %c0_84, %c49] : memref<1x4x324xf32, #tpu.memory_space<vmem>>, vector<1x4x256xf32>
    %101 = vector.shape_cast %100 : vector<1x4x256xf32> to vector<4x256xf32>
    %c16_85 = arith.constant 16 : index
    %c0_86 = arith.constant 0 : index
    %102 = vector.load %arg9[%c16_85, %c0_86] : memref<25x256xf32, #tpu.memory_space<vmem>>, vector<1x256xf32>
    %103 = vector.broadcast %102 : vector<1x256xf32> to vector<4x256xf32>
    %104 = arith.mulf %101, %103 : vector<4x256xf32>
    %c64 = arith.constant 64 : index
    %c0_87 = arith.constant 0 : index
    %105 = vector.load %arg12[%c64, %c0_87] : memref<144x256xf32, #tpu.memory_space<vmem>>, vector<4x256xf32>
    tpu.vector_store %arg12[%c64, %c0_87], %104 {strides = array<i32>} : memref<144x256xf32, #tpu.memory_space<vmem>>, vector<4x256xf32>,
    %c0_88 = arith.constant 0 : index
    %c0_89 = arith.constant 0 : index
    %c50 = arith.constant 50 : index
    %106 = vector.load %arg1[%c0_88, %c0_89, %c50] : memref<1x4x324xf32, #tpu.memory_space<vmem>>, vector<1x4x256xf32>
    %107 = vector.shape_cast %106 : vector<1x4x256xf32> to vector<4x256xf32>
    %c17_90 = arith.constant 17 : index
    %c0_91 = arith.constant 0 : index
    %108 = vector.load %arg9[%c17_90, %c0_91] : memref<25x256xf32, #tpu.memory_space<vmem>>, vector<1x256xf32>
    %109 = vector.broadcast %108 : vector<1x256xf32> to vector<4x256xf32>
    %110 = arith.mulf %107, %109 : vector<4x256xf32>
    %c68 = arith.constant 68 : index
    %c0_92 = arith.constant 0 : index
    %111 = vector.load %arg12[%c68, %c0_92] : memref<144x256xf32, #tpu.memory_space<vmem>>, vector<4x256xf32>
    tpu.vector_store %arg12[%c68, %c0_92], %110 {strides = array<i32>} : memref<144x256xf32, #tpu.memory_space<vmem>>, vector<4x256xf32>,
    %c0_93 = arith.constant 0 : index
    %c0_94 = arith.constant 0 : index
    %c51 = arith.constant 51 : index
    %112 = vector.load %arg1[%c0_93, %c0_94, %c51] : memref<1x4x324xf32, #tpu.memory_space<vmem>>, vector<1x4x256xf32>
    %113 = vector.shape_cast %112 : vector<1x4x256xf32> to vector<4x256xf32>
    %c18_95 = arith.constant 18 : index
    %c0_96 = arith.constant 0 : index
    %114 = vector.load %arg9[%c18_95, %c0_96] : memref<25x256xf32, #tpu.memory_space<vmem>>, vector<1x256xf32>
    %115 = vector.broadcast %114 : vector<1x256xf32> to vector<4x256xf32>
    %116 = arith.mulf %113, %115 : vector<4x256xf32>
    %c72 = arith.constant 72 : index
    %c0_97 = arith.constant 0 : index
    %117 = vector.load %arg12[%c72, %c0_97] : memref<144x256xf32, #tpu.memory_space<vmem>>, vector<4x256xf32>
    tpu.vector_store %arg12[%c72, %c0_97], %116 {strides = array<i32>} : memref<144x256xf32, #tpu.memory_space<vmem>>, vector<4x256xf32>,
    %c0_98 = arith.constant 0 : index
    %c0_99 = arith.constant 0 : index
    %c52_100 = arith.constant 52 : index
    %118 = vector.load %arg1[%c0_98, %c0_99, %c52_100] : memref<1x4x324xf32, #tpu.memory_space<vmem>>, vector<1x4x256xf32>
    %119 = vector.shape_cast %118 : vector<1x4x256xf32> to vector<4x256xf32>
    %c19_101 = arith.constant 19 : index
    %c0_102 = arith.constant 0 : index
    %120 = vector.load %arg9[%c19_101, %c0_102] : memref<25x256xf32, #tpu.memory_space<vmem>>, vector<1x256xf32>
    %121 = vector.broadcast %120 : vector<1x256xf32> to vector<4x256xf32>
    %122 = arith.mulf %119, %121 : vector<4x256xf32>
    %c76 = arith.constant 76 : index
    %c0_103 = arith.constant 0 : index
    %123 = vector.load %arg12[%c76, %c0_103] : memref<144x256xf32, #tpu.memory_space<vmem>>, vector<4x256xf32>
    tpu.vector_store %arg12[%c76, %c0_103], %122 {strides = array<i32>} : memref<144x256xf32, #tpu.memory_space<vmem>>, vector<4x256xf32>,
    %c0_104 = arith.constant 0 : index
    %c0_105 = arith.constant 0 : index
    %c64_106 = arith.constant 64 : index
    %124 = vector.load %arg1[%c0_104, %c0_105, %c64_106] : memref<1x4x324xf32, #tpu.memory_space<vmem>>, vector<1x4x256xf32>
    %125 = vector.shape_cast %124 : vector<1x4x256xf32> to vector<4x256xf32>
    %c20_107 = arith.constant 20 : index
    %c0_108 = arith.constant 0 : index
    %126 = vector.load %arg9[%c20_107, %c0_108] : memref<25x256xf32, #tpu.memory_space<vmem>>, vector<1x256xf32>
    %127 = vector.broadcast %126 : vector<1x256xf32> to vector<4x256xf32>
    %128 = arith.mulf %125, %127 : vector<4x256xf32>
    %c80 = arith.constant 80 : index
    %c0_109 = arith.constant 0 : index
    %129 = vector.load %arg12[%c80, %c0_109] : memref<144x256xf32, #tpu.memory_space<vmem>>, vector<4x256xf32>
    tpu.vector_store %arg12[%c80, %c0_109], %128 {strides = array<i32>} : memref<144x256xf32, #tpu.memory_space<vmem>>, vector<4x256xf32>,
    %c0_110 = arith.constant 0 : index
    %c0_111 = arith.constant 0 : index
    %c65 = arith.constant 65 : index
    %130 = vector.load %arg1[%c0_110, %c0_111, %c65] : memref<1x4x324xf32, #tpu.memory_space<vmem>>, vector<1x4x256xf32>
    %131 = vector.shape_cast %130 : vector<1x4x256xf32> to vector<4x256xf32>
    %c21 = arith.constant 21 : index
    %c0_112 = arith.constant 0 : index
    %132 = vector.load %arg9[%c21, %c0_112] : memref<25x256xf32, #tpu.memory_space<vmem>>, vector<1x256xf32>
    %133 = vector.broadcast %132 : vector<1x256xf32> to vector<4x256xf32>
    %134 = arith.mulf %131, %133 : vector<4x256xf32>
    %c84 = arith.constant 84 : index
    %c0_113 = arith.constant 0 : index
    %135 = vector.load %arg12[%c84, %c0_113] : memref<144x256xf32, #tpu.memory_space<vmem>>, vector<4x256xf32>
    tpu.vector_store %arg12[%c84, %c0_113], %134 {strides = array<i32>} : memref<144x256xf32, #tpu.memory_space<vmem>>, vector<4x256xf32>,
    %c0_114 = arith.constant 0 : index
    %c0_115 = arith.constant 0 : index
    %c66 = arith.constant 66 : index
    %136 = vector.load %arg1[%c0_114, %c0_115, %c66] : memref<1x4x324xf32, #tpu.memory_space<vmem>>, vector<1x4x256xf32>
    %137 = vector.shape_cast %136 : vector<1x4x256xf32> to vector<4x256xf32>
    %c22 = arith.constant 22 : index
    %c0_116 = arith.constant 0 : index
    %138 = vector.load %arg9[%c22, %c0_116] : memref<25x256xf32, #tpu.memory_space<vmem>>, vector<1x256xf32>
    %139 = vector.broadcast %138 : vector<1x256xf32> to vector<4x256xf32>
    %140 = arith.mulf %137, %139 : vector<4x256xf32>
    %c88 = arith.constant 88 : index
    %c0_117 = arith.constant 0 : index
    %141 = vector.load %arg12[%c88, %c0_117] : memref<144x256xf32, #tpu.memory_space<vmem>>, vector<4x256xf32>
    tpu.vector_store %arg12[%c88, %c0_117], %140 {strides = array<i32>} : memref<144x256xf32, #tpu.memory_space<vmem>>, vector<4x256xf32>,
    %c0_118 = arith.constant 0 : index
    %c0_119 = arith.constant 0 : index
    %c67 = arith.constant 67 : index
    %142 = vector.load %arg1[%c0_118, %c0_119, %c67] : memref<1x4x324xf32, #tpu.memory_space<vmem>>, vector<1x4x256xf32>
    %143 = vector.shape_cast %142 : vector<1x4x256xf32> to vector<4x256xf32>
    %c23 = arith.constant 23 : index
    %c0_120 = arith.constant 0 : index
    %144 = vector.load %arg9[%c23, %c0_120] : memref<25x256xf32, #tpu.memory_space<vmem>>, vector<1x256xf32>
    %145 = vector.broadcast %144 : vector<1x256xf32> to vector<4x256xf32>
    %146 = arith.mulf %143, %145 : vector<4x256xf32>
    %c92 = arith.constant 92 : index
    %c0_121 = arith.constant 0 : index
    %147 = vector.load %arg12[%c92, %c0_121] : memref<144x256xf32, #tpu.memory_space<vmem>>, vector<4x256xf32>
    tpu.vector_store %arg12[%c92, %c0_121], %146 {strides = array<i32>} : memref<144x256xf32, #tpu.memory_space<vmem>>, vector<4x256xf32>,
    %c0_122 = arith.constant 0 : index
    %c0_123 = arith.constant 0 : index
    %c68_124 = arith.constant 68 : index
    %148 = vector.load %arg1[%c0_122, %c0_123, %c68_124] : memref<1x4x324xf32, #tpu.memory_space<vmem>>, vector<1x4x256xf32>
    %149 = vector.shape_cast %148 : vector<1x4x256xf32> to vector<4x256xf32>
    %c24_125 = arith.constant 24 : index
    %c0_126 = arith.constant 0 : index
    %150 = vector.load %arg9[%c24_125, %c0_126] : memref<25x256xf32, #tpu.memory_space<vmem>>, vector<1x256xf32>
    %151 = vector.broadcast %150 : vector<1x256xf32> to vector<4x256xf32>
    %152 = arith.mulf %149, %151 : vector<4x256xf32>
    %c96 = arith.constant 96 : index
    %c0_127 = arith.constant 0 : index
    %153 = vector.load %arg12[%c96, %c0_127] : memref<144x256xf32, #tpu.memory_space<vmem>>, vector<4x256xf32>
    tpu.vector_store %arg12[%c96, %c0_127], %152 {strides = array<i32>} : memref<144x256xf32, #tpu.memory_space<vmem>>, vector<4x256xf32>,
    %c0_128 = arith.constant 0 : index
    %c0_129 = arith.constant 0 : index
    %154 = vector.load %arg3[%c0_128, %c0_129] : memref<16x100xf32, #tpu.memory_space<vmem>>, vector<16x100xf32>
    %c0_130 = arith.constant 0 : index
    %c0_131 = arith.constant 0 : index
    %155 = vector.load %arg12[%c0_130, %c0_131] : memref<144x256xf32, #tpu.memory_space<vmem>>, vector<100x256xf32>
    %cst_132 = arith.constant dense<0.000000e+00> : vector<16x256xf32>
    %156 = tpu.matmul %154, %155, %cst_132 {dimension_numbers = #tpu.dot_dimension_numbers<[1], [0], [0], [1], [0, 0, 1, 1], [], []>} : vector<16x100xf32>, vector<100x256xf32>, vector<16x256xf32> -> vector<16x256xf32>
    %c0_133 = arith.constant 0 : index
    %c0_134 = arith.constant 0 : index
    %157 = vector.load %arg6[%c0_133, %c0_134] : memref<16x1xf32, #tpu.memory_space<vmem>>, vector<16x1xf32>
    %158 = vector.broadcast %157 : vector<16x1xf32> to vector<16x256xf32>
    %159 = arith.addf %156, %158 : vector<16x256xf32>
    %160 = vector.extract_strided_slice %159 {offsets = [0, 0], sizes = [8, 256], strides = [1, 1]} : vector<16x256xf32> to vector<8x256xf32>
    %cst_135 = arith.constant 0.000000e+00 : f32
    %161 = vector.broadcast %cst_135 : f32 to vector<8x256xf32>
    %162 = arith.maximumf %160, %161 : vector<8x256xf32>
    %163 = vector.extract_strided_slice %159 {offsets = [8, 0], sizes = [8, 256], strides = [1, 1]} : vector<16x256xf32> to vector<8x256xf32>
    %c0_136 = arith.constant 0 : index
    %c17_137 = arith.constant 17 : index
    %164 = vector.load %arg13[%c0_136, %c17_137] : memref<16x290xf32, #tpu.memory_space<vmem>>, vector<8x256xf32>
    tpu.vector_store %arg13[%c0_136, %c17_137], %162 {strides = array<i32>} : memref<16x290xf32, #tpu.memory_space<vmem>>, vector<8x256xf32>,
    %c0_138 = arith.constant 0 : index
    %c0_139 = arith.constant 0 : index
    %c0_140 = arith.constant 0 : index
    %165 = vector.load %arg2[%c0_138, %c0_139, %c0_140] : memref<1x8x256xf32, #tpu.memory_space<vmem>>, vector<1x8x256xf32>
    %166 = vector.shape_cast %165 : vector<1x8x256xf32> to vector<8x256xf32>
    %c8_141 = arith.constant 8 : index
    %c17_142 = arith.constant 17 : index
    %167 = vector.load %arg13[%c8_141, %c17_142] : memref<16x290xf32, #tpu.memory_space<vmem>>, vector<8x256xf32>
    tpu.vector_store %arg13[%c8_141, %c17_142], %166 {strides = array<i32>} : memref<16x290xf32, #tpu.memory_space<vmem>>, vector<8x256xf32>,
    %c0_143 = arith.constant 0 : index
    %c0_144 = arith.constant 0 : index
    %168 = vector.load %arg13[%c0_143, %c0_144] : memref<16x290xf32, #tpu.memory_space<vmem>>, vector<16x256xf32>
    %c0_145 = arith.constant 0 : index
    %c0_146 = arith.constant 0 : index
    %169 = vector.load %arg10[%c0_145, %c0_146] : memref<9x256xf32, #tpu.memory_space<vmem>>, vector<1x256xf32>
    %170 = vector.broadcast %169 : vector<1x256xf32> to vector<16x256xf32>
    %171 = arith.mulf %168, %170 : vector<16x256xf32>
    %c0_147 = arith.constant 0 : index
    %c0_148 = arith.constant 0 : index
    %172 = vector.load %arg12[%c0_147, %c0_148] : memref<144x256xf32, #tpu.memory_space<vmem>>, vector<16x256xf32>
    tpu.vector_store %arg12[%c0_147, %c0_148], %171 {strides = array<i32>} : memref<144x256xf32, #tpu.memory_space<vmem>>, vector<16x256xf32>,
    %c0_149 = arith.constant 0 : index
    %c1_150 = arith.constant 1 : index
    %173 = vector.load %arg13[%c0_149, %c1_150] : memref<16x290xf32, #tpu.memory_space<vmem>>, vector<16x256xf32>
    %c1_151 = arith.constant 1 : index
    %c0_152 = arith.constant 0 : index
    %174 = vector.load %arg10[%c1_151, %c0_152] : memref<9x256xf32, #tpu.memory_space<vmem>>, vector<1x256xf32>
    %175 = vector.broadcast %174 : vector<1x256xf32> to vector<16x256xf32>
    %176 = arith.mulf %173, %175 : vector<16x256xf32>
    %c16_153 = arith.constant 16 : index
    %c0_154 = arith.constant 0 : index
    %177 = vector.load %arg12[%c16_153, %c0_154] : memref<144x256xf32, #tpu.memory_space<vmem>>, vector<16x256xf32>
    tpu.vector_store %arg12[%c16_153, %c0_154], %176 {strides = array<i32>} : memref<144x256xf32, #tpu.memory_space<vmem>>, vector<16x256xf32>,
    %c0_155 = arith.constant 0 : index
    %c2_156 = arith.constant 2 : index
    %178 = vector.load %arg13[%c0_155, %c2_156] : memref<16x290xf32, #tpu.memory_space<vmem>>, vector<16x256xf32>
    %c2_157 = arith.constant 2 : index
    %c0_158 = arith.constant 0 : index
    %179 = vector.load %arg10[%c2_157, %c0_158] : memref<9x256xf32, #tpu.memory_space<vmem>>, vector<1x256xf32>
    %180 = vector.broadcast %179 : vector<1x256xf32> to vector<16x256xf32>
    %181 = arith.mulf %178, %180 : vector<16x256xf32>
    %c32_159 = arith.constant 32 : index
    %c0_160 = arith.constant 0 : index
    %182 = vector.load %arg12[%c32_159, %c0_160] : memref<144x256xf32, #tpu.memory_space<vmem>>, vector<16x256xf32>
    tpu.vector_store %arg12[%c32_159, %c0_160], %181 {strides = array<i32>} : memref<144x256xf32, #tpu.memory_space<vmem>>, vector<16x256xf32>,
    %c0_161 = arith.constant 0 : index
    %c16_162 = arith.constant 16 : index
    %183 = vector.load %arg13[%c0_161, %c16_162] : memref<16x290xf32, #tpu.memory_space<vmem>>, vector<16x256xf32>
    %c3_163 = arith.constant 3 : index
    %c0_164 = arith.constant 0 : index
    %184 = vector.load %arg10[%c3_163, %c0_164] : memref<9x256xf32, #tpu.memory_space<vmem>>, vector<1x256xf32>
    %185 = vector.broadcast %184 : vector<1x256xf32> to vector<16x256xf32>
    %186 = arith.mulf %183, %185 : vector<16x256xf32>
    %c48_165 = arith.constant 48 : index
    %c0_166 = arith.constant 0 : index
    %187 = vector.load %arg12[%c48_165, %c0_166] : memref<144x256xf32, #tpu.memory_space<vmem>>, vector<16x256xf32>
    tpu.vector_store %arg12[%c48_165, %c0_166], %186 {strides = array<i32>} : memref<144x256xf32, #tpu.memory_space<vmem>>, vector<16x256xf32>,
    %c0_167 = arith.constant 0 : index
    %c17_168 = arith.constant 17 : index
    %188 = vector.load %arg13[%c0_167, %c17_168] : memref<16x290xf32, #tpu.memory_space<vmem>>, vector<16x256xf32>
    %c4_169 = arith.constant 4 : index
    %c0_170 = arith.constant 0 : index
    %189 = vector.load %arg10[%c4_169, %c0_170] : memref<9x256xf32, #tpu.memory_space<vmem>>, vector<1x256xf32>
    %190 = vector.broadcast %189 : vector<1x256xf32> to vector<16x256xf32>
    %191 = arith.mulf %188, %190 : vector<16x256xf32>
    %c64_171 = arith.constant 64 : index
    %c0_172 = arith.constant 0 : index
    %192 = vector.load %arg12[%c64_171, %c0_172] : memref<144x256xf32, #tpu.memory_space<vmem>>, vector<16x256xf32>
    tpu.vector_store %arg12[%c64_171, %c0_172], %191 {strides = array<i32>} : memref<144x256xf32, #tpu.memory_space<vmem>>, vector<16x256xf32>,
    %c0_173 = arith.constant 0 : index
    %c18_174 = arith.constant 18 : index
    %193 = vector.load %arg13[%c0_173, %c18_174] : memref<16x290xf32, #tpu.memory_space<vmem>>, vector<16x256xf32>
    %c5_175 = arith.constant 5 : index
    %c0_176 = arith.constant 0 : index
    %194 = vector.load %arg10[%c5_175, %c0_176] : memref<9x256xf32, #tpu.memory_space<vmem>>, vector<1x256xf32>
    %195 = vector.broadcast %194 : vector<1x256xf32> to vector<16x256xf32>
    %196 = arith.mulf %193, %195 : vector<16x256xf32>
    %c80_177 = arith.constant 80 : index
    %c0_178 = arith.constant 0 : index
    %197 = vector.load %arg12[%c80_177, %c0_178] : memref<144x256xf32, #tpu.memory_space<vmem>>, vector<16x256xf32>
    tpu.vector_store %arg12[%c80_177, %c0_178], %196 {strides = array<i32>} : memref<144x256xf32, #tpu.memory_space<vmem>>, vector<16x256xf32>,
    %c0_179 = arith.constant 0 : index
    %c32_180 = arith.constant 32 : index
    %198 = vector.load %arg13[%c0_179, %c32_180] : memref<16x290xf32, #tpu.memory_space<vmem>>, vector<16x256xf32>
    %c6_181 = arith.constant 6 : index
    %c0_182 = arith.constant 0 : index
    %199 = vector.load %arg10[%c6_181, %c0_182] : memref<9x256xf32, #tpu.memory_space<vmem>>, vector<1x256xf32>
    %200 = vector.broadcast %199 : vector<1x256xf32> to vector<16x256xf32>
    %201 = arith.mulf %198, %200 : vector<16x256xf32>
    %c96_183 = arith.constant 96 : index
    %c0_184 = arith.constant 0 : index
    %202 = vector.load %arg12[%c96_183, %c0_184] : memref<144x256xf32, #tpu.memory_space<vmem>>, vector<16x256xf32>
    tpu.vector_store %arg12[%c96_183, %c0_184], %201 {strides = array<i32>} : memref<144x256xf32, #tpu.memory_space<vmem>>, vector<16x256xf32>,
    %c0_185 = arith.constant 0 : index
    %c33_186 = arith.constant 33 : index
    %203 = vector.load %arg13[%c0_185, %c33_186] : memref<16x290xf32, #tpu.memory_space<vmem>>, vector<16x256xf32>
    %c7_187 = arith.constant 7 : index
    %c0_188 = arith.constant 0 : index
    %204 = vector.load %arg10[%c7_187, %c0_188] : memref<9x256xf32, #tpu.memory_space<vmem>>, vector<1x256xf32>
    %205 = vector.broadcast %204 : vector<1x256xf32> to vector<16x256xf32>
    %206 = arith.mulf %203, %205 : vector<16x256xf32>
    %c112 = arith.constant 112 : index
    %c0_189 = arith.constant 0 : index
    %207 = vector.load %arg12[%c112, %c0_189] : memref<144x256xf32, #tpu.memory_space<vmem>>, vector<16x256xf32>
    tpu.vector_store %arg12[%c112, %c0_189], %206 {strides = array<i32>} : memref<144x256xf32, #tpu.memory_space<vmem>>, vector<16x256xf32>,
    %c0_190 = arith.constant 0 : index
    %c34_191 = arith.constant 34 : index
    %208 = vector.load %arg13[%c0_190, %c34_191] : memref<16x290xf32, #tpu.memory_space<vmem>>, vector<16x256xf32>
    %c8_192 = arith.constant 8 : index
    %c0_193 = arith.constant 0 : index
    %209 = vector.load %arg10[%c8_192, %c0_193] : memref<9x256xf32, #tpu.memory_space<vmem>>, vector<1x256xf32>
    %210 = vector.broadcast %209 : vector<1x256xf32> to vector<16x256xf32>
    %211 = arith.mulf %208, %210 : vector<16x256xf32>
    %c128 = arith.constant 128 : index
    %c0_194 = arith.constant 0 : index
    %212 = vector.load %arg12[%c128, %c0_194] : memref<144x256xf32, #tpu.memory_space<vmem>>, vector<16x256xf32>
    tpu.vector_store %arg12[%c128, %c0_194], %211 {strides = array<i32>} : memref<144x256xf32, #tpu.memory_space<vmem>>, vector<16x256xf32>,
    %c0_195 = arith.constant 0 : index
    %c0_196 = arith.constant 0 : index
    %213 = vector.load %arg4[%c0_195, %c0_196] : memref<8x144xf32, #tpu.memory_space<vmem>>, vector<8x144xf32>
    %c0_197 = arith.constant 0 : index
    %c0_198 = arith.constant 0 : index
    %214 = vector.load %arg12[%c0_197, %c0_198] : memref<144x256xf32, #tpu.memory_space<vmem>>, vector<144x256xf32>
    %cst_199 = arith.constant dense<0.000000e+00> : vector<8x256xf32>
    %215 = tpu.matmul %213, %214, %cst_199 {dimension_numbers = #tpu.dot_dimension_numbers<[1], [0], [0], [1], [0, 0, 1, 1], [], []>} : vector<8x144xf32>, vector<144x256xf32>, vector<8x256xf32> -> vector<8x256xf32>
    %c0_200 = arith.constant 0 : index
    %c0_201 = arith.constant 0 : index
    %216 = vector.load %arg7[%c0_200, %c0_201] : memref<8x1xf32, #tpu.memory_space<vmem>>, vector<8x1xf32>
    %217 = vector.broadcast %216 : vector<8x1xf32> to vector<8x256xf32>
    %218 = arith.addf %215, %217 : vector<8x256xf32>
    %cst_202 = arith.constant 0.000000e+00 : f32
    %219 = vector.broadcast %cst_202 : f32 to vector<8x256xf32>
    %220 = arith.maximumf %218, %219 : vector<8x256xf32>
    %c0_203 = arith.constant 0 : index
    %c17_204 = arith.constant 17 : index
    %221 = vector.load %arg14[%c0_203, %c17_204] : memref<8x290xf32, #tpu.memory_space<vmem>>, vector<8x256xf32>
    tpu.vector_store %arg14[%c0_203, %c17_204], %220 {strides = array<i32>} : memref<8x290xf32, #tpu.memory_space<vmem>>, vector<8x256xf32>,
    %c0_205 = arith.constant 0 : index
    %c0_206 = arith.constant 0 : index
    %222 = vector.load %arg14[%c0_205, %c0_206] : memref<8x290xf32, #tpu.memory_space<vmem>>, vector<8x256xf32>
    %c0_207 = arith.constant 0 : index
    %c0_208 = arith.constant 0 : index
    %223 = vector.load %arg10[%c0_207, %c0_208] : memref<9x256xf32, #tpu.memory_space<vmem>>, vector<1x256xf32>
    %224 = vector.broadcast %223 : vector<1x256xf32> to vector<8x256xf32>
    %225 = arith.mulf %222, %224 : vector<8x256xf32>
    %c0_209 = arith.constant 0 : index
    %c0_210 = arith.constant 0 : index
    %226 = vector.load %arg12[%c0_209, %c0_210] : memref<144x256xf32, #tpu.memory_space<vmem>>, vector<8x256xf32>
    tpu.vector_store %arg12[%c0_209, %c0_210], %225 {strides = array<i32>} : memref<144x256xf32, #tpu.memory_space<vmem>>, vector<8x256xf32>,
    %c0_211 = arith.constant 0 : index
    %c1_212 = arith.constant 1 : index
    %227 = vector.load %arg14[%c0_211, %c1_212] : memref<8x290xf32, #tpu.memory_space<vmem>>, vector<8x256xf32>
    %c1_213 = arith.constant 1 : index
    %c0_214 = arith.constant 0 : index
    %228 = vector.load %arg10[%c1_213, %c0_214] : memref<9x256xf32, #tpu.memory_space<vmem>>, vector<1x256xf32>
    %229 = vector.broadcast %228 : vector<1x256xf32> to vector<8x256xf32>
    %230 = arith.mulf %227, %229 : vector<8x256xf32>
    %c8_215 = arith.constant 8 : index
    %c0_216 = arith.constant 0 : index
    %231 = vector.load %arg12[%c8_215, %c0_216] : memref<144x256xf32, #tpu.memory_space<vmem>>, vector<8x256xf32>
    tpu.vector_store %arg12[%c8_215, %c0_216], %230 {strides = array<i32>} : memref<144x256xf32, #tpu.memory_space<vmem>>, vector<8x256xf32>,
    %c0_217 = arith.constant 0 : index
    %c2_218 = arith.constant 2 : index
    %232 = vector.load %arg14[%c0_217, %c2_218] : memref<8x290xf32, #tpu.memory_space<vmem>>, vector<8x256xf32>
    %c2_219 = arith.constant 2 : index
    %c0_220 = arith.constant 0 : index
    %233 = vector.load %arg10[%c2_219, %c0_220] : memref<9x256xf32, #tpu.memory_space<vmem>>, vector<1x256xf32>
    %234 = vector.broadcast %233 : vector<1x256xf32> to vector<8x256xf32>
    %235 = arith.mulf %232, %234 : vector<8x256xf32>
    %c16_221 = arith.constant 16 : index
    %c0_222 = arith.constant 0 : index
    %236 = vector.load %arg12[%c16_221, %c0_222] : memref<144x256xf32, #tpu.memory_space<vmem>>, vector<8x256xf32>
    tpu.vector_store %arg12[%c16_221, %c0_222], %235 {strides = array<i32>} : memref<144x256xf32, #tpu.memory_space<vmem>>, vector<8x256xf32>,
    %c0_223 = arith.constant 0 : index
    %c16_224 = arith.constant 16 : index
    %237 = vector.load %arg14[%c0_223, %c16_224] : memref<8x290xf32, #tpu.memory_space<vmem>>, vector<8x256xf32>
    %c3_225 = arith.constant 3 : index
    %c0_226 = arith.constant 0 : index
    %238 = vector.load %arg10[%c3_225, %c0_226] : memref<9x256xf32, #tpu.memory_space<vmem>>, vector<1x256xf32>
    %239 = vector.broadcast %238 : vector<1x256xf32> to vector<8x256xf32>
    %240 = arith.mulf %237, %239 : vector<8x256xf32>
    %c24_227 = arith.constant 24 : index
    %c0_228 = arith.constant 0 : index
    %241 = vector.load %arg12[%c24_227, %c0_228] : memref<144x256xf32, #tpu.memory_space<vmem>>, vector<8x256xf32>
    tpu.vector_store %arg12[%c24_227, %c0_228], %240 {strides = array<i32>} : memref<144x256xf32, #tpu.memory_space<vmem>>, vector<8x256xf32>,
    %c0_229 = arith.constant 0 : index
    %c17_230 = arith.constant 17 : index
    %242 = vector.load %arg14[%c0_229, %c17_230] : memref<8x290xf32, #tpu.memory_space<vmem>>, vector<8x256xf32>
    %c4_231 = arith.constant 4 : index
    %c0_232 = arith.constant 0 : index
    %243 = vector.load %arg10[%c4_231, %c0_232] : memref<9x256xf32, #tpu.memory_space<vmem>>, vector<1x256xf32>
    %244 = vector.broadcast %243 : vector<1x256xf32> to vector<8x256xf32>
    %245 = arith.mulf %242, %244 : vector<8x256xf32>
    %c32_233 = arith.constant 32 : index
    %c0_234 = arith.constant 0 : index
    %246 = vector.load %arg12[%c32_233, %c0_234] : memref<144x256xf32, #tpu.memory_space<vmem>>, vector<8x256xf32>
    tpu.vector_store %arg12[%c32_233, %c0_234], %245 {strides = array<i32>} : memref<144x256xf32, #tpu.memory_space<vmem>>, vector<8x256xf32>,
    %c0_235 = arith.constant 0 : index
    %c18_236 = arith.constant 18 : index
    %247 = vector.load %arg14[%c0_235, %c18_236] : memref<8x290xf32, #tpu.memory_space<vmem>>, vector<8x256xf32>
    %c5_237 = arith.constant 5 : index
    %c0_238 = arith.constant 0 : index
    %248 = vector.load %arg10[%c5_237, %c0_238] : memref<9x256xf32, #tpu.memory_space<vmem>>, vector<1x256xf32>
    %249 = vector.broadcast %248 : vector<1x256xf32> to vector<8x256xf32>
    %250 = arith.mulf %247, %249 : vector<8x256xf32>
    %c40_239 = arith.constant 40 : index
    %c0_240 = arith.constant 0 : index
    %251 = vector.load %arg12[%c40_239, %c0_240] : memref<144x256xf32, #tpu.memory_space<vmem>>, vector<8x256xf32>
    tpu.vector_store %arg12[%c40_239, %c0_240], %250 {strides = array<i32>} : memref<144x256xf32, #tpu.memory_space<vmem>>, vector<8x256xf32>,
    %c0_241 = arith.constant 0 : index
    %c32_242 = arith.constant 32 : index
    %252 = vector.load %arg14[%c0_241, %c32_242] : memref<8x290xf32, #tpu.memory_space<vmem>>, vector<8x256xf32>
    %c6_243 = arith.constant 6 : index
    %c0_244 = arith.constant 0 : index
    %253 = vector.load %arg10[%c6_243, %c0_244] : memref<9x256xf32, #tpu.memory_space<vmem>>, vector<1x256xf32>
    %254 = vector.broadcast %253 : vector<1x256xf32> to vector<8x256xf32>
    %255 = arith.mulf %252, %254 : vector<8x256xf32>
    %c48_245 = arith.constant 48 : index
    %c0_246 = arith.constant 0 : index
    %256 = vector.load %arg12[%c48_245, %c0_246] : memref<144x256xf32, #tpu.memory_space<vmem>>, vector<8x256xf32>
    tpu.vector_store %arg12[%c48_245, %c0_246], %255 {strides = array<i32>} : memref<144x256xf32, #tpu.memory_space<vmem>>, vector<8x256xf32>,
    %c0_247 = arith.constant 0 : index
    %c33_248 = arith.constant 33 : index
    %257 = vector.load %arg14[%c0_247, %c33_248] : memref<8x290xf32, #tpu.memory_space<vmem>>, vector<8x256xf32>
    %c7_249 = arith.constant 7 : index
    %c0_250 = arith.constant 0 : index
    %258 = vector.load %arg10[%c7_249, %c0_250] : memref<9x256xf32, #tpu.memory_space<vmem>>, vector<1x256xf32>
    %259 = vector.broadcast %258 : vector<1x256xf32> to vector<8x256xf32>
    %260 = arith.mulf %257, %259 : vector<8x256xf32>
    %c56_251 = arith.constant 56 : index
    %c0_252 = arith.constant 0 : index
    %261 = vector.load %arg12[%c56_251, %c0_252] : memref<144x256xf32, #tpu.memory_space<vmem>>, vector<8x256xf32>
    tpu.vector_store %arg12[%c56_251, %c0_252], %260 {strides = array<i32>} : memref<144x256xf32, #tpu.memory_space<vmem>>, vector<8x256xf32>,
    %c0_253 = arith.constant 0 : index
    %c34_254 = arith.constant 34 : index
    %262 = vector.load %arg14[%c0_253, %c34_254] : memref<8x290xf32, #tpu.memory_space<vmem>>, vector<8x256xf32>
    %c8_255 = arith.constant 8 : index
    %c0_256 = arith.constant 0 : index
    %263 = vector.load %arg10[%c8_255, %c0_256] : memref<9x256xf32, #tpu.memory_space<vmem>>, vector<1x256xf32>
    %264 = vector.broadcast %263 : vector<1x256xf32> to vector<8x256xf32>
    %265 = arith.mulf %262, %264 : vector<8x256xf32>
    %c64_257 = arith.constant 64 : index
    %c0_258 = arith.constant 0 : index
    %266 = vector.load %arg12[%c64_257, %c0_258] : memref<144x256xf32, #tpu.memory_space<vmem>>, vector<8x256xf32>
    tpu.vector_store %arg12[%c64_257, %c0_258], %265 {strides = array<i32>} : memref<144x256xf32, #tpu.memory_space<vmem>>, vector<8x256xf32>,
    %c0_259 = arith.constant 0 : index
    %c0_260 = arith.constant 0 : index
    %267 = vector.load %arg5[%c0_259, %c0_260] : memref<8x72xf32, #tpu.memory_space<vmem>>, vector<8x72xf32>
    %c0_261 = arith.constant 0 : index
    %c0_262 = arith.constant 0 : index
    %268 = vector.load %arg12[%c0_261, %c0_262] : memref<144x256xf32, #tpu.memory_space<vmem>>, vector<72x256xf32>
    %cst_263 = arith.constant dense<0.000000e+00> : vector<8x256xf32>
    %269 = tpu.matmul %267, %268, %cst_263 {dimension_numbers = #tpu.dot_dimension_numbers<[1], [0], [0], [1], [0, 0, 1, 1], [], []>} : vector<8x72xf32>, vector<72x256xf32>, vector<8x256xf32> -> vector<8x256xf32>
    %c0_264 = arith.constant 0 : index
    %c0_265 = arith.constant 0 : index
    %270 = vector.load %arg8[%c0_264, %c0_265] : memref<8x1xf32, #tpu.memory_space<vmem>>, vector<8x1xf32>
    %271 = vector.broadcast %270 : vector<8x1xf32> to vector<8x256xf32>
    %272 = arith.addf %269, %271 : vector<8x256xf32>
    %273 = arith.addf %272, %163 : vector<8x256xf32>
    %cst_266 = arith.constant 0.000000e+00 : f32
    %274 = vector.broadcast %cst_266 : f32 to vector<8x256xf32>
    %275 = arith.maximumf %273, %274 : vector<8x256xf32>
    %c0_267 = arith.constant 0 : index
    %c0_268 = arith.constant 0 : index
    %c0_269 = arith.constant 0 : index
    %276 = vector.load %arg11[%c0_267, %c0_268, %c0_269] : memref<1x8x256xf32, #tpu.memory_space<vmem>>, vector<1x8x256xf32>
    %277 = vector.shape_cast %276 : vector<1x8x256xf32> to vector<8x256xf32>
    %278 = vector.shape_cast %275 : vector<8x256xf32> to vector<1x8x256xf32>
    tpu.vector_store %arg11[%c0_267, %c0_268, %c0_269], %278 {strides = array<i32>} : memref<1x8x256xf32, #tpu.memory_space<vmem>>, vector<1x8x256xf32>,
    return
  }
  func.func @transform_0(%arg0: i32) -> (i32, i32, i32) {
    %c0_i32 = arith.constant 0 : i32
    %c0_i32_0 = arith.constant 0 : i32
    %c0_i32_1 = arith.constant 0 : i32
    return %arg0, %c0_i32, %c0_i32_0 : i32, i32, i32
  }
  func.func @transform_1(%arg0: i32) -> (i32, i32, i32) {
    %c0_i32 = arith.constant 0 : i32
    %c0_i32_0 = arith.constant 0 : i32
    %c0_i32_1 = arith.constant 0 : i32
    return %arg0, %c0_i32, %c0_i32_0 : i32, i32, i32
  }
  func.func @transform_2(%arg0: i32) -> (i32, i32) {
    %c0_i32 = arith.constant 0 : i32
    %c0_i32_0 = arith.constant 0 : i32
    %c0_i32_1 = arith.constant 0 : i32
    return %c0_i32, %c0_i32_0 : i32, i32
  }
  func.func @transform_3(%arg0: i32) -> (i32, i32) {
    %c0_i32 = arith.constant 0 : i32
    %c0_i32_0 = arith.constant 0 : i32
    %c0_i32_1 = arith.constant 0 : i32
    return %c0_i32, %c0_i32_0 : i32, i32
  }
  func.func @transform_4(%arg0: i32) -> (i32, i32) {
    %c0_i32 = arith.constant 0 : i32
    %c0_i32_0 = arith.constant 0 : i32
    %c0_i32_1 = arith.constant 0 : i32
    return %c0_i32, %c0_i32_0 : i32, i32
  }
  func.func @transform_5(%arg0: i32) -> (i32, i32) {
    %c0_i32 = arith.constant 0 : i32
    %c0_i32_0 = arith.constant 0 : i32
    %c0_i32_1 = arith.constant 0 : i32
    return %c0_i32, %c0_i32_0 : i32, i32
  }
  func.func @transform_6(%arg0: i32) -> (i32, i32) {
    %c0_i32 = arith.constant 0 : i32
    %c0_i32_0 = arith.constant 0 : i32
    %c0_i32_1 = arith.constant 0 : i32
    return %c0_i32, %c0_i32_0 : i32, i32
  }
  func.func @transform_7(%arg0: i32) -> (i32, i32) {
    %c0_i32 = arith.constant 0 : i32
    %c0_i32_0 = arith.constant 0 : i32
    %c0_i32_1 = arith.constant 0 : i32
    return %c0_i32, %c0_i32_0 : i32, i32
  }
  func.func @transform_8(%arg0: i32) -> (i32, i32) {
    %c0_i32 = arith.constant 0 : i32
    %c0_i32_0 = arith.constant 0 : i32
    %c0_i32_1 = arith.constant 0 : i32
    return %c0_i32, %c0_i32_0 : i32, i32
  }
  func.func @transform_9(%arg0: i32) -> (i32, i32) {
    %c0_i32 = arith.constant 0 : i32
    %c0_i32_0 = arith.constant 0 : i32
    %c0_i32_1 = arith.constant 0 : i32
    return %c0_i32, %c0_i32_0 : i32, i32
  }
  func.func @transform_10(%arg0: i32) -> (i32, i32, i32) {
    %c0_i32 = arith.constant 0 : i32
    %c0_i32_0 = arith.constant 0 : i32
    %c0_i32_1 = arith.constant 0 : i32
    return %arg0, %c0_i32, %c0_i32_0 : i32, i32, i32
  }
}

</mosaic_0001>

<llo_original>
// kernel: _lambda_.1
$region0: #{_lambda_.1}
  #allocation0 [shape = 'u32[]', space=smem, size = 0x4, offset = 0x4, fixed_abs, tag = 'smem constant byte address 0x4 - core index']
  #allocation1 [shape = 'u32[144,128]{1,0:T(1,128)}', space=vmem, size = 0x12000, scoped, tag = 'internal scratch']
  #allocation2 [shape = 'f32[144,256]{1,0:T(8,128)}', space=vmem, size = 0x24000, scoped, tag = 'scratch operand']
  #allocation3 [shape = 'f32[16,290]{1,0:T(8,128)}', space=vmem, size = 0x6000, scoped, tag = 'scratch operand']
  #allocation4 [shape = 'f32[8,290]{1,0:T(8,128)}', space=vmem, size = 0x3000, scoped, tag = 'scratch operand']
  %s0 = inlined_call_operand.vmem [shape: f32[2,4,324], index: 0, kind: input, shape index: {}]
  %s1 = inlined_call_operand.vmem [shape: f32[2,8,256], index: 1, kind: input, shape index: {}]
  %s2 = inlined_call_operand.vmem [shape: f32[16,100], index: 2, kind: input, shape index: {}]
  %s3 = inlined_call_operand.vmem [shape: f32[8,144], index: 3, kind: input, shape index: {}]
  %s4 = inlined_call_operand.vmem [shape: f32[8,72], index: 4, kind: input, shape index: {}]
  %s5 = inlined_call_operand.vmem [shape: f32[16,1], index: 5, kind: input, shape index: {}]
  %s6 = inlined_call_operand.vmem [shape: f32[8,1], index: 6, kind: input, shape index: {}]
  %s7 = inlined_call_operand.vmem [shape: f32[8,1], index: 7, kind: input, shape index: {}]
  %s8 = inlined_call_operand.vmem [shape: f32[25,256], index: 8, kind: input, shape index: {}]
  %s9 = inlined_call_operand.vmem [shape: f32[9,256], index: 9, kind: input, shape index: {}]
  %s10 = inlined_call_operand.vmem [shape: f32[2,8,256], index: 10, kind: output, shape index: {}]
  %s11 = sld [smem:[#allocation0]]
  $region73: #{_lambda_.1} parent=0
    _
  %s13 = ssub.s32 1, %s11
  %s14 = scalar_select 0, %s13, %s11
  loop: start=0, step=1, limit=4
  $region2: #{_lambda_.1} parent=0 // loop_pre_header
    _
  $region3: #{_lambda_.1} parent=0 // loop_header
    %s16 = sphi 0, %s20
    %p17 = scmp.ge.s32.totalorder %s16, 4
    %s26 = sphi 0, %s28
    %s29 = sphi 0, %s26
    %s30 = sphi 0, %s29
    %s46 = sphi 0, %s30
    %s52 = sphi 0, %s54
    %s55 = sphi 0, %s52
    %s56 = sphi 0, %s55
    %s72 = sphi 0, %s56
    %s76 = sphi 0, %s76
    %s78 = sphi 0, %s76
    %s79 = sphi 0, %s78
    %s93 = sphi 0, %s79
    %s97 = sphi 0, %s97
    %s99 = sphi 0, %s97
    %s100 = sphi 0, %s99
    %s114 = sphi 0, %s100
    %s118 = sphi 0, %s118
    %s120 = sphi 0, %s118
    %s121 = sphi 0, %s120
    %s135 = sphi 0, %s121
    %s139 = sphi 0, %s139
    %s141 = sphi 0, %s139
    %s142 = sphi 0, %s141
    %s156 = sphi 0, %s142
    %s160 = sphi 0, %s160
    %s162 = sphi 0, %s160
    %s163 = sphi 0, %s162
    %s177 = sphi 0, %s163
    %s181 = sphi 0, %s181
    %s183 = sphi 0, %s181
    %s184 = sphi 0, %s183
    %s198 = sphi 0, %s184
    %s202 = sphi 0, %s202
    %s204 = sphi 0, %s202
    %s205 = sphi 0, %s204
    %s219 = sphi 0, %s205
    %s223 = sphi 0, %s223
    %s225 = sphi 0, %s223
    %s226 = sphi 0, %s225
    %s240 = sphi 0, %s226
    %s246 = sphi 0, %s248
    %s249 = sphi 0, %s246
    %s250 = sphi 0, %s249
    %s266 = sphi 0, %s250
  $region4: #{_lambda_.1} parent=0 // loop_header_branch
    %19 = sbr.rel (%p17) target = $region8
  $region5: #{_lambda_.1} parent=0 // loop_body
    %s21 = ssub.s32 %s16, 1
    %s22 = ssub.s32 %s16, 2
    %s23 = sadd.s32 %s16, 1
    %s24 = ssub.s32 %s16, %s23
    %p25 = scmp.eq.s32.totalorder %s24, 0
    %s27 = sadd.s32 %s26, 1
    %s28 = scalar_select %p25, %s26, %s27
    %p31 = pneg %p25
    %p32 = scmp.eq.s32.totalorder %s16, 1
    %p33 = por %p31, %p32
    %p34 = scmp.ne.s32.totalorder %s26, %s29
    %p35 = scmp.eq.s32.totalorder %s16, 0
    %p36 = por %p34, %p35
    %p37 = scmp.ne.s32.totalorder %s26, %s29
    %p38 = scmp.eq.s32.totalorder %s21, 1
    %p39 = por %p37, %p38
    %p40 = scmp.ne.s32.totalorder %s29, %s30
    %p41 = scmp.eq.s32.totalorder %s21, 0
    %p42 = por %p40, %p41
    %p43 = scmp.ne.s32.totalorder %s29, %s30
    %p44 = scmp.eq.s32.totalorder %s22, 1
    %p45 = por %p43, %p44
    %p47 = scmp.ne.s32.totalorder %s30, %s46
    %p48 = scmp.eq.s32.totalorder %s22, 0
    %p49 = por %p47, %p48
    %s50 = ssub.s32 %s16, %s23
    %p51 = scmp.eq.s32.totalorder %s50, 0
    %s53 = sadd.s32 %s52, 1
    %s54 = scalar_select %p51, %s52, %s53
    %p57 = pneg %p51
    %p58 = scmp.eq.s32.totalorder %s16, 1
    %p59 = por %p57, %p58
    %p60 = scmp.ne.s32.totalorder %s52, %s55
    %p61 = scmp.eq.s32.totalorder %s16, 0
    %p62 = por %p60, %p61
    %p63 = scmp.ne.s32.totalorder %s52, %s55
    %p64 = scmp.eq.s32.totalorder %s21, 1
    %p65 = por %p63, %p64
    %p66 = scmp.ne.s32.totalorder %s55, %s56
    %p67 = scmp.eq.s32.totalorder %s21, 0
    %p68 = por %p66, %p67
    %p69 = scmp.ne.s32.totalorder %s55, %s56
    %p70 = scmp.eq.s32.totalorder %s22, 1
    %p71 = por %p69, %p70
    %p73 = scmp.ne.s32.totalorder %s56, %s72
    %p74 = scmp.eq.s32.totalorder %s22, 0
    %p75 = por %p73, %p74
    %s77 = sadd.s32 %s76, 1
    %p80 = scmp.eq.s32.totalorder %s16, 1
    %p81 = scmp.ne.s32.totalorder %s76, %s78
    %p82 = scmp.eq.s32.totalorder %s16, 0
    %p83 = por %p81, %p82
    %p84 = scmp.ne.s32.totalorder %s76, %s78
    %p85 = scmp.eq.s32.totalorder %s21, 1
    %p86 = por %p84, %p85
    %p87 = scmp.ne.s32.totalorder %s78, %s79
    %p88 = scmp.eq.s32.totalorder %s21, 0
    %p89 = por %p87, %p88
    %p90 = scmp.ne.s32.totalorder %s78, %s79
    %p91 = scmp.eq.s32.totalorder %s22, 1
    %p92 = por %p90, %p91
    %p94 = scmp.ne.s32.totalorder %s79, %s93
    %p95 = scmp.eq.s32.totalorder %s22, 0
    %p96 = por %p94, %p95
    %s98 = sadd.s32 %s97, 1
    %p101 = scmp.eq.s32.totalorder %s16, 1
    %p102 = scmp.ne.s32.totalorder %s97, %s99
    %p103 = scmp.eq.s32.totalorder %s16, 0
    %p104 = por %p102, %p103
    %p105 = scmp.ne.s32.totalorder %s97, %s99
    %p106 = scmp.eq.s32.totalorder %s21, 1
    %p107 = por %p105, %p106
    %p108 = scmp.ne.s32.totalorder %s99, %s100
    %p109 = scmp.eq.s32.totalorder %s21, 0
    %p110 = por %p108, %p109
    %p111 = scmp.ne.s32.totalorder %s99, %s100
    %p112 = scmp.eq.s32.totalorder %s22, 1
    %p113 = por %p111, %p112
    %p115 = scmp.ne.s32.totalorder %s100, %s114
    %p116 = scmp.eq.s32.totalorder %s22, 0
    %p117 = por %p115, %p116
    %s119 = sadd.s32 %s118, 1
    %p122 = scmp.eq.s32.totalorder %s16, 1
    %p123 = scmp.ne.s32.totalorder %s118, %s120
    %p124 = scmp.eq.s32.totalorder %s16, 0
    %p125 = por %p123, %p124
    %p126 = scmp.ne.s32.totalorder %s118, %s120
    %p127 = scmp.eq.s32.totalorder %s21, 1
    %p128 = por %p126, %p127
    %p129 = scmp.ne.s32.totalorder %s120, %s121
    %p130 = scmp.eq.s32.totalorder %s21, 0
    %p131 = por %p129, %p130
    %p132 = scmp.ne.s32.totalorder %s120, %s121
    %p133 = scmp.eq.s32.totalorder %s22, 1
    %p134 = por %p132, %p133
    %p136 = scmp.ne.s32.totalorder %s121, %s135
    %p137 = scmp.eq.s32.totalorder %s22, 0
    %p138 = por %p136, %p137
    %s140 = sadd.s32 %s139, 1
    %p143 = scmp.eq.s32.totalorder %s16, 1
    %p144 = scmp.ne.s32.totalorder %s139, %s141
    %p145 = scmp.eq.s32.totalorder %s16, 0
    %p146 = por %p144, %p145
    %p147 = scmp.ne.s32.totalorder %s139, %s141
    %p148 = scmp.eq.s32.totalorder %s21, 1
    %p149 = por %p147, %p148
    %p150 = scmp.ne.s32.totalorder %s141, %s142
    %p151 = scmp.eq.s32.totalorder %s21, 0
    %p152 = por %p150, %p151
    %p153 = scmp.ne.s32.totalorder %s141, %s142
    %p154 = scmp.eq.s32.totalorder %s22, 1
    %p155 = por %p153, %p154
    %p157 = scmp.ne.s32.totalorder %s142, %s156
    %p158 = scmp.eq.s32.totalorder %s22, 0
    %p159 = por %p157, %p158
    %s161 = sadd.s32 %s160, 1
    %p164 = scmp.eq.s32.totalorder %s16, 1
    %p165 = scmp.ne.s32.totalorder %s160, %s162
    %p166 = scmp.eq.s32.totalorder %s16, 0
    %p167 = por %p165, %p166
    %p168 = scmp.ne.s32.totalorder %s160, %s162
    %p169 = scmp.eq.s32.totalorder %s21, 1
    %p170 = por %p168, %p169
    %p171 = scmp.ne.s32.totalorder %s162, %s163
    %p172 = scmp.eq.s32.totalorder %s21, 0
    %p173 = por %p171, %p172
    %p174 = scmp.ne.s32.totalorder %s162, %s163
    %p175 = scmp.eq.s32.totalorder %s22, 1
    %p176 = por %p174, %p175
    %p178 = scmp.ne.s32.totalorder %s163, %s177
    %p179 = scmp.eq.s32.totalorder %s22, 0
    %p180 = por %p178, %p179
    %s182 = sadd.s32 %s181, 1
    %p185 = scmp.eq.s32.totalorder %s16, 1
    %p186 = scmp.ne.s32.totalorder %s181, %s183
    %p187 = scmp.eq.s32.totalorder %s16, 0
    %p188 = por %p186, %p187
    %p189 = scmp.ne.s32.totalorder %s181, %s183
    %p190 = scmp.eq.s32.totalorder %s21, 1
    %p191 = por %p189, %p190
    %p192 = scmp.ne.s32.totalorder %s183, %s184
    %p193 = scmp.eq.s32.totalorder %s21, 0
    %p194 = por %p192, %p193
    %p195 = scmp.ne.s32.totalorder %s183, %s184
    %p196 = scmp.eq.s32.totalorder %s22, 1
    %p197 = por %p195, %p196
    %p199 = scmp.ne.s32.totalorder %s184, %s198
    %p200 = scmp.eq.s32.totalorder %s22, 0
    %p201 = por %p199, %p200
    %s203 = sadd.s32 %s202, 1
    %p206 = scmp.eq.s32.totalorder %s16, 1
    %p207 = scmp.ne.s32.totalorder %s202, %s204
    %p208 = scmp.eq.s32.totalorder %s16, 0
    %p209 = por %p207, %p208
    %p210 = scmp.ne.s32.totalorder %s202, %s204
    %p211 = scmp.eq.s32.totalorder %s21, 1
    %p212 = por %p210, %p211
    %p213 = scmp.ne.s32.totalorder %s204, %s205
    %p214 = scmp.eq.s32.totalorder %s21, 0
    %p215 = por %p213, %p214
    %p216 = scmp.ne.s32.totalorder %s204, %s205
    %p217 = scmp.eq.s32.totalorder %s22, 1
    %p218 = por %p216, %p217
    %p220 = scmp.ne.s32.totalorder %s205, %s219
    %p221 = scmp.eq.s32.totalorder %s22, 0
    %p222 = por %p220, %p221
    %s224 = sadd.s32 %s223, 1
    %p227 = scmp.eq.s32.totalorder %s16, 1
    %p228 = scmp.ne.s32.totalorder %s223, %s225
    %p229 = scmp.eq.s32.totalorder %s16, 0
    %p230 = por %p228, %p229
    %p231 = scmp.ne.s32.totalorder %s223, %s225
    %p232 = scmp.eq.s32.totalorder %s21, 1
    %p233 = por %p231, %p232
    %p234 = scmp.ne.s32.totalorder %s225, %s226
    %p235 = scmp.eq.s32.totalorder %s21, 0
    %p236 = por %p234, %p235
    %p237 = scmp.ne.s32.totalorder %s225, %s226
    %p238 = scmp.eq.s32.totalorder %s22, 1
    %p239 = por %p237, %p238
    %p241 = scmp.ne.s32.totalorder %s226, %s240
    %p242 = scmp.eq.s32.totalorder %s22, 0
    %p243 = por %p241, %p242
    %s244 = ssub.s32 %s16, %s23
    %p245 = scmp.eq.s32.totalorder %s244, 0
    %s247 = sadd.s32 %s246, 1
    %s248 = scalar_select %p245, %s246, %s247
    %p251 = pneg %p245
    %p252 = scmp.eq.s32.totalorder %s16, 1
    %p253 = por %p251, %p252
    %p254 = scmp.ne.s32.totalorder %s246, %s249
    %p255 = scmp.eq.s32.totalorder %s16, 0
    %p256 = por %p254, %p255
    %p257 = scmp.ne.s32.totalorder %s246, %s249
    %p258 = scmp.eq.s32.totalorder %s21, 1
    %p259 = por %p257, %p258
    %p260 = scmp.ne.s32.totalorder %s249, %s250
    %p261 = scmp.eq.s32.totalorder %s21, 0
    %p262 = por %p260, %p261
    %p263 = scmp.ne.s32.totalorder %s249, %s250
    %p264 = scmp.eq.s32.totalorder %s22, 1
    %p265 = por %p263, %p264
    %p267 = scmp.ne.s32.totalorder %s250, %s266
    %p268 = scmp.eq.s32.totalorder %s22, 0
    %p269 = por %p267, %p268
    %p270 = scmp.le.s32.totalorder 1, %s16
    %p271 = scmp.lt.s32.totalorder %s16, 3
    %p272 = pnand %p270, %p271
    %p273 = pneg %p272
    // Predicated region
    $region9: #{_lambda_.1} parent=5 // pred_check
      _
    $region10: #{_lambda_.1} parent=5 // pred_check_branch
      %275 = sbr.rel (%p272) target = $region12
    $region11: #{_lambda_.1} parent=5 // pred_region
      %s276 = ssub.s32 %s16, 1
      // Predicated region
      $region13: #{_lambda_.1} parent=11 // pred_check
        %p277 = pneg %p89
      $region14: #{_lambda_.1} parent=11 // pred_check_branch
        %279 = sbr.rel (%p277) target = $region16
      $region15: #{_lambda_.1} parent=11 // pred_region
        _
      $region16: #{_lambda_.1} parent=11 // pred_fallthru
        _
      // Predicated region
      $region17: #{_lambda_.1} parent=11 // pred_check
        %p280 = pneg %p110
      $region18: #{_lambda_.1} parent=11 // pred_check_branch
        %282 = sbr.rel (%p280) target = $region20
      $region19: #{_lambda_.1} parent=11 // pred_region
        _
      $region20: #{_lambda_.1} parent=11 // pred_fallthru
        _
      // Predicated region
      $region21: #{_lambda_.1} parent=11 // pred_check
        %p283 = pneg %p131
      $region22: #{_lambda_.1} parent=11 // pred_check_branch
        %285 = sbr.rel (%p283) target = $region24
      $region23: #{_lambda_.1} parent=11 // pred_region
        _
      $region24: #{_lambda_.1} parent=11 // pred_fallthru
        _
      // Predicated region
      $region25: #{_lambda_.1} parent=11 // pred_check
        %p286 = pneg %p152
      $region26: #{_lambda_.1} parent=11 // pred_check_branch
        %288 = sbr.rel (%p286) target = $region28
      $region27: #{_lambda_.1} parent=11 // pred_region
        _
      $region28: #{_lambda_.1} parent=11 // pred_fallthru
        _
      // Predicated region
      $region29: #{_lambda_.1} parent=11 // pred_check
        %p289 = pneg %p173
      $region30: #{_lambda_.1} parent=11 // pred_check_branch
        %291 = sbr.rel (%p289) target = $region32
      $region31: #{_lambda_.1} parent=11 // pred_region
        _
      $region32: #{_lambda_.1} parent=11 // pred_fallthru
        _
      // Predicated region
      $region33: #{_lambda_.1} parent=11 // pred_check
        %p292 = pneg %p194
      $region34: #{_lambda_.1} parent=11 // pred_check_branch
        %294 = sbr.rel (%p292) target = $region36
      $region35: #{_lambda_.1} parent=11 // pred_region
        _
      $region36: #{_lambda_.1} parent=11 // pred_fallthru
        _
      // Predicated region
      $region37: #{_lambda_.1} parent=11 // pred_check
        %p295 = pneg %p215
      $region38: #{_lambda_.1} parent=11 // pred_check_branch
        %297 = sbr.rel (%p295) target = $region40
      $region39: #{_lambda_.1} parent=11 // pred_region
        _
      $region40: #{_lambda_.1} parent=11 // pred_fallthru
        _
      // Predicated region
      $region41: #{_lambda_.1} parent=11 // pred_check
        %p298 = pneg %p236
      $region42: #{_lambda_.1} parent=11 // pred_check_branch
        %300 = sbr.rel (%p298) target = $region44
      $region43: #{_lambda_.1} parent=11 // pred_region
        _
      $region44: #{_lambda_.1} parent=11 // pred_fallthru
        _
    $region12: #{_lambda_.1} parent=5 // pred_fallthru
      _
    %p301 = scmp.lt.s32.totalorder %s16, 2
    // Predicated region
    $region45: #{_lambda_.1} parent=5 // pred_check
      %p302 = pneg %p301
    $region46: #{_lambda_.1} parent=5 // pred_check_branch
      %304 = sbr.rel (%p302) target = $region48
    $region47: #{_lambda_.1} parent=5 // pred_region
      // Predicated region
      $region49: #{_lambda_.1} parent=47 // pred_check
        %p305 = pneg %p36
      $region50: #{_lambda_.1} parent=47 // pred_check_branch
        %307 = sbr.rel (%p305) target = $region52
      $region51: #{_lambda_.1} parent=47 // pred_region
        %p308 = scmp.lt.s32.totalorder %s16, 1
        %s309 = scalar_select %p308, %s16, 1
        %s310 = smul.addr %s309, 3
        %s311 = smul.addr %s310, 4
        %s312 = scalar_lea.vmem %s0, %s311
      $region52: #{_lambda_.1} parent=47 // pred_fallthru
        _
      // Predicated region
      $region53: #{_lambda_.1} parent=47 // pred_check
        %p313 = pneg %p62
      $region54: #{_lambda_.1} parent=47 // pred_check_branch
        %315 = sbr.rel (%p313) target = $region56
      $region55: #{_lambda_.1} parent=47 // pred_region
        %p316 = scmp.lt.s32.totalorder %s16, 1
        %s317 = scalar_select %p316, %s16, 1
        %s318 = smul.addr %s317, 2
        %s319 = smul.addr %s318, 8
        %s320 = scalar_lea.vmem %s1, %s319
      $region56: #{_lambda_.1} parent=47 // pred_fallthru
        _
    $region48: #{_lambda_.1} parent=5 // pred_fallthru
      _
    %p321 = scmp.le.s32.totalorder 1, %s16
    %p322 = scmp.lt.s32.totalorder %s16, 3
    %p323 = pnand %p321, %p322
    %p324 = pneg %p323
    // Predicated region
    $region57: #{_lambda_.1} parent=5 // pred_check
      _
    $region58: #{_lambda_.1} parent=5 // pred_check_branch
      %326 = sbr.rel (%p323) target = $region60
    $region59: #{_lambda_.1} parent=5 // pred_region
      %s327 = ssub.s32 %s16, 1
      %p328 = scmp.lt.s32.totalorder %s21, 1
      %s329 = scalar_select %p328, %s21, 1
      %s330 = smul.addr %s329, 3
      %s331 = smul.addr %s330, 4
      %s332 = scalar_lea.vmem %s0, %s331
      %p333 = pneg %p42
      %p334 = pneg %p39
      %p335 = scmp.lt.s32.totalorder %s21, 1
      %s336 = scalar_select %p335, %s21, 1
      %s337 = smul.addr %s336, 2
      %s338 = smul.addr %s337, 8
      %s339 = scalar_lea.vmem %s1, %s338
      %p340 = pneg %p68
      %p341 = pneg %p65
      %p342 = pneg %p89
      %p343 = pneg %p86
      %p344 = pneg %p110
      %p345 = pneg %p107
      %p346 = pneg %p131
      %p347 = pneg %p128
      %p348 = pneg %p152
      %p349 = pneg %p149
      %p350 = pneg %p173
      %p351 = pneg %p170
      %p352 = pneg %p194
      %p353 = pneg %p191
      %p354 = pneg %p215
      %p355 = pneg %p212
      %p356 = pneg %p236
      %p357 = pneg %p233
      %p358 = pneg %p262
      %p359 = pneg %p259
      %p360 = scmp.lt.s32.totalorder %s21, 1
      %s361 = scalar_select %p360, %s21, 1
      %s362 = smul.addr %s361, 2
      %s363 = smul.addr %s362, 8
      %s364 = scalar_lea.vmem %s10, %s363
      %p365 = scmp.lt.s32.totalorder %s21, 1
      %s366 = scalar_select %p365, %s21, 1
      %s367 = smul.addr %s366, 3
      %s368 = smul.addr %s367, 4
      %s369 = scalar_lea.vmem %s0, %s368
      %p370 = scmp.lt.s32.totalorder %s21, 1
      %s371 = scalar_select %p370, %s21, 1
      %s372 = smul.addr %s371, 2
      %s373 = smul.addr %s372, 8
      %s374 = scalar_lea.vmem %s1, %s373
      %p375 = scmp.lt.s32.totalorder %s21, 1
      %s376 = scalar_select %p375, %s21, 1
      %s377 = smul.addr %s376, 2
      %s378 = smul.addr %s377, 8
      %s379 = scalar_lea.vmem %s10, %s378
      %380 = vst [vmem:[#allocation3] sm:$0xff] 0.0
      %381 = vst [vmem:[#allocation3 + $0x8] sm:$0xff] 0.0
      %vm382 = vcmask 277504
      %383 = vst.msk [vmem:[#allocation3 + $0x10] sm:$0xff] %vm382, 0.0
      %384 = vst [vmem:[#allocation3 + $0x18] sm:$0xff] 0.0
      %385 = vst [vmem:[#allocation3 + $0x20] sm:$0xff] 0.0
      %386 = vst.msk [vmem:[#allocation3 + $0x28] sm:$0xff] %vm382, 0.0
      %387 = vst [vmem:[#allocation4] sm:$0xff] 0.0
      %388 = vst [vmem:[#allocation4 + $0x8] sm:$0xff] 0.0
      %389 = vst.msk [vmem:[#allocation4 + $0x10] sm:$0xff] %vm382, 0.0
      %v390 = vld [vmem:[%s369] sm:$0xff]
      %v391 = vld [vmem:[%s8] ss:$8 sm:$0x3]
      %v393 = vlaneseq
      %v394 = vshrl.u32 %v393, 7
      %v395 = vsub.s32 0, %v394
      %v396 = vrot.slane %v391, %v395
      %v397 = vlaneseq
      %v398 = vshrl.u32 %v397, 7
      %v399 = vsub.s32 1, %v398
      %v400 = vrot.slane %v391, %v399
      %v401 = vcombine.low %v396, %v400
      %v403 = vmul.f32 %v390, %v401
      %v405 = vcombine.high %v403, %v403
      %407 = vst [vmem:[#allocation2] sm:$0xf] %v403
      %408 = vst [vmem:[#allocation2 + $0x8] sm:$0xf] %v405
      %v409 = vld [vmem:[%s369] sm:$0xff]
      %v410 = vld [vmem:[%s369 + $0x8] sm:$0xf]
      %s411 = scalar_lea.vmem %s8, 1
      %v412 = vld [vmem:[%s411] ss:$8 sm:$0x3]
      %v414 = vlaneseq
      %v415 = vshrl.u32 %v414, 7
      %v416 = vsub.s32 0, %v415
      %v417 = vrot.slane %v412, %v416
      %v418 = vlaneseq
      %v419 = vshrl.u32 %v418, 7
      %v420 = vsub.s32 1, %v419
      %v421 = vrot.slane %v412, %v420
      %v422 = vcombine.low %v417, %v421
      %423 = vrot.lane.b32.xlu0 %v422, 1
      %v424 = vpop.permute.xlu0 %423
      %v425 = vrot.slane %v424, 4
      %vm426 = vcmask 7168
      %v427 = vsel %vm426, %v425, %v424
      %v430 = vmul.f32 %v409, %v427
      %v431 = vmul.f32 %v410, %v425
      %v434 = vcombine.low %v430, %v430
      %v435 = vcombine.low %v431, %v431
      %436 = vrot.lane.b32.xlu0 %v434, 127
      %v437 = vpop.permute.xlu0 %436
      %438 = vrot.lane.b32.xlu0 %v430, 127
      %v439 = vpop.permute.xlu0 %438
      %440 = vrot.lane.b32.xlu0 %v435, 127
      %v441 = vpop.permute.xlu0 %440
      %vm442 = vcmask 1039360
      %v443 = vsel %vm442, %v437, %v439
      %v444 = vsel %vm442, %v439, %v441
      %447 = vst [vmem:[#allocation2] sm:$0xf0] %v443
      %448 = vst [vmem:[#allocation2 + $0x8] sm:$0xf0] %v444
      %v449 = vld [vmem:[%s369] sm:$0xff]
      %v450 = vld [vmem:[%s369 + $0x8] sm:$0xf]
      %s451 = scalar_lea.vmem %s8, 2
      %v452 = vld [vmem:[%s451] ss:$8 sm:$0x3]
      %v454 = vlaneseq
      %v455 = vshrl.u32 %v454, 7
      %v456 = vsub.s32 0, %v455
      %v457 = vrot.slane %v452, %v456
      %v458 = vlaneseq
      %v459 = vshrl.u32 %v458, 7
      %v460 = vsub.s32 1, %v459
      %v461 = vrot.slane %v452, %v460
      %v462 = vcombine.low %v457, %v461
      %463 = vrot.lane.b32.xlu0 %v462, 2
      %v464 = vpop.permute.xlu0 %463
      %v465 = vrot.slane %v464, 4
      %vm466 = vcmask 15360
      %v467 = vsel %vm466, %v465, %v464
      %v470 = vmul.f32 %v449, %v467
      %v471 = vmul.f32 %v450, %v465
      %v474 = vcombine.high %v470, %v470
      %475 = vrot.lane.b32.xlu0 %v470, 126
      %v476 = vpop.permute.xlu0 %475
      %477 = vrot.lane.b32.xlu0 %v474, 126
      %v478 = vpop.permute.xlu0 %477
      %479 = vrot.lane.b32.xlu0 %v471, 126
      %v480 = vpop.permute.xlu0 %479
      %vm481 = vcmask 1031168
      %v482 = vsel %vm481, %v476, %v478
      %v483 = vsel %vm481, %v478, %v480
      %486 = vst [vmem:[#allocation2 + $0x10] sm:$0xf] %v482
      %487 = vst [vmem:[#allocation2 + $0x18] sm:$0xf] %v483
      %v488 = vld [vmem:[%s369] sm:$0xff]
      %v489 = vld [vmem:[%s369 + $0x8] sm:$0xf]
      %s490 = scalar_lea.vmem %s8, 3
      %v491 = vld [vmem:[%s490] ss:$8 sm:$0x3]
      %v493 = vlaneseq
      %v494 = vshrl.u32 %v493, 7
      %v495 = vsub.s32 0, %v494
      %v496 = vrot.slane %v491, %v495
      %v497 = vlaneseq
      %v498 = vshrl.u32 %v497, 7
      %v499 = vsub.s32 1, %v498
      %v500 = vrot.slane %v491, %v499
      %v501 = vcombine.low %v496, %v500
      %502 = vrot.lane.b32.xlu0 %v501, 3
      %v503 = vpop.permute.xlu0 %502
      %v504 = vrot.slane %v503, 4
      %vm505 = vcmask 23552
      %v506 = vsel %vm505, %v504, %v503
      %v509 = vmul.f32 %v488, %v506
      %v510 = vmul.f32 %v489, %v504
      %v513 = vcombine.low %v509, %v509
      %v514 = vcombine.low %v510, %v510
      %515 = vrot.lane.b32.xlu0 %v513, 125
      %v516 = vpop.permute.xlu0 %515
      %517 = vrot.lane.b32.xlu0 %v509, 125
      %v518 = vpop.permute.xlu0 %517
      %519 = vrot.lane.b32.xlu0 %v514, 125
      %v520 = vpop.permute.xlu0 %519
      %vm521 = vcmask 1022976
      %v522 = vsel %vm521, %v516, %v518
      %v523 = vsel %vm521, %v518, %v520
      %526 = vst [vmem:[#allocation2 + $0x10] sm:$0xf0] %v522
      %527 = vst [vmem:[#allocation2 + $0x18] sm:$0xf0] %v523
      %v528 = vld [vmem:[%s369] sm:$0xff]
      %v529 = vld [vmem:[%s369 + $0x8] sm:$0xf]
      %s530 = scalar_lea.vmem %s8, 4
      %v531 = vld [vmem:[%s530] ss:$8 sm:$0x3]
      %v533 = vlaneseq
      %v534 = vshrl.u32 %v533, 7
      %v535 = vsub.s32 0, %v534
      %v536 = vrot.slane %v531, %v535
      %v537 = vlaneseq
      %v538 = vshrl.u32 %v537, 7
      %v539 = vsub.s32 1, %v538
      %v540 = vrot.slane %v531, %v539
      %v541 = vcombine.low %v536, %v540
      %542 = vrot.lane.b32.xlu0 %v541, 4
      %v543 = vpop.permute.xlu0 %542
      %v544 = vrot.slane %v543, 4
      %vm545 = vcmask 31744
      %v546 = vsel %vm545, %v544, %v543
      %v549 = vmul.f32 %v528, %v546
      %v550 = vmul.f32 %v529, %v544
      %v553 = vcombine.high %v549, %v549
      %554 = vrot.lane.b32.xlu0 %v549, 124
      %v555 = vpop.permute.xlu0 %554
      %556 = vrot.lane.b32.xlu0 %v553, 124
      %v557 = vpop.permute.xlu0 %556
      %558 = vrot.lane.b32.xlu0 %v550, 124
      %v559 = vpop.permute.xlu0 %558
      %vm560 = vcmask 1014784
      %v561 = vsel %vm560, %v555, %v557
      %v562 = vsel %vm560, %v557, %v559
      %565 = vst [vmem:[#allocation2 + $0x20] sm:$0xf] %v561
      %566 = vst [vmem:[#allocation2 + $0x28] sm:$0xf] %v562
      %v567 = vld [vmem:[%s369] sm:$0xff]
      %v568 = vld [vmem:[%s369 + $0x8] sm:$0xf]
      %s569 = scalar_lea.vmem %s8, 5
      %v570 = vld [vmem:[%s569] ss:$8 sm:$0x3]
      %v572 = vlaneseq
      %v573 = vshrl.u32 %v572, 7
      %v574 = vsub.s32 0, %v573
      %v575 = vrot.slane %v570, %v574
      %v576 = vlaneseq
      %v577 = vshrl.u32 %v576, 7
      %v578 = vsub.s32 1, %v577
      %v579 = vrot.slane %v570, %v578
      %v580 = vcombine.low %v575, %v579
      %581 = vrot.lane.b32.xlu0 %v580, 16
      %v582 = vpop.permute.xlu0 %581
      %v583 = vrot.slane %v582, 4
      %vm584 = vcmask 130048
      %v585 = vsel %vm584, %v583, %v582
      %v588 = vmul.f32 %v567, %v585
      %v589 = vmul.f32 %v568, %v583
      %v592 = vcombine.low %v588, %v588
      %v593 = vcombine.low %v589, %v589
      %594 = vrot.lane.b32.xlu0 %v592, 112
      %v595 = vpop.permute.xlu0 %594
      %596 = vrot.lane.b32.xlu0 %v588, 112
      %v597 = vpop.permute.xlu0 %596
      %598 = vrot.lane.b32.xlu0 %v593, 112
      %v599 = vpop.permute.xlu0 %598
      %vm600 = vcmask 916480
      %v601 = vsel %vm600, %v595, %v597
      %v602 = vsel %vm600, %v597, %v599
      %605 = vst [vmem:[#allocation2 + $0x20] sm:$0xf0] %v601
      %606 = vst [vmem:[#allocation2 + $0x28] sm:$0xf0] %v602
      %v607 = vld [vmem:[%s369] sm:$0xff]
      %v608 = vld [vmem:[%s369 + $0x8] sm:$0xf]
      %s609 = scalar_lea.vmem %s8, 6
      %v610 = vld [vmem:[%s609] ss:$8 sm:$0x3]
      %v612 = vlaneseq
      %v613 = vshrl.u32 %v612, 7
      %v614 = vsub.s32 0, %v613
      %v615 = vrot.slane %v610, %v614
      %v616 = vlaneseq
      %v617 = vshrl.u32 %v616, 7
      %v618 = vsub.s32 1, %v617
      %v619 = vrot.slane %v610, %v618
      %v620 = vcombine.low %v615, %v619
      %621 = vrot.lane.b32.xlu0 %v620, 17
      %v622 = vpop.permute.xlu0 %621
      %v623 = vrot.slane %v622, 4
      %vm624 = vcmask 138240
      %v625 = vsel %vm624, %v623, %v622
      %v628 = vmul.f32 %v607, %v625
      %v629 = vmul.f32 %v608, %v623
      %v632 = vcombine.high %v628, %v628
      %633 = vrot.lane.b32.xlu0 %v628, 111
      %v634 = vpop.permute.xlu0 %633
      %635 = vrot.lane.b32.xlu0 %v632, 111
      %v636 = vpop.permute.xlu0 %635
      %637 = vrot.lane.b32.xlu0 %v629, 111
      %v638 = vpop.permute.xlu0 %637
      %vm639 = vcmask 908288
      %v640 = vsel %vm639, %v634, %v636
      %v641 = vsel %vm639, %v636, %v638
      %644 = vst [vmem:[#allocation2 + $0x30] sm:$0xf] %v640
      %645 = vst [vmem:[#allocation2 + $0x38] sm:$0xf] %v641
      %v646 = vld [vmem:[%s369] sm:$0xff]
      %v647 = vld [vmem:[%s369 + $0x8] sm:$0xf]
      %s648 = scalar_lea.vmem %s8, 7
      %v649 = vld [vmem:[%s648] ss:$8 sm:$0x3]
      %v651 = vlaneseq
      %v652 = vshrl.u32 %v651, 7
      %v653 = vsub.s32 0, %v652
      %v654 = vrot.slane %v649, %v653
      %v655 = vlaneseq
      %v656 = vshrl.u32 %v655, 7
      %v657 = vsub.s32 1, %v656
      %v658 = vrot.slane %v649, %v657
      %v659 = vcombine.low %v654, %v658
      %660 = vrot.lane.b32.xlu0 %v659, 18
      %v661 = vpop.permute.xlu0 %660
      %v662 = vrot.slane %v661, 4
      %vm663 = vcmask 146432
      %v664 = vsel %vm663, %v662, %v661
      %v667 = vmul.f32 %v646, %v664
      %v668 = vmul.f32 %v647, %v662
      %v671 = vcombine.low %v667, %v667
      %v672 = vcombine.low %v668, %v668
      %673 = vrot.lane.b32.xlu0 %v671, 110
      %v674 = vpop.permute.xlu0 %673
      %675 = vrot.lane.b32.xlu0 %v667, 110
      %v676 = vpop.permute.xlu0 %675
      %677 = vrot.lane.b32.xlu0 %v672, 110
      %v678 = vpop.permute.xlu0 %677
      %vm679 = vcmask 900096
      %v680 = vsel %vm679, %v674, %v676
      %v681 = vsel %vm679, %v676, %v678
      %684 = vst [vmem:[#allocation2 + $0x30] sm:$0xf0] %v680
      %685 = vst [vmem:[#allocation2 + $0x38] sm:$0xf0] %v681
      %v686 = vld [vmem:[%s369] sm:$0xff]
      %v687 = vld [vmem:[%s369 + $0x8] sm:$0xf]
      %s688 = scalar_lea.vmem %s8, 16
      %v689 = vld [vmem:[%s688] ss:$8 sm:$0x3]
      %v691 = vlaneseq
      %v692 = vshrl.u32 %v691, 7
      %v693 = vsub.s32 0, %v692
      %v694 = vrot.slane %v689, %v693
      %v695 = vlaneseq
      %v696 = vshrl.u32 %v695, 7
      %v697 = vsub.s32 1, %v696
      %v698 = vrot.slane %v689, %v697
      %v699 = vcombine.low %v694, %v698
      %700 = vrot.lane.b32.xlu0 %v699, 19
      %v701 = vpop.permute.xlu0 %700
      %v702 = vrot.slane %v701, 4
      %vm703 = vcmask 154624
      %v704 = vsel %vm703, %v702, %v701
      %v707 = vmul.f32 %v686, %v704
      %v708 = vmul.f32 %v687, %v702
      %v711 = vcombine.high %v707, %v707
      %712 = vrot.lane.b32.xlu0 %v707, 109
      %v713 = vpop.permute.xlu0 %712
      %714 = vrot.lane.b32.xlu0 %v711, 109
      %v715 = vpop.permute.xlu0 %714
      %716 = vrot.lane.b32.xlu0 %v708, 109
      %v717 = vpop.permute.xlu0 %716
      %vm718 = vcmask 891904
      %v719 = vsel %vm718, %v713, %v715
      %v720 = vsel %vm718, %v715, %v717
      %723 = vst [vmem:[#allocation2 + $0x40] sm:$0xf] %v719
      %724 = vst [vmem:[#allocation2 + $0x48] sm:$0xf] %v720
      %v725 = vld [vmem:[%s369] sm:$0xff]
      %v726 = vld [vmem:[%s369 + $0x8] sm:$0xf]
      %s727 = scalar_lea.vmem %s8, 17
      %v728 = vld [vmem:[%s727] ss:$8 sm:$0x3]
      %v730 = vlaneseq
      %v731 = vshrl.u32 %v730, 7
      %v732 = vsub.s32 0, %v731
      %v733 = vrot.slane %v728, %v732
      %v734 = vlaneseq
      %v735 = vshrl.u32 %v734, 7
      %v736 = vsub.s32 1, %v735
      %v737 = vrot.slane %v728, %v736
      %v738 = vcombine.low %v733, %v737
      %739 = vrot.lane.b32.xlu0 %v738, 20
      %v740 = vpop.permute.xlu0 %739
      %v741 = vrot.slane %v740, 4
      %vm742 = vcmask 162816
      %v743 = vsel %vm742, %v741, %v740
      %v746 = vmul.f32 %v725, %v743
      %v747 = vmul.f32 %v726, %v741
      %v750 = vcombine.low %v746, %v746
      %v751 = vcombine.low %v747, %v747
      %752 = vrot.lane.b32.xlu0 %v750, 108
      %v753 = vpop.permute.xlu0 %752
      %754 = vrot.lane.b32.xlu0 %v746, 108
      %v755 = vpop.permute.xlu0 %754
      %756 = vrot.lane.b32.xlu0 %v751, 108
      %v757 = vpop.permute.xlu0 %756
      %vm758 = vcmask 883712
      %v759 = vsel %vm758, %v753, %v755
      %v760 = vsel %vm758, %v755, %v757
      %763 = vst [vmem:[#allocation2 + $0x40] sm:$0xf0] %v759
      %764 = vst [vmem:[#allocation2 + $0x48] sm:$0xf0] %v760
      %v765 = vld [vmem:[%s369] sm:$0xff]
      %v766 = vld [vmem:[%s369 + $0x8] sm:$0xf]
      %s767 = scalar_lea.vmem %s8, 18
      %v768 = vld [vmem:[%s767] ss:$8 sm:$0x3]
      %v770 = vlaneseq
      %v771 = vshrl.u32 %v770, 7
      %v772 = vsub.s32 0, %v771
      %v773 = vrot.slane %v768, %v772
      %v774 = vlaneseq
      %v775 = vshrl.u32 %v774, 7
      %v776 = vsub.s32 1, %v775
      %v777 = vrot.slane %v768, %v776
      %v778 = vcombine.low %v773, %v777
      %779 = vrot.lane.b32.xlu0 %v778, 32
      %v780 = vpop.permute.xlu0 %779
      %v781 = vrot.slane %v780, 4
      %vm782 = vcmask 261120
      %v783 = vsel %vm782, %v781, %v780
      %v786 = vmul.f32 %v765, %v783
      %v787 = vmul.f32 %v766, %v781
      %v790 = vcombine.high %v786, %v786
      %791 = vrot.lane.b32.xlu0 %v786, 96
      %v792 = vpop.permute.xlu0 %791
      %793 = vrot.lane.b32.xlu0 %v790, 96
      %v794 = vpop.permute.xlu0 %793
      %795 = vrot.lane.b32.xlu0 %v787, 96
      %v796 = vpop.permute.xlu0 %795
      %vm797 = vcmask 785408
      %v798 = vsel %vm797, %v792, %v794
      %v799 = vsel %vm797, %v794, %v796
      %802 = vst [vmem:[#allocation2 + $0x50] sm:$0xf] %v798
      %803 = vst [vmem:[#allocation2 + $0x58] sm:$0xf] %v799
      %v804 = vld [vmem:[%s369] sm:$0xff]
      %v805 = vld [vmem:[%s369 + $0x8] sm:$0xf]
      %s806 = scalar_lea.vmem %s8, 19
      %v807 = vld [vmem:[%s806] ss:$8 sm:$0x3]
      %v809 = vlaneseq
      %v810 = vshrl.u32 %v809, 7
      %v811 = vsub.s32 0, %v810
      %v812 = vrot.slane %v807, %v811
      %v813 = vlaneseq
      %v814 = vshrl.u32 %v813, 7
      %v815 = vsub.s32 1, %v814
      %v816 = vrot.slane %v807, %v815
      %v817 = vcombine.low %v812, %v816
      %818 = vrot.lane.b32.xlu0 %v817, 33
      %v819 = vpop.permute.xlu0 %818
      %v820 = vrot.slane %v819, 4
      %vm821 = vcmask 269312
      %v822 = vsel %vm821, %v820, %v819
      %v825 = vmul.f32 %v804, %v822
      %v826 = vmul.f32 %v805, %v820
      %v829 = vcombine.low %v825, %v825
      %v830 = vcombine.low %v826, %v826
      %831 = vrot.lane.b32.xlu0 %v829, 95
      %v832 = vpop.permute.xlu0 %831
      %833 = vrot.lane.b32.xlu0 %v825, 95
      %v834 = vpop.permute.xlu0 %833
      %835 = vrot.lane.b32.xlu0 %v830, 95
      %v836 = vpop.permute.xlu0 %835
      %vm837 = vcmask 777216
      %v838 = vsel %vm837, %v832, %v834
      %v839 = vsel %vm837, %v834, %v836
      %842 = vst [vmem:[#allocation2 + $0x50] sm:$0xf0] %v838
      %843 = vst [vmem:[#allocation2 + $0x58] sm:$0xf0] %v839
      %v844 = vld [vmem:[%s369] sm:$0xff]
      %v845 = vld [vmem:[%s369 + $0x8] sm:$0xf]
      %s846 = scalar_lea.vmem %s8, 20
      %v847 = vld [vmem:[%s846] ss:$8 sm:$0x3]
      %v849 = vlaneseq
      %v850 = vshrl.u32 %v849, 7
      %v851 = vsub.s32 0, %v850
      %v852 = vrot.slane %v847, %v851
      %v853 = vlaneseq
      %v854 = vshrl.u32 %v853, 7
      %v855 = vsub.s32 1, %v854
      %v856 = vrot.slane %v847, %v855
      %v857 = vcombine.low %v852, %v856
      %858 = vrot.lane.b32.xlu0 %v857, 34
      %v859 = vpop.permute.xlu0 %858
      %v860 = vrot.slane %v859, 4
      %v861 = vsel %vm382, %v860, %v859
      %v864 = vmul.f32 %v844, %v861
      %v865 = vmul.f32 %v845, %v860
      %v868 = vcombine.high %v864, %v864
      %869 = vrot.lane.b32.xlu0 %v864, 94
      %v870 = vpop.permute.xlu0 %869
      %871 = vrot.lane.b32.xlu0 %v868, 94
      %v872 = vpop.permute.xlu0 %871
      %873 = vrot.lane.b32.xlu0 %v865, 94
      %v874 = vpop.permute.xlu0 %873
      %vm875 = vcmask 769024
      %v876 = vsel %vm875, %v870, %v872
      %v877 = vsel %vm875, %v872, %v874
      %880 = vst [vmem:[#allocation2 + $0x60] sm:$0xf] %v876
      %881 = vst [vmem:[#allocation2 + $0x68] sm:$0xf] %v877
      %v882 = vld [vmem:[%s369] sm:$0xff]
      %v883 = vld [vmem:[%s369 + $0x8] sm:$0xf]
      %s884 = scalar_lea.vmem %s8, 21
      %v885 = vld [vmem:[%s884] ss:$8 sm:$0x3]
      %v887 = vlaneseq
      %v888 = vshrl.u32 %v887, 7
      %v889 = vsub.s32 0, %v888
      %v890 = vrot.slane %v885, %v889
      %v891 = vlaneseq
      %v892 = vshrl.u32 %v891, 7
      %v893 = vsub.s32 1, %v892
      %v894 = vrot.slane %v885, %v893
      %v895 = vcombine.low %v890, %v894
      %896 = vrot.lane.b32.xlu0 %v895, 35
      %v897 = vpop.permute.xlu0 %896
      %v898 = vrot.slane %v897, 4
      %vm899 = vcmask 285696
      %v900 = vsel %vm899, %v898, %v897
      %v903 = vmul.f32 %v882, %v900
      %v904 = vmul.f32 %v883, %v898
      %v907 = vcombine.low %v903, %v903
      %v908 = vcombine.low %v904, %v904
      %909 = vrot.lane.b32.xlu0 %v907, 93
      %v910 = vpop.permute.xlu0 %909
      %911 = vrot.lane.b32.xlu0 %v903, 93
      %v912 = vpop.permute.xlu0 %911
      %913 = vrot.lane.b32.xlu0 %v908, 93
      %v914 = vpop.permute.xlu0 %913
      %vm915 = vcmask 760832
      %v916 = vsel %vm915, %v910, %v912
      %v917 = vsel %vm915, %v912, %v914
      %920 = vst [vmem:[#allocation2 + $0x60] sm:$0xf0] %v916
      %921 = vst [vmem:[#allocation2 + $0x68] sm:$0xf0] %v917
      %v922 = vld [vmem:[%s369] sm:$0xff]
      %v923 = vld [vmem:[%s369 + $0x8] sm:$0xf]
      %s924 = scalar_lea.vmem %s8, 22
      %v925 = vld [vmem:[%s924] ss:$8 sm:$0x3]
      %v927 = vlaneseq
      %v928 = vshrl.u32 %v927, 7
      %v929 = vsub.s32 0, %v928
      %v930 = vrot.slane %v925, %v929
      %v931 = vlaneseq
      %v932 = vshrl.u32 %v931, 7
      %v933 = vsub.s32 1, %v932
      %v934 = vrot.slane %v925, %v933
      %v935 = vcombine.low %v930, %v934
      %936 = vrot.lane.b32.xlu0 %v935, 36
      %v937 = vpop.permute.xlu0 %936
      %v938 = vrot.slane %v937, 4
      %vm939 = vcmask 293888
      %v940 = vsel %vm939, %v938, %v937
      %v943 = vmul.f32 %v922, %v940
      %v944 = vmul.f32 %v923, %v938
      %v947 = vcombine.high %v943, %v943
      %948 = vrot.lane.b32.xlu0 %v943, 92
      %v949 = vpop.permute.xlu0 %948
      %950 = vrot.lane.b32.xlu0 %v947, 92
      %v951 = vpop.permute.xlu0 %950
      %952 = vrot.lane.b32.xlu0 %v944, 92
      %v953 = vpop.permute.xlu0 %952
      %vm954 = vcmask 752640
      %v955 = vsel %vm954, %v949, %v951
      %v956 = vsel %vm954, %v951, %v953
      %959 = vst [vmem:[#allocation2 + $0x70] sm:$0xf] %v955
      %960 = vst [vmem:[#allocation2 + $0x78] sm:$0xf] %v956
      %v961 = vld [vmem:[%s369] sm:$0xff]
      %v962 = vld [vmem:[%s369 + $0x8] sm:$0xf]
      %s963 = scalar_lea.vmem %s8, 23
      %v964 = vld [vmem:[%s963] ss:$8 sm:$0x3]
      %v966 = vlaneseq
      %v967 = vshrl.u32 %v966, 7
      %v968 = vsub.s32 0, %v967
      %v969 = vrot.slane %v964, %v968
      %v970 = vlaneseq
      %v971 = vshrl.u32 %v970, 7
      %v972 = vsub.s32 1, %v971
      %v973 = vrot.slane %v964, %v972
      %v974 = vcombine.low %v969, %v973
      %975 = vrot.lane.b32.xlu0 %v974, 48
      %v976 = vpop.permute.xlu0 %975
      %v977 = vrot.slane %v976, 4
      %vm978 = vcmask 392192
      %v979 = vsel %vm978, %v977, %v976
      %v982 = vmul.f32 %v961, %v979
      %v983 = vmul.f32 %v962, %v977
      %v986 = vcombine.low %v982, %v982
      %v987 = vcombine.low %v983, %v983
      %988 = vrot.lane.b32.xlu0 %v986, 80
      %v989 = vpop.permute.xlu0 %988
      %990 = vrot.lane.b32.xlu0 %v982, 80
      %v991 = vpop.permute.xlu0 %990
      %992 = vrot.lane.b32.xlu0 %v987, 80
      %v993 = vpop.permute.xlu0 %992
      %vm994 = vcmask 654336
      %v995 = vsel %vm994, %v989, %v991
      %v996 = vsel %vm994, %v991, %v993
      %999 = vst [vmem:[#allocation2 + $0x70] sm:$0xf0] %v995
      %1000 = vst [vmem:[#allocation2 + $0x78] sm:$0xf0] %v996
      %v1001 = vld [vmem:[%s369] sm:$0xff]
      %v1002 = vld [vmem:[%s369 + $0x8] sm:$0xf]
      %s1003 = scalar_lea.vmem %s8, 32
      %v1004 = vld [vmem:[%s1003] ss:$8 sm:$0x3]
      %v1006 = vlaneseq
      %v1007 = vshrl.u32 %v1006, 7
      %v1008 = vsub.s32 0, %v1007
      %v1009 = vrot.slane %v1004, %v1008
      %v1010 = vlaneseq
      %v1011 = vshrl.u32 %v1010, 7
      %v1012 = vsub.s32 1, %v1011
      %v1013 = vrot.slane %v1004, %v1012
      %v1014 = vcombine.low %v1009, %v1013
      %1015 = vrot.lane.b32.xlu0 %v1014, 49
      %v1016 = vpop.permute.xlu0 %1015
      %v1017 = vrot.slane %v1016, 4
      %vm1018 = vcmask 400384
      %v1019 = vsel %vm1018, %v1017, %v1016
      %v1022 = vmul.f32 %v1001, %v1019
      %v1023 = vmul.f32 %v1002, %v1017
      %v1026 = vcombine.high %v1022, %v1022
      %1027 = vrot.lane.b32.xlu0 %v1022, 79
      %v1028 = vpop.permute.xlu0 %1027
      %1029 = vrot.lane.b32.xlu0 %v1026, 79
      %v1030 = vpop.permute.xlu0 %1029
      %1031 = vrot.lane.b32.xlu0 %v1023, 79
      %v1032 = vpop.permute.xlu0 %1031
      %vm1033 = vcmask 646144
      %v1034 = vsel %vm1033, %v1028, %v1030
      %v1035 = vsel %vm1033, %v1030, %v1032
      %1038 = vst [vmem:[#allocation2 + $0x80] sm:$0xf] %v1034
      %1039 = vst [vmem:[#allocation2 + $0x88] sm:$0xf] %v1035
      %v1040 = vld [vmem:[%s369] sm:$0xff]
      %v1041 = vld [vmem:[%s369 + $0x8] sm:$0xf]
      %s1042 = scalar_lea.vmem %s8, 33
      %v1043 = vld [vmem:[%s1042] ss:$8 sm:$0x3]
      %v1045 = vlaneseq
      %v1046 = vshrl.u32 %v1045, 7
      %v1047 = vsub.s32 0, %v1046
      %v1048 = vrot.slane %v1043, %v1047
      %v1049 = vlaneseq
      %v1050 = vshrl.u32 %v1049, 7
      %v1051 = vsub.s32 1, %v1050
      %v1052 = vrot.slane %v1043, %v1051
      %v1053 = vcombine.low %v1048, %v1052
      %1054 = vrot.lane.b32.xlu0 %v1053, 50
      %v1055 = vpop.permute.xlu0 %1054
      %v1056 = vrot.slane %v1055, 4
      %vm1057 = vcmask 408576
      %v1058 = vsel %vm1057, %v1056, %v1055
      %v1061 = vmul.f32 %v1040, %v1058
      %v1062 = vmul.f32 %v1041, %v1056
      %v1065 = vcombine.low %v1061, %v1061
      %v1066 = vcombine.low %v1062, %v1062
      %1067 = vrot.lane.b32.xlu0 %v1065, 78
      %v1068 = vpop.permute.xlu0 %1067
      %1069 = vrot.lane.b32.xlu0 %v1061, 78
      %v1070 = vpop.permute.xlu0 %1069
      %1071 = vrot.lane.b32.xlu0 %v1066, 78
      %v1072 = vpop.permute.xlu0 %1071
      %vm1073 = vcmask 637952
      %v1074 = vsel %vm1073, %v1068, %v1070
      %v1075 = vsel %vm1073, %v1070, %v1072
      %1078 = vst [vmem:[#allocation2 + $0x80] sm:$0xf0] %v1074
      %1079 = vst [vmem:[#allocation2 + $0x88] sm:$0xf0] %v1075
      %v1080 = vld [vmem:[%s369] sm:$0xff]
      %v1081 = vld [vmem:[%s369 + $0x8] sm:$0xf]
      %s1082 = scalar_lea.vmem %s8, 34
      %v1083 = vld [vmem:[%s1082] ss:$8 sm:$0x3]
      %v1085 = vlaneseq
      %v1086 = vshrl.u32 %v1085, 7
      %v1087 = vsub.s32 0, %v1086
      %v1088 = vrot.slane %v1083, %v1087
      %v1089 = vlaneseq
      %v1090 = vshrl.u32 %v1089, 7
      %v1091 = vsub.s32 1, %v1090
      %v1092 = vrot.slane %v1083, %v1091
      %v1093 = vcombine.low %v1088, %v1092
      %1094 = vrot.lane.b32.xlu0 %v1093, 51
      %v1095 = vpop.permute.xlu0 %1094
      %v1096 = vrot.slane %v1095, 4
      %vm1097 = vcmask 416768
      %v1098 = vsel %vm1097, %v1096, %v1095
      %v1101 = vmul.f32 %v1080, %v1098
      %v1102 = vmul.f32 %v1081, %v1096
      %v1105 = vcombine.high %v1101, %v1101
      %1106 = vrot.lane.b32.xlu0 %v1101, 77
      %v1107 = vpop.permute.xlu0 %1106
      %1108 = vrot.lane.b32.xlu0 %v1105, 77
      %v1109 = vpop.permute.xlu0 %1108
      %1110 = vrot.lane.b32.xlu0 %v1102, 77
      %v1111 = vpop.permute.xlu0 %1110
      %vm1112 = vcmask 629760
      %v1113 = vsel %vm1112, %v1107, %v1109
      %v1114 = vsel %vm1112, %v1109, %v1111
      %1117 = vst [vmem:[#allocation2 + $0x90] sm:$0xf] %v1113
      %1118 = vst [vmem:[#allocation2 + $0x98] sm:$0xf] %v1114
      %v1119 = vld [vmem:[%s369] sm:$0xff]
      %v1120 = vld [vmem:[%s369 + $0x8] sm:$0xf]
      %s1121 = scalar_lea.vmem %s8, 35
      %v1122 = vld [vmem:[%s1121] ss:$8 sm:$0x3]
      %v1124 = vlaneseq
      %v1125 = vshrl.u32 %v1124, 7
      %v1126 = vsub.s32 0, %v1125
      %v1127 = vrot.slane %v1122, %v1126
      %v1128 = vlaneseq
      %v1129 = vshrl.u32 %v1128, 7
      %v1130 = vsub.s32 1, %v1129
      %v1131 = vrot.slane %v1122, %v1130
      %v1132 = vcombine.low %v1127, %v1131
      %1133 = vrot.lane.b32.xlu0 %v1132, 52
      %v1134 = vpop.permute.xlu0 %1133
      %v1135 = vrot.slane %v1134, 4
      %vm1136 = vcmask 424960
      %v1137 = vsel %vm1136, %v1135, %v1134
      %v1140 = vmul.f32 %v1119, %v1137
      %v1141 = vmul.f32 %v1120, %v1135
      %v1144 = vcombine.low %v1140, %v1140
      %v1145 = vcombine.low %v1141, %v1141
      %1146 = vrot.lane.b32.xlu0 %v1144, 76
      %v1147 = vpop.permute.xlu0 %1146
      %1148 = vrot.lane.b32.xlu0 %v1140, 76
      %v1149 = vpop.permute.xlu0 %1148
      %1150 = vrot.lane.b32.xlu0 %v1145, 76
      %v1151 = vpop.permute.xlu0 %1150
      %vm1152 = vcmask 621568
      %v1153 = vsel %vm1152, %v1147, %v1149
      %v1154 = vsel %vm1152, %v1149, %v1151
      %1157 = vst [vmem:[#allocation2 + $0x90] sm:$0xf0] %v1153
      %1158 = vst [vmem:[#allocation2 + $0x98] sm:$0xf0] %v1154
      %v1159 = vld [vmem:[%s369] sm:$0xff]
      %v1160 = vld [vmem:[%s369 + $0x8] sm:$0xf]
      %s1161 = scalar_lea.vmem %s8, 36
      %v1162 = vld [vmem:[%s1161] ss:$8 sm:$0x3]
      %v1164 = vlaneseq
      %v1165 = vshrl.u32 %v1164, 7
      %v1166 = vsub.s32 0, %v1165
      %v1167 = vrot.slane %v1162, %v1166
      %v1168 = vlaneseq
      %v1169 = vshrl.u32 %v1168, 7
      %v1170 = vsub.s32 1, %v1169
      %v1171 = vrot.slane %v1162, %v1170
      %v1172 = vcombine.low %v1167, %v1171
      %1173 = vrot.lane.b32.xlu0 %v1172, 64
      %v1174 = vpop.permute.xlu0 %1173
      %v1175 = vrot.slane %v1174, 4
      %vm1176 = vcmask 523264
      %v1177 = vsel %vm1176, %v1175, %v1174
      %v1180 = vmul.f32 %v1159, %v1177
      %v1181 = vmul.f32 %v1160, %v1175
      %v1184 = vcombine.high %v1180, %v1180
      %1185 = vrot.lane.b32.xlu0 %v1180, 64
      %v1186 = vpop.permute.xlu0 %1185
      %1187 = vrot.lane.b32.xlu0 %v1184, 64
      %v1188 = vpop.permute.xlu0 %1187
      %1189 = vrot.lane.b32.xlu0 %v1181, 64
      %v1190 = vpop.permute.xlu0 %1189
      %v1191 = vsel %vm1176, %v1186, %v1188
      %v1192 = vsel %vm1176, %v1188, %v1190
      %1195 = vst [vmem:[#allocation2 + $0xa0] sm:$0xf] %v1191
      %1196 = vst [vmem:[#allocation2 + $0xa8] sm:$0xf] %v1192
      %v1197 = vld [vmem:[%s369] sm:$0xff]
      %v1198 = vld [vmem:[%s369 + $0x8] sm:$0xf]
      %s1199 = scalar_lea.vmem %s8, 37
      %v1200 = vld [vmem:[%s1199] ss:$8 sm:$0x3]
      %v1202 = vlaneseq
      %v1203 = vshrl.u32 %v1202, 7
      %v1204 = vsub.s32 0, %v1203
      %v1205 = vrot.slane %v1200, %v1204
      %v1206 = vlaneseq
      %v1207 = vshrl.u32 %v1206, 7
      %v1208 = vsub.s32 1, %v1207
      %v1209 = vrot.slane %v1200, %v1208
      %v1210 = vcombine.low %v1205, %v1209
      %1211 = vrot.lane.b32.xlu0 %v1210, 65
      %v1212 = vpop.permute.xlu0 %1211
      %v1213 = vrot.slane %v1212, 4
      %vm1214 = vcmask 531456
      %v1215 = vsel %vm1214, %v1213, %v1212
      %v1218 = vmul.f32 %v1197, %v1215
      %v1219 = vmul.f32 %v1198, %v1213
      %v1222 = vcombine.low %v1218, %v1218
      %v1223 = vcombine.low %v1219, %v1219
      %1224 = vrot.lane.b32.xlu0 %v1222, 63
      %v1225 = vpop.permute.xlu0 %1224
      %1226 = vrot.lane.b32.xlu0 %v1218, 63
      %v1227 = vpop.permute.xlu0 %1226
      %1228 = vrot.lane.b32.xlu0 %v1223, 63
      %v1229 = vpop.permute.xlu0 %1228
      %vm1230 = vcmask 515072
      %v1231 = vsel %vm1230, %v1225, %v1227
      %v1232 = vsel %vm1230, %v1227, %v1229
      %1235 = vst [vmem:[#allocation2 + $0xa0] sm:$0xf0] %v1231
      %1236 = vst [vmem:[#allocation2 + $0xa8] sm:$0xf0] %v1232
      %v1237 = vld [vmem:[%s369] sm:$0xff]
      %v1238 = vld [vmem:[%s369 + $0x8] sm:$0xf]
      %s1239 = scalar_lea.vmem %s8, 38
      %v1240 = vld [vmem:[%s1239] ss:$8 sm:$0x3]
      %v1242 = vlaneseq
      %v1243 = vshrl.u32 %v1242, 7
      %v1244 = vsub.s32 0, %v1243
      %v1245 = vrot.slane %v1240, %v1244
      %v1246 = vlaneseq
      %v1247 = vshrl.u32 %v1246, 7
      %v1248 = vsub.s32 1, %v1247
      %v1249 = vrot.slane %v1240, %v1248
      %v1250 = vcombine.low %v1245, %v1249
      %1251 = vrot.lane.b32.xlu0 %v1250, 66
      %v1252 = vpop.permute.xlu0 %1251
      %v1253 = vrot.slane %v1252, 4
      %vm1254 = vcmask 539648
      %v1255 = vsel %vm1254, %v1253, %v1252
      %v1258 = vmul.f32 %v1237, %v1255
      %v1259 = vmul.f32 %v1238, %v1253
      %v1262 = vcombine.high %v1258, %v1258
      %1263 = vrot.lane.b32.xlu0 %v1258, 62
      %v1264 = vpop.permute.xlu0 %1263
      %1265 = vrot.lane.b32.xlu0 %v1262, 62
      %v1266 = vpop.permute.xlu0 %1265
      %1267 = vrot.lane.b32.xlu0 %v1259, 62
      %v1268 = vpop.permute.xlu0 %1267
      %vm1269 = vcmask 506880
      %v1270 = vsel %vm1269, %v1264, %v1266
      %v1271 = vsel %vm1269, %v1266, %v1268
      %1274 = vst [vmem:[#allocation2 + $0xb0] sm:$0xf] %v1270
      %1275 = vst [vmem:[#allocation2 + $0xb8] sm:$0xf] %v1271
      %v1276 = vld [vmem:[%s369] sm:$0xff]
      %v1277 = vld [vmem:[%s369 + $0x8] sm:$0xf]
      %s1278 = scalar_lea.vmem %s8, 39
      %v1279 = vld [vmem:[%s1278] ss:$8 sm:$0x3]
      %v1281 = vlaneseq
      %v1282 = vshrl.u32 %v1281, 7
      %v1283 = vsub.s32 0, %v1282
      %v1284 = vrot.slane %v1279, %v1283
      %v1285 = vlaneseq
      %v1286 = vshrl.u32 %v1285, 7
      %v1287 = vsub.s32 1, %v1286
      %v1288 = vrot.slane %v1279, %v1287
      %v1289 = vcombine.low %v1284, %v1288
      %1290 = vrot.lane.b32.xlu0 %v1289, 67
      %v1291 = vpop.permute.xlu0 %1290
      %v1292 = vrot.slane %v1291, 4
      %vm1293 = vcmask 547840
      %v1294 = vsel %vm1293, %v1292, %v1291
      %v1297 = vmul.f32 %v1276, %v1294
      %v1298 = vmul.f32 %v1277, %v1292
      %v1301 = vcombine.low %v1297, %v1297
      %v1302 = vcombine.low %v1298, %v1298
      %1303 = vrot.lane.b32.xlu0 %v1301, 61
      %v1304 = vpop.permute.xlu0 %1303
      %1305 = vrot.lane.b32.xlu0 %v1297, 61
      %v1306 = vpop.permute.xlu0 %1305
      %1307 = vrot.lane.b32.xlu0 %v1302, 61
      %v1308 = vpop.permute.xlu0 %1307
      %vm1309 = vcmask 498688
      %v1310 = vsel %vm1309, %v1304, %v1306
      %v1311 = vsel %vm1309, %v1306, %v1308
      %1314 = vst [vmem:[#allocation2 + $0xb0] sm:$0xf0] %v1310
      %1315 = vst [vmem:[#allocation2 + $0xb8] sm:$0xf0] %v1311
      %v1316 = vld [vmem:[%s369] sm:$0xff]
      %v1317 = vld [vmem:[%s369 + $0x8] sm:$0xf]
      %s1318 = scalar_lea.vmem %s8, 48
      %v1319 = vld [vmem:[%s1318] ss:$8 sm:$0x3]
      %v1321 = vlaneseq
      %v1322 = vshrl.u32 %v1321, 7
      %v1323 = vsub.s32 0, %v1322
      %v1324 = vrot.slane %v1319, %v1323
      %v1325 = vlaneseq
      %v1326 = vshrl.u32 %v1325, 7
      %v1327 = vsub.s32 1, %v1326
      %v1328 = vrot.slane %v1319, %v1327
      %v1329 = vcombine.low %v1324, %v1328
      %1330 = vrot.lane.b32.xlu0 %v1329, 68
      %v1331 = vpop.permute.xlu0 %1330
      %v1332 = vrot.slane %v1331, 4
      %vm1333 = vcmask 556032
      %v1334 = vsel %vm1333, %v1332, %v1331
      %v1337 = vmul.f32 %v1316, %v1334
      %v1338 = vmul.f32 %v1317, %v1332
      %v1341 = vcombine.high %v1337, %v1337
      %1342 = vrot.lane.b32.xlu0 %v1337, 60
      %v1343 = vpop.permute.xlu0 %1342
      %1344 = vrot.lane.b32.xlu0 %v1341, 60
      %v1345 = vpop.permute.xlu0 %1344
      %1346 = vrot.lane.b32.xlu0 %v1338, 60
      %v1347 = vpop.permute.xlu0 %1346
      %vm1348 = vcmask 490496
      %v1349 = vsel %vm1348, %v1343, %v1345
      %v1350 = vsel %vm1348, %v1345, %v1347
      %1353 = vst [vmem:[#allocation2 + $0xc0] sm:$0xf] %v1349
      %1354 = vst [vmem:[#allocation2 + $0xc8] sm:$0xf] %v1350
      %v1355 = vld [vmem:[%s2] sm:$0xff]
      %v1356 = vld [vmem:[%s2 + $0x8] sm:$0xff]
      %v1357 = vld [vmem:[#allocation2] sm:$0xff]
      %v1358 = vld [vmem:[#allocation2 + $0x8] sm:$0xff]
      %v1359 = vld [vmem:[#allocation2 + $0x10] sm:$0xff]
      %v1360 = vld [vmem:[#allocation2 + $0x18] sm:$0xff]
      %v1361 = vld [vmem:[#allocation2 + $0x20] sm:$0xff]
      %v1362 = vld [vmem:[#allocation2 + $0x28] sm:$0xff]
      %v1363 = vld [vmem:[#allocation2 + $0x30] sm:$0xff]
      %v1364 = vld [vmem:[#allocation2 + $0x38] sm:$0xff]
      %v1365 = vld [vmem:[#allocation2 + $0x40] sm:$0xff]
      %v1366 = vld [vmem:[#allocation2 + $0x48] sm:$0xff]
      %v1367 = vld [vmem:[#allocation2 + $0x50] sm:$0xff]
      %v1368 = vld [vmem:[#allocation2 + $0x58] sm:$0xff]
      %v1369 = vld [vmem:[#allocation2 + $0x60] sm:$0xff]
      %v1370 = vld [vmem:[#allocation2 + $0x68] sm:$0xff]
      %v1371 = vld [vmem:[#allocation2 + $0x70] sm:$0xff]
      %v1372 = vld [vmem:[#allocation2 + $0x78] sm:$0xff]
      %v1373 = vld [vmem:[#allocation2 + $0x80] sm:$0xff]
      %v1374 = vld [vmem:[#allocation2 + $0x88] sm:$0xff]
      %v1375 = vld [vmem:[#allocation2 + $0x90] sm:$0xff]
      %v1376 = vld [vmem:[#allocation2 + $0x98] sm:$0xff]
      %v1377 = vld [vmem:[#allocation2 + $0xa0] sm:$0xff]
      %v1378 = vld [vmem:[#allocation2 + $0xa8] sm:$0xff]
      %v1379 = vld [vmem:[#allocation2 + $0xb0] sm:$0xff]
      %v1380 = vld [vmem:[#allocation2 + $0xb8] sm:$0xff]
      %v1381 = vld [vmem:[#allocation2 + $0xc0] sm:$0xf]
      %v1382 = vld [vmem:[#allocation2 + $0xc8] sm:$0xf]
      %v1383 = vld [vmem:[%s5] sm:$0xff]
      %v1384 = vld [vmem:[%s5 + $0x8] sm:$0xff]
      %1386 = vset.pattern.permute.xlu0 0
      %1387 = vperm.xlu0 %1386, %v1383
      %v1388 = vpop.permute.xlu0 %1387
      %1391 = vset.pattern.permute.xlu0 0
      %1392 = vperm.xlu0 %1391, %v1384
      %v1393 = vpop.permute.xlu0 %1392
      %vm1395 = vcmask 818176
      %v1397 = vsel %vm1395, %v1355, 0
      %v1400 = vsel %vm1395, %v1356, 0
      %vm1402 = vcmask 1043456
      %v1404 = vsel %vm1402, %v1381, 0
      %v1407 = vsel %vm1402, %v1382, 0
      %1409 = vmatprep.subr.mxu0 %v1358
      %1410 = vmatpush1.msra.mxu0 %v1357
      %1411 = vmatprep.subr.mxu0 %v1360
      %1412 = vmatpush1.msra.mxu0 %v1359
      %1413 = vmatprep.subr.mxu0 %v1362
      %1414 = vmatpush1.msra.mxu0 %v1361
      %1415 = vmatprep.subr.mxu0 %v1364
      %1416 = vmatpush1.msra.mxu0 %v1363
      %1417 = vmatprep.subr.mxu0 %v1366
      %1418 = vmatpush1.msra.mxu0 %v1365
      %1419 = vmatprep.subr.mxu0 %v1368
      %1420 = vmatpush1.msra.mxu0 %v1367
      %1421 = vmatprep.subr.mxu0 %v1370
      %1422 = vmatpush1.msra.mxu0 %v1369
      %1423 = vmatprep.subr.mxu0 %v1372
      %1424 = vmatpush1.msra.mxu0 %v1371
      %1425 = vmatprep.subr.mxu0 %v1374
      %1426 = vmatpush1.msra.mxu0 %v1373
      %1427 = vmatprep.subr.mxu0 %v1376
      %1428 = vmatpush1.msra.mxu0 %v1375
      %1429 = vmatprep.subr.mxu0 %v1378
      %1430 = vmatpush1.msra.mxu0 %v1377
      %1431 = vmatprep.subr.mxu0 %v1380
      %1432 = vmatpush1.msra.mxu0 %v1379
      %1433 = vmatprep.subr.mxu0 %v1407
      %1434 = vmatpush1.msra.mxu0 %v1404
      %1435 = vmatprep.subr.mxu0 0.0
      %1436 = vmatpush1.msra.mxu0 0.0
      %1437 = vmatprep.subr.mxu0 0.0
      %1438 = vmatpush1.msra.mxu0 0.0
      %1439 = vmatprep.subr.mxu0 0.0
      %1440 = vmatpush1.msra.mxu0 0.0
      %1441 = vmatprep.subr.mxu0 0.0
      %1442 = vmatpush1.msra.mxu0 0.0
      %1443 = vmatprep.subr.mxu0 0.0
      %1444 = vmatpush1.msra.mxu0 0.0
      %1445 = vmatprep.subr.mxu0 0.0
      %1446 = vmatpush1.msra.mxu0 0.0
      %1447 = vmatprep.subr.mxu0 0.0
      %1448 = vmatpush1.msra.mxu0 0.0
      %1449 = vmatprep.subr.mxu0 0.0
      %1450 = vmatpush1.msra.mxu0 0.0
      %1451 = vmatprep.subr.mxu0 0.0
      %1452 = vmatpush1.msra.mxu0 0.0
      %1453 = vmatprep.subr.mxu0 0.0
      %1454 = vmatpush1.msra.mxu0 0.0
      %1455 = vmatprep.subr.mxu0 0.0
      %1456 = vmatpush1.msra.mxu0 0.0
      %1457 = vmatprep.subr.mxu0 0.0
      %1458 = vmatpush1.msra.mxu0 0.0
      %1459 = vmatprep.subr.mxu0 0.0
      %1460 = vmatpush1.msra.mxu0 0.0
      %1461 = vmatprep.subr.mxu0 0.0
      %1462 = vmatpush1.msra.mxu0 0.0
      %1463 = vmatprep.subr.mxu0 0.0
      %1464 = vmatpush1.msra.mxu0 0.0
      %1465 = vmatprep.subr.mxu0 0.0
      %1466 = vmatpush1.msra.mxu0 0.0
      %1467 = vmatprep.subr.mxu0 0.0
      %1468 = vmatpush1.msra.mxu0 0.0
      %1469 = vmatprep.subr.mxu0 0.0
      %1470 = vmatpush1.msra.mxu0 0.0
      %1471 = vmatprep.subr.mxu0 0.0
      %1472 = vmatpush1.msra.mxu0 0.0
      %1473 = vmatprep.mubr.f32.mxu0 0.0
      %1474 = vmatmul.mubr.f32.gmra.mrb[0].mxu0 %v1397
      %v1475 = vpop.f32.mrb[0].mxu0
      %v1476 = vadd.f32 %v1388, %v1475
      %v1477 = vpop.f32.mrb[0].mxu0
      %v1478 = vadd.f32 %v1388, %v1477
      %1479 = vmatprep.mubr.f32.mxu0 0.0
      %1480 = vmatmul.mubr.f32.gmra.mrb[0].mxu0 %v1400
      %v1481 = vpop.f32.mrb[0].mxu0
      %v1482 = vadd.f32 %v1393, %v1481
      %v1483 = vpop.f32.mrb[0].mxu0
      %v1484 = vadd.f32 %v1393, %v1483
      %1485 = vdwg.mxu0
      %v1486 = vmax.f32 %v1476, 0.0
      %v1487 = vmax.f32 %v1478, 0.0
      %1490 = vrot.lane.b32.xlu0 %v1486, 17
      %v1491 = vpop.permute.xlu0 %1490
      %1492 = vrot.lane.b32.xlu0 %v1487, 17
      %v1493 = vpop.permute.xlu0 %1492
      %v1494 = vsel %vm624, %v1491, %v1493
      %vm1498 = vcmask 1047688
      %1499 = vst.msk [vmem:[#allocation3] sm:$0xff] %vm1498, %v1491
      %1500 = vst [vmem:[#allocation3 + $0x8] sm:$0xff] %v1494
      %1501 = vst.msk [vmem:[#allocation3 + $0x10] sm:$0xff] %vm624, %v1493
      %v1502 = vld [vmem:[%s374] sm:$0xff]
      %v1503 = vld [vmem:[%s374 + $0x8] sm:$0xff]
      %1506 = vrot.lane.b32.xlu0 %v1502, 17
      %v1507 = vpop.permute.xlu0 %1506
      %1508 = vrot.lane.b32.xlu0 %v1503, 17
      %v1509 = vpop.permute.xlu0 %1508
      %v1510 = vsel %vm624, %v1507, %v1509
      %1514 = vst.msk [vmem:[#allocation3 + $0x18] sm:$0xff] %vm1498, %v1507
      %1515 = vst [vmem:[#allocation3 + $0x20] sm:$0xff] %v1510
      %1516 = vst.msk [vmem:[#allocation3 + $0x28] sm:$0xff] %vm624, %v1509
      %v1517 = vld [vmem:[#allocation3] sm:$0xff]
      %v1518 = vld [vmem:[#allocation3 + $0x8] sm:$0xff]
      %v1519 = vld [vmem:[#allocation3 + $0x18] sm:$0xff]
      %v1520 = vld [vmem:[#allocation3 + $0x20] sm:$0xff]
      %v1521 = vld [vmem:[%s9] ss:$8 sm:$0x3]
      %v1523 = vlaneseq
      %v1524 = vshrl.u32 %v1523, 7
      %v1525 = vsub.s32 0, %v1524
      %v1526 = vrot.slane %v1521, %v1525
      %v1527 = vlaneseq
      %v1528 = vshrl.u32 %v1527, 7
      %v1529 = vsub.s32 1, %v1528
      %v1530 = vrot.slane %v1521, %v1529
      %v1533 = vmul.f32 %v1517, %v1526
      %v1534 = vmul.f32 %v1518, %v1530
      %v1535 = vmul.f32 %v1519, %v1526
      %v1536 = vmul.f32 %v1520, %v1530
      %1537 = vst [vmem:[#allocation2] sm:$0xff] %v1533
      %1538 = vst [vmem:[#allocation2 + $0x8] sm:$0xff] %v1534
      %1539 = vst [vmem:[#allocation2 + $0x10] sm:$0xff] %v1535
      %1540 = vst [vmem:[#allocation2 + $0x18] sm:$0xff] %v1536
      %v1541 = vld [vmem:[#allocation3] sm:$0xff]
      %v1542 = vld [vmem:[#allocation3 + $0x8] sm:$0xff]
      %v1543 = vld [vmem:[#allocation3 + $0x10] sm:$0xff]
      %v1544 = vld [vmem:[#allocation3 + $0x18] sm:$0xff]
      %v1545 = vld [vmem:[#allocation3 + $0x20] sm:$0xff]
      %v1546 = vld [vmem:[#allocation3 + $0x28] sm:$0xff]
      %s1547 = scalar_lea.vmem %s9, 1
      %v1548 = vld [vmem:[%s1547] ss:$8 sm:$0x3]
      %v1550 = vlaneseq
      %v1551 = vshrl.u32 %v1550, 7
      %v1552 = vsub.s32 0, %v1551
      %v1553 = vrot.slane %v1548, %v1552
      %v1554 = vlaneseq
      %v1555 = vshrl.u32 %v1554, 7
      %v1556 = vsub.s32 1, %v1555
      %v1557 = vrot.slane %v1548, %v1556
      %1558 = vrot.lane.b32.xlu0 %v1553, 1
      %v1559 = vpop.permute.xlu0 %1558
      %1560 = vrot.lane.b32.xlu0 %v1557, 1
      %v1561 = vpop.permute.xlu0 %1560
      %v1562 = vsel %vm426, %v1559, %v1561
      %v1566 = vmul.f32 %v1541, %v1559
      %v1567 = vmul.f32 %v1542, %v1562
      %v1568 = vmul.f32 %v1543, %v1561
      %v1569 = vmul.f32 %v1544, %v1559
      %v1570 = vmul.f32 %v1545, %v1562
      %v1571 = vmul.f32 %v1546, %v1561
      %1578 = vrot.lane.b32.xlu0 %v1566, 127
      %v1579 = vpop.permute.xlu0 %1578
      %1580 = vrot.lane.b32.xlu0 %v1567, 127
      %v1581 = vpop.permute.xlu0 %1580
      %1582 = vrot.lane.b32.xlu0 %v1568, 127
      %v1583 = vpop.permute.xlu0 %1582
      %1584 = vrot.lane.b32.xlu0 %v1569, 127
      %v1585 = vpop.permute.xlu0 %1584
      %1586 = vrot.lane.b32.xlu0 %v1570, 127
      %v1587 = vpop.permute.xlu0 %1586
      %1588 = vrot.lane.b32.xlu0 %v1571, 127
      %v1589 = vpop.permute.xlu0 %1588
      %v1590 = vsel %vm442, %v1579, %v1581
      %v1591 = vsel %vm442, %v1581, %v1583
      %v1592 = vsel %vm442, %v1585, %v1587
      %v1593 = vsel %vm442, %v1587, %v1589
      %1598 = vst [vmem:[#allocation2 + $0x20] sm:$0xff] %v1590
      %1599 = vst [vmem:[#allocation2 + $0x28] sm:$0xff] %v1591
      %1600 = vst [vmem:[#allocation2 + $0x30] sm:$0xff] %v1592
      %1601 = vst [vmem:[#allocation2 + $0x38] sm:$0xff] %v1593
      %v1602 = vld [vmem:[#allocation3] sm:$0xff]
      %v1603 = vld [vmem:[#allocation3 + $0x8] sm:$0xff]
      %v1604 = vld [vmem:[#allocation3 + $0x10] sm:$0xff]
      %v1605 = vld [vmem:[#allocation3 + $0x18] sm:$0xff]
      %v1606 = vld [vmem:[#allocation3 + $0x20] sm:$0xff]
      %v1607 = vld [vmem:[#allocation3 + $0x28] sm:$0xff]
      %s1608 = scalar_lea.vmem %s9, 2
      %v1609 = vld [vmem:[%s1608] ss:$8 sm:$0x3]
      %v1611 = vlaneseq
      %v1612 = vshrl.u32 %v1611, 7
      %v1613 = vsub.s32 0, %v1612
      %v1614 = vrot.slane %v1609, %v1613
      %v1615 = vlaneseq
      %v1616 = vshrl.u32 %v1615, 7
      %v1617 = vsub.s32 1, %v1616
      %v1618 = vrot.slane %v1609, %v1617
      %1619 = vrot.lane.b32.xlu0 %v1614, 2
      %v1620 = vpop.permute.xlu0 %1619
      %1621 = vrot.lane.b32.xlu0 %v1618, 2
      %v1622 = vpop.permute.xlu0 %1621
      %v1623 = vsel %vm466, %v1620, %v1622
      %v1627 = vmul.f32 %v1602, %v1620
      %v1628 = vmul.f32 %v1603, %v1623
      %v1629 = vmul.f32 %v1604, %v1622
      %v1630 = vmul.f32 %v1605, %v1620
      %v1631 = vmul.f32 %v1606, %v1623
      %v1632 = vmul.f32 %v1607, %v1622
      %1639 = vrot.lane.b32.xlu0 %v1627, 126
      %v1640 = vpop.permute.xlu0 %1639
      %1641 = vrot.lane.b32.xlu0 %v1628, 126
      %v1642 = vpop.permute.xlu0 %1641
      %1643 = vrot.lane.b32.xlu0 %v1629, 126
      %v1644 = vpop.permute.xlu0 %1643
      %1645 = vrot.lane.b32.xlu0 %v1630, 126
      %v1646 = vpop.permute.xlu0 %1645
      %1647 = vrot.lane.b32.xlu0 %v1631, 126
      %v1648 = vpop.permute.xlu0 %1647
      %1649 = vrot.lane.b32.xlu0 %v1632, 126
      %v1650 = vpop.permute.xlu0 %1649
      %v1651 = vsel %vm481, %v1640, %v1642
      %v1652 = vsel %vm481, %v1642, %v1644
      %v1653 = vsel %vm481, %v1646, %v1648
      %v1654 = vsel %vm481, %v1648, %v1650
      %1659 = vst [vmem:[#allocation2 + $0x40] sm:$0xff] %v1651
      %1660 = vst [vmem:[#allocation2 + $0x48] sm:$0xff] %v1652
      %1661 = vst [vmem:[#allocation2 + $0x50] sm:$0xff] %v1653
      %1662 = vst [vmem:[#allocation2 + $0x58] sm:$0xff] %v1654
      %v1663 = vld [vmem:[#allocation3] sm:$0xff]
      %v1664 = vld [vmem:[#allocation3 + $0x8] sm:$0xff]
      %v1665 = vld [vmem:[#allocation3 + $0x10] sm:$0xff]
      %v1666 = vld [vmem:[#allocation3 + $0x18] sm:$0xff]
      %v1667 = vld [vmem:[#allocation3 + $0x20] sm:$0xff]
      %v1668 = vld [vmem:[#allocation3 + $0x28] sm:$0xff]
      %s1669 = scalar_lea.vmem %s9, 3
      %v1670 = vld [vmem:[%s1669] ss:$8 sm:$0x3]
      %v1672 = vlaneseq
      %v1673 = vshrl.u32 %v1672, 7
      %v1674 = vsub.s32 0, %v1673
      %v1675 = vrot.slane %v1670, %v1674
      %v1676 = vlaneseq
      %v1677 = vshrl.u32 %v1676, 7
      %v1678 = vsub.s32 1, %v1677
      %v1679 = vrot.slane %v1670, %v1678
      %1680 = vrot.lane.b32.xlu0 %v1675, 16
      %v1681 = vpop.permute.xlu0 %1680
      %1682 = vrot.lane.b32.xlu0 %v1679, 16
      %v1683 = vpop.permute.xlu0 %1682
      %v1684 = vsel %vm584, %v1681, %v1683
      %v1688 = vmul.f32 %v1663, %v1681
      %v1689 = vmul.f32 %v1664, %v1684
      %v1690 = vmul.f32 %v1665, %v1683
      %v1691 = vmul.f32 %v1666, %v1681
      %v1692 = vmul.f32 %v1667, %v1684
      %v1693 = vmul.f32 %v1668, %v1683
      %1700 = vrot.lane.b32.xlu0 %v1688, 112
      %v1701 = vpop.permute.xlu0 %1700
      %1702 = vrot.lane.b32.xlu0 %v1689, 112
      %v1703 = vpop.permute.xlu0 %1702
      %1704 = vrot.lane.b32.xlu0 %v1690, 112
      %v1705 = vpop.permute.xlu0 %1704
      %1706 = vrot.lane.b32.xlu0 %v1691, 112
      %v1707 = vpop.permute.xlu0 %1706
      %1708 = vrot.lane.b32.xlu0 %v1692, 112
      %v1709 = vpop.permute.xlu0 %1708
      %1710 = vrot.lane.b32.xlu0 %v1693, 112
      %v1711 = vpop.permute.xlu0 %1710
      %v1712 = vsel %vm600, %v1701, %v1703
      %v1713 = vsel %vm600, %v1703, %v1705
      %v1714 = vsel %vm600, %v1707, %v1709
      %v1715 = vsel %vm600, %v1709, %v1711
      %1720 = vst [vmem:[#allocation2 + $0x60] sm:$0xff] %v1712
      %1721 = vst [vmem:[#allocation2 + $0x68] sm:$0xff] %v1713
      %1722 = vst [vmem:[#allocation2 + $0x70] sm:$0xff] %v1714
      %1723 = vst [vmem:[#allocation2 + $0x78] sm:$0xff] %v1715
      %v1724 = vld [vmem:[#allocation3] sm:$0xff]
      %v1725 = vld [vmem:[#allocation3 + $0x8] sm:$0xff]
      %v1726 = vld [vmem:[#allocation3 + $0x10] sm:$0xff]
      %v1727 = vld [vmem:[#allocation3 + $0x18] sm:$0xff]
      %v1728 = vld [vmem:[#allocation3 + $0x20] sm:$0xff]
      %v1729 = vld [vmem:[#allocation3 + $0x28] sm:$0xff]
      %s1730 = scalar_lea.vmem %s9, 4
      %v1731 = vld [vmem:[%s1730] ss:$8 sm:$0x3]
      %v1733 = vlaneseq
      %v1734 = vshrl.u32 %v1733, 7
      %v1735 = vsub.s32 0, %v1734
      %v1736 = vrot.slane %v1731, %v1735
      %v1737 = vlaneseq
      %v1738 = vshrl.u32 %v1737, 7
      %v1739 = vsub.s32 1, %v1738
      %v1740 = vrot.slane %v1731, %v1739
      %1741 = vrot.lane.b32.xlu0 %v1736, 17
      %v1742 = vpop.permute.xlu0 %1741
      %1743 = vrot.lane.b32.xlu0 %v1740, 17
      %v1744 = vpop.permute.xlu0 %1743
      %v1745 = vsel %vm624, %v1742, %v1744
      %v1749 = vmul.f32 %v1724, %v1742
      %v1750 = vmul.f32 %v1725, %v1745
      %v1751 = vmul.f32 %v1726, %v1744
      %v1752 = vmul.f32 %v1727, %v1742
      %v1753 = vmul.f32 %v1728, %v1745
      %v1754 = vmul.f32 %v1729, %v1744
      %1761 = vrot.lane.b32.xlu0 %v1749, 111
      %v1762 = vpop.permute.xlu0 %1761
      %1763 = vrot.lane.b32.xlu0 %v1750, 111
      %v1764 = vpop.permute.xlu0 %1763
      %1765 = vrot.lane.b32.xlu0 %v1751, 111
      %v1766 = vpop.permute.xlu0 %1765
      %1767 = vrot.lane.b32.xlu0 %v1752, 111
      %v1768 = vpop.permute.xlu0 %1767
      %1769 = vrot.lane.b32.xlu0 %v1753, 111
      %v1770 = vpop.permute.xlu0 %1769
      %1771 = vrot.lane.b32.xlu0 %v1754, 111
      %v1772 = vpop.permute.xlu0 %1771
      %v1773 = vsel %vm639, %v1762, %v1764
      %v1774 = vsel %vm639, %v1764, %v1766
      %v1775 = vsel %vm639, %v1768, %v1770
      %v1776 = vsel %vm639, %v1770, %v1772
      %1781 = vst [vmem:[#allocation2 + $0x80] sm:$0xff] %v1773
      %1782 = vst [vmem:[#allocation2 + $0x88] sm:$0xff] %v1774
      %1783 = vst [vmem:[#allocation2 + $0x90] sm:$0xff] %v1775
      %1784 = vst [vmem:[#allocation2 + $0x98] sm:$0xff] %v1776
      %v1785 = vld [vmem:[#allocation3] sm:$0xff]
      %v1786 = vld [vmem:[#allocation3 + $0x8] sm:$0xff]
      %v1787 = vld [vmem:[#allocation3 + $0x10] sm:$0xff]
      %v1788 = vld [vmem:[#allocation3 + $0x18] sm:$0xff]
      %v1789 = vld [vmem:[#allocation3 + $0x20] sm:$0xff]
      %v1790 = vld [vmem:[#allocation3 + $0x28] sm:$0xff]
      %s1791 = scalar_lea.vmem %s9, 5
      %v1792 = vld [vmem:[%s1791] ss:$8 sm:$0x3]
      %v1794 = vlaneseq
      %v1795 = vshrl.u32 %v1794, 7
      %v1796 = vsub.s32 0, %v1795
      %v1797 = vrot.slane %v1792, %v1796
      %v1798 = vlaneseq
      %v1799 = vshrl.u32 %v1798, 7
      %v1800 = vsub.s32 1, %v1799
      %v1801 = vrot.slane %v1792, %v1800
      %1802 = vrot.lane.b32.xlu0 %v1797, 18
      %v1803 = vpop.permute.xlu0 %1802
      %1804 = vrot.lane.b32.xlu0 %v1801, 18
      %v1805 = vpop.permute.xlu0 %1804
      %v1806 = vsel %vm663, %v1803, %v1805
      %v1810 = vmul.f32 %v1785, %v1803
      %v1811 = vmul.f32 %v1786, %v1806
      %v1812 = vmul.f32 %v1787, %v1805
      %v1813 = vmul.f32 %v1788, %v1803
      %v1814 = vmul.f32 %v1789, %v1806
      %v1815 = vmul.f32 %v1790, %v1805
      %1822 = vrot.lane.b32.xlu0 %v1810, 110
      %v1823 = vpop.permute.xlu0 %1822
      %1824 = vrot.lane.b32.xlu0 %v1811, 110
      %v1825 = vpop.permute.xlu0 %1824
      %1826 = vrot.lane.b32.xlu0 %v1812, 110
      %v1827 = vpop.permute.xlu0 %1826
      %1828 = vrot.lane.b32.xlu0 %v1813, 110
      %v1829 = vpop.permute.xlu0 %1828
      %1830 = vrot.lane.b32.xlu0 %v1814, 110
      %v1831 = vpop.permute.xlu0 %1830
      %1832 = vrot.lane.b32.xlu0 %v1815, 110
      %v1833 = vpop.permute.xlu0 %1832
      %v1834 = vsel %vm679, %v1823, %v1825
      %v1835 = vsel %vm679, %v1825, %v1827
      %v1836 = vsel %vm679, %v1829, %v1831
      %v1837 = vsel %vm679, %v1831, %v1833
      %1842 = vst [vmem:[#allocation2 + $0xa0] sm:$0xff] %v1834
      %1843 = vst [vmem:[#allocation2 + $0xa8] sm:$0xff] %v1835
      %1844 = vst [vmem:[#allocation2 + $0xb0] sm:$0xff] %v1836
      %1845 = vst [vmem:[#allocation2 + $0xb8] sm:$0xff] %v1837
      %v1846 = vld [vmem:[#allocation3] sm:$0xff]
      %v1847 = vld [vmem:[#allocation3 + $0x8] sm:$0xff]
      %v1848 = vld [vmem:[#allocation3 + $0x10] sm:$0xff]
      %v1849 = vld [vmem:[#allocation3 + $0x18] sm:$0xff]
      %v1850 = vld [vmem:[#allocation3 + $0x20] sm:$0xff]
      %v1851 = vld [vmem:[#allocation3 + $0x28] sm:$0xff]
      %s1852 = scalar_lea.vmem %s9, 6
      %v1853 = vld [vmem:[%s1852] ss:$8 sm:$0x3]
      %v1855 = vlaneseq
      %v1856 = vshrl.u32 %v1855, 7
      %v1857 = vsub.s32 0, %v1856
      %v1858 = vrot.slane %v1853, %v1857
      %v1859 = vlaneseq
      %v1860 = vshrl.u32 %v1859, 7
      %v1861 = vsub.s32 1, %v1860
      %v1862 = vrot.slane %v1853, %v1861
      %1863 = vrot.lane.b32.xlu0 %v1858, 32
      %v1864 = vpop.permute.xlu0 %1863
      %1865 = vrot.lane.b32.xlu0 %v1862, 32
      %v1866 = vpop.permute.xlu0 %1865
      %v1867 = vsel %vm782, %v1864, %v1866
      %v1871 = vmul.f32 %v1846, %v1864
      %v1872 = vmul.f32 %v1847, %v1867
      %v1873 = vmul.f32 %v1848, %v1866
      %v1874 = vmul.f32 %v1849, %v1864
      %v1875 = vmul.f32 %v1850, %v1867
      %v1876 = vmul.f32 %v1851, %v1866
      %1883 = vrot.lane.b32.xlu0 %v1871, 96
      %v1884 = vpop.permute.xlu0 %1883
      %1885 = vrot.lane.b32.xlu0 %v1872, 96
      %v1886 = vpop.permute.xlu0 %1885
      %1887 = vrot.lane.b32.xlu0 %v1873, 96
      %v1888 = vpop.permute.xlu0 %1887
      %1889 = vrot.lane.b32.xlu0 %v1874, 96
      %v1890 = vpop.permute.xlu0 %1889
      %1891 = vrot.lane.b32.xlu0 %v1875, 96
      %v1892 = vpop.permute.xlu0 %1891
      %1893 = vrot.lane.b32.xlu0 %v1876, 96
      %v1894 = vpop.permute.xlu0 %1893
      %v1895 = vsel %vm797, %v1884, %v1886
      %v1896 = vsel %vm797, %v1886, %v1888
      %v1897 = vsel %vm797, %v1890, %v1892
      %v1898 = vsel %vm797, %v1892, %v1894
      %1903 = vst [vmem:[#allocation2 + $0xc0] sm:$0xff] %v1895
      %1904 = vst [vmem:[#allocation2 + $0xc8] sm:$0xff] %v1896
      %1905 = vst [vmem:[#allocation2 + $0xd0] sm:$0xff] %v1897
      %1906 = vst [vmem:[#allocation2 + $0xd8] sm:$0xff] %v1898
      %v1907 = vld [vmem:[#allocation3] sm:$0xff]
      %v1908 = vld [vmem:[#allocation3 + $0x8] sm:$0xff]
      %v1909 = vld [vmem:[#allocation3 + $0x10] sm:$0xff]
      %v1910 = vld [vmem:[#allocation3 + $0x18] sm:$0xff]
      %v1911 = vld [vmem:[#allocation3 + $0x20] sm:$0xff]
      %v1912 = vld [vmem:[#allocation3 + $0x28] sm:$0xff]
      %s1913 = scalar_lea.vmem %s9, 7
      %v1914 = vld [vmem:[%s1913] ss:$8 sm:$0x3]
      %v1916 = vlaneseq
      %v1917 = vshrl.u32 %v1916, 7
      %v1918 = vsub.s32 0, %v1917
      %v1919 = vrot.slane %v1914, %v1918
      %v1920 = vlaneseq
      %v1921 = vshrl.u32 %v1920, 7
      %v1922 = vsub.s32 1, %v1921
      %v1923 = vrot.slane %v1914, %v1922
      %1924 = vrot.lane.b32.xlu0 %v1919, 33
      %v1925 = vpop.permute.xlu0 %1924
      %1926 = vrot.lane.b32.xlu0 %v1923, 33
      %v1927 = vpop.permute.xlu0 %1926
      %v1928 = vsel %vm821, %v1925, %v1927
      %v1932 = vmul.f32 %v1907, %v1925
      %v1933 = vmul.f32 %v1908, %v1928
      %v1934 = vmul.f32 %v1909, %v1927
      %v1935 = vmul.f32 %v1910, %v1925
      %v1936 = vmul.f32 %v1911, %v1928
      %v1937 = vmul.f32 %v1912, %v1927
      %1944 = vrot.lane.b32.xlu0 %v1932, 95
      %v1945 = vpop.permute.xlu0 %1944
      %1946 = vrot.lane.b32.xlu0 %v1933, 95
      %v1947 = vpop.permute.xlu0 %1946
      %1948 = vrot.lane.b32.xlu0 %v1934, 95
      %v1949 = vpop.permute.xlu0 %1948
      %1950 = vrot.lane.b32.xlu0 %v1935, 95
      %v1951 = vpop.permute.xlu0 %1950
      %1952 = vrot.lane.b32.xlu0 %v1936, 95
      %v1953 = vpop.permute.xlu0 %1952
      %1954 = vrot.lane.b32.xlu0 %v1937, 95
      %v1955 = vpop.permute.xlu0 %1954
      %v1956 = vsel %vm837, %v1945, %v1947
      %v1957 = vsel %vm837, %v1947, %v1949
      %v1958 = vsel %vm837, %v1951, %v1953
      %v1959 = vsel %vm837, %v1953, %v1955
      %1964 = vst [vmem:[#allocation2 + $0xe0] sm:$0xff] %v1956
      %1965 = vst [vmem:[#allocation2 + $0xe8] sm:$0xff] %v1957
      %1966 = vst [vmem:[#allocation2 + $0xf0] sm:$0xff] %v1958
      %1967 = vst [vmem:[#allocation2 + $0xf8] sm:$0xff] %v1959
      %v1968 = vld [vmem:[#allocation3] sm:$0xff]
      %v1969 = vld [vmem:[#allocation3 + $0x8] sm:$0xff]
      %v1970 = vld [vmem:[#allocation3 + $0x10] sm:$0xff]
      %v1971 = vld [vmem:[#allocation3 + $0x18] sm:$0xff]
      %v1972 = vld [vmem:[#allocation3 + $0x20] sm:$0xff]
      %v1973 = vld [vmem:[#allocation3 + $0x28] sm:$0xff]
      %s1974 = scalar_lea.vmem %s9, 16
      %v1975 = vld [vmem:[%s1974] ss:$8 sm:$0x3]
      %v1977 = vlaneseq
      %v1978 = vshrl.u32 %v1977, 7
      %v1979 = vsub.s32 0, %v1978
      %v1980 = vrot.slane %v1975, %v1979
      %v1981 = vlaneseq
      %v1982 = vshrl.u32 %v1981, 7
      %v1983 = vsub.s32 1, %v1982
      %v1984 = vrot.slane %v1975, %v1983
      %1985 = vrot.lane.b32.xlu0 %v1980, 34
      %v1986 = vpop.permute.xlu0 %1985
      %1987 = vrot.lane.b32.xlu0 %v1984, 34
      %v1988 = vpop.permute.xlu0 %1987
      %v1989 = vsel %vm382, %v1986, %v1988
      %v1993 = vmul.f32 %v1968, %v1986
      %v1994 = vmul.f32 %v1969, %v1989
      %v1995 = vmul.f32 %v1970, %v1988
      %v1996 = vmul.f32 %v1971, %v1986
      %v1997 = vmul.f32 %v1972, %v1989
      %v1998 = vmul.f32 %v1973, %v1988
      %2005 = vrot.lane.b32.xlu0 %v1993, 94
      %v2006 = vpop.permute.xlu0 %2005
      %2007 = vrot.lane.b32.xlu0 %v1994, 94
      %v2008 = vpop.permute.xlu0 %2007
      %2009 = vrot.lane.b32.xlu0 %v1995, 94
      %v2010 = vpop.permute.xlu0 %2009
      %2011 = vrot.lane.b32.xlu0 %v1996, 94
      %v2012 = vpop.permute.xlu0 %2011
      %2013 = vrot.lane.b32.xlu0 %v1997, 94
      %v2014 = vpop.permute.xlu0 %2013
      %2015 = vrot.lane.b32.xlu0 %v1998, 94
      %v2016 = vpop.permute.xlu0 %2015
      %v2017 = vsel %vm875, %v2006, %v2008
      %v2018 = vsel %vm875, %v2008, %v2010
      %v2019 = vsel %vm875, %v2012, %v2014
      %v2020 = vsel %vm875, %v2014, %v2016
      %2025 = vst [vmem:[#allocation2 + $0x100] sm:$0xff] %v2017
      %2026 = vst [vmem:[#allocation2 + $0x108] sm:$0xff] %v2018
      %2027 = vst [vmem:[#allocation2 + $0x110] sm:$0xff] %v2019
      %2028 = vst [vmem:[#allocation2 + $0x118] sm:$0xff] %v2020
      %v2029 = vld [vmem:[%s3] sm:$0xff]
      %v2030 = vld [vmem:[%s3 + $0x8] sm:$0xff]
      %v2031 = vld [vmem:[#allocation2] sm:$0xff]
      %v2032 = vld [vmem:[#allocation2 + $0x8] sm:$0xff]
      %v2033 = vld [vmem:[#allocation2 + $0x10] sm:$0xff]
      %v2034 = vld [vmem:[#allocation2 + $0x18] sm:$0xff]
      %v2035 = vld [vmem:[#allocation2 + $0x20] sm:$0xff]
      %v2036 = vld [vmem:[#allocation2 + $0x28] sm:$0xff]
      %v2037 = vld [vmem:[#allocation2 + $0x30] sm:$0xff]
      %v2038 = vld [vmem:[#allocation2 + $0x38] sm:$0xff]
      %v2039 = vld [vmem:[#allocation2 + $0x40] sm:$0xff]
      %v2040 = vld [vmem:[#allocation2 + $0x48] sm:$0xff]
      %v2041 = vld [vmem:[#allocation2 + $0x50] sm:$0xff]
      %v2042 = vld [vmem:[#allocation2 + $0x58] sm:$0xff]
      %v2043 = vld [vmem:[#allocation2 + $0x60] sm:$0xff]
      %v2044 = vld [vmem:[#allocation2 + $0x68] sm:$0xff]
      %v2045 = vld [vmem:[#allocation2 + $0x70] sm:$0xff]
      %v2046 = vld [vmem:[#allocation2 + $0x78] sm:$0xff]
      %v2047 = vld [vmem:[#allocation2 + $0x80] sm:$0xff]
      %v2048 = vld [vmem:[#allocation2 + $0x88] sm:$0xff]
      %v2049 = vld [vmem:[#allocation2 + $0x90] sm:$0xff]
      %v2050 = vld [vmem:[#allocation2 + $0x98] sm:$0xff]
      %v2051 = vld [vmem:[#allocation2 + $0xa0] sm:$0xff]
      %v2052 = vld [vmem:[#allocation2 + $0xa8] sm:$0xff]
      %v2053 = vld [vmem:[#allocation2 + $0xb0] sm:$0xff]
      %v2054 = vld [vmem:[#allocation2 + $0xb8] sm:$0xff]
      %v2055 = vld [vmem:[#allocation2 + $0xc0] sm:$0xff]
      %v2056 = vld [vmem:[#allocation2 + $0xc8] sm:$0xff]
      %v2057 = vld [vmem:[#allocation2 + $0xd0] sm:$0xff]
      %v2058 = vld [vmem:[#allocation2 + $0xd8] sm:$0xff]
      %v2059 = vld [vmem:[#allocation2 + $0xe0] sm:$0xff]
      %v2060 = vld [vmem:[#allocation2 + $0xe8] sm:$0xff]
      %v2061 = vld [vmem:[#allocation2 + $0xf0] sm:$0xff]
      %v2062 = vld [vmem:[#allocation2 + $0xf8] sm:$0xff]
      %v2063 = vld [vmem:[#allocation2 + $0x100] sm:$0xff]
      %v2064 = vld [vmem:[#allocation2 + $0x108] sm:$0xff]
      %v2065 = vld [vmem:[#allocation2 + $0x110] sm:$0xff]
      %v2066 = vld [vmem:[#allocation2 + $0x118] sm:$0xff]
      %v2067 = vld [vmem:[%s6] sm:$0xff]
      %2069 = vset.pattern.permute.xlu0 0
      %2070 = vperm.xlu0 %2069, %v2067
      %v2071 = vpop.permute.xlu0 %2070
      %v2074 = vsel %vm584, %v2030, 0
      %2076 = vmatprep.subr.mxu0 %v2032
      %2077 = vmatpush1.msra.mxu0 %v2031
      %2078 = vmatprep.subr.mxu0 %v2034
      %2079 = vmatpush1.msra.mxu0 %v2033
      %2080 = vmatprep.subr.mxu0 %v2036
      %2081 = vmatpush1.msra.mxu0 %v2035
      %2082 = vmatprep.subr.mxu0 %v2038
      %2083 = vmatpush1.msra.mxu0 %v2037
      %2084 = vmatprep.subr.mxu0 %v2040
      %2085 = vmatpush1.msra.mxu0 %v2039
      %2086 = vmatprep.subr.mxu0 %v2042
      %2087 = vmatpush1.msra.mxu0 %v2041
      %2088 = vmatprep.subr.mxu0 %v2044
      %2089 = vmatpush1.msra.mxu0 %v2043
      %2090 = vmatprep.subr.mxu0 %v2046
      %2091 = vmatpush1.msra.mxu0 %v2045
      %2092 = vmatprep.subr.mxu0 %v2048
      %2093 = vmatpush1.msra.mxu0 %v2047
      %2094 = vmatprep.subr.mxu0 %v2050
      %2095 = vmatpush1.msra.mxu0 %v2049
      %2096 = vmatprep.subr.mxu0 %v2052
      %2097 = vmatpush1.msra.mxu0 %v2051
      %2098 = vmatprep.subr.mxu0 %v2054
      %2099 = vmatpush1.msra.mxu0 %v2053
      %2100 = vmatprep.subr.mxu0 %v2056
      %2101 = vmatpush1.msra.mxu0 %v2055
      %2102 = vmatprep.subr.mxu0 %v2058
      %2103 = vmatpush1.msra.mxu0 %v2057
      %2104 = vmatprep.subr.mxu0 %v2060
      %2105 = vmatpush1.msra.mxu0 %v2059
      %2106 = vmatprep.subr.mxu0 %v2062
      %2107 = vmatpush1.msra.mxu0 %v2061
      %2108 = vmatprep.subr.mxu0 %v2064
      %2109 = vmatpush1.msra.mxu0 %v2063
      %2110 = vmatprep.subr.mxu0 %v2066
      %2111 = vmatpush1.msra.mxu0 %v2065
      %2112 = vmatprep.subr.mxu0 0.0
      %2113 = vmatpush1.msra.mxu0 0.0
      %2114 = vmatprep.subr.mxu0 0.0
      %2115 = vmatpush1.msra.mxu0 0.0
      %2116 = vmatprep.subr.mxu0 0.0
      %2117 = vmatpush1.msra.mxu0 0.0
      %2118 = vmatprep.subr.mxu0 0.0
      %2119 = vmatpush1.msra.mxu0 0.0
      %2120 = vmatprep.subr.mxu0 0.0
      %2121 = vmatpush1.msra.mxu0 0.0
      %2122 = vmatprep.subr.mxu0 0.0
      %2123 = vmatpush1.msra.mxu0 0.0
      %2124 = vmatprep.subr.mxu0 0.0
      %2125 = vmatpush1.msra.mxu0 0.0
      %2126 = vmatprep.subr.mxu0 0.0
      %2127 = vmatpush1.msra.mxu0 0.0
      %2128 = vmatprep.subr.mxu0 0.0
      %2129 = vmatpush1.msra.mxu0 0.0
      %2130 = vmatprep.subr.mxu0 0.0
      %2131 = vmatpush1.msra.mxu0 0.0
      %2132 = vmatprep.subr.mxu0 0.0
      %2133 = vmatpush1.msra.mxu0 0.0
      %2134 = vmatprep.subr.mxu0 0.0
      %2135 = vmatpush1.msra.mxu0 0.0
      %2136 = vmatprep.subr.mxu0 0.0
      %2137 = vmatpush1.msra.mxu0 0.0
      %2138 = vmatprep.subr.mxu0 0.0
      %2139 = vmatpush1.msra.mxu0 0.0
      %2140 = vmatprep.mubr.f32.mxu0 %v2074
      %2141 = vmatmul.mubr.f32.gmra.mrb[0].mxu0 %v2029
      %v2142 = vpop.f32.mrb[0].mxu0
      %v2143 = vadd.f32 %v2071, %v2142
      %v2144 = vpop.f32.mrb[0].mxu0
      %v2145 = vadd.f32 %v2071, %v2144
      %2146 = vdwg.mxu0
      %v2147 = vmax.f32 %v2143, 0.0
      %v2148 = vmax.f32 %v2145, 0.0
      %2151 = vrot.lane.b32.xlu0 %v2147, 17
      %v2152 = vpop.permute.xlu0 %2151
      %2153 = vrot.lane.b32.xlu0 %v2148, 17
      %v2154 = vpop.permute.xlu0 %2153
      %v2155 = vsel %vm624, %v2152, %v2154
      %2159 = vst.msk [vmem:[#allocation4] sm:$0xff] %vm1498, %v2152
      %2160 = vst [vmem:[#allocation4 + $0x8] sm:$0xff] %v2155
      %2161 = vst.msk [vmem:[#allocation4 + $0x10] sm:$0xff] %vm624, %v2154
      %v2162 = vld [vmem:[#allocation4] sm:$0xff]
      %v2163 = vld [vmem:[#allocation4 + $0x8] sm:$0xff]
      %v2164 = vld [vmem:[%s9] ss:$8 sm:$0x3]
      %v2166 = vlaneseq
      %v2167 = vshrl.u32 %v2166, 7
      %v2168 = vsub.s32 0, %v2167
      %v2169 = vrot.slane %v2164, %v2168
      %v2170 = vlaneseq
      %v2171 = vshrl.u32 %v2170, 7
      %v2172 = vsub.s32 1, %v2171
      %v2173 = vrot.slane %v2164, %v2172
      %v2176 = vmul.f32 %v2162, %v2169
      %v2177 = vmul.f32 %v2163, %v2173
      %2178 = vst [vmem:[#allocation2] sm:$0xff] %v2176
      %2179 = vst [vmem:[#allocation2 + $0x8] sm:$0xff] %v2177
      %v2180 = vld [vmem:[#allocation4] sm:$0xff]
      %v2181 = vld [vmem:[#allocation4 + $0x8] sm:$0xff]
      %v2182 = vld [vmem:[#allocation4 + $0x10] sm:$0xff]
      %v2183 = vld [vmem:[%s1547] ss:$8 sm:$0x3]
      %v2185 = vlaneseq
      %v2186 = vshrl.u32 %v2185, 7
      %v2187 = vsub.s32 0, %v2186
      %v2188 = vrot.slane %v2183, %v2187
      %v2189 = vlaneseq
      %v2190 = vshrl.u32 %v2189, 7
      %v2191 = vsub.s32 1, %v2190
      %v2192 = vrot.slane %v2183, %v2191
      %2193 = vrot.lane.b32.xlu0 %v2188, 1
      %v2194 = vpop.permute.xlu0 %2193
      %2195 = vrot.lane.b32.xlu0 %v2192, 1
      %v2196 = vpop.permute.xlu0 %2195
      %v2197 = vsel %vm426, %v2194, %v2196
      %v2201 = vmul.f32 %v2180, %v2194
      %v2202 = vmul.f32 %v2181, %v2197
      %v2203 = vmul.f32 %v2182, %v2196
      %2207 = vrot.lane.b32.xlu0 %v2201, 127
      %v2208 = vpop.permute.xlu0 %2207
      %2209 = vrot.lane.b32.xlu0 %v2202, 127
      %v2210 = vpop.permute.xlu0 %2209
      %2211 = vrot.lane.b32.xlu0 %v2203, 127
      %v2212 = vpop.permute.xlu0 %2211
      %v2213 = vsel %vm442, %v2208, %v2210
      %v2214 = vsel %vm442, %v2210, %v2212
      %2217 = vst [vmem:[#allocation2 + $0x10] sm:$0xff] %v2213
      %2218 = vst [vmem:[#allocation2 + $0x18] sm:$0xff] %v2214
      %v2219 = vld [vmem:[#allocation4] sm:$0xff]
      %v2220 = vld [vmem:[#allocation4 + $0x8] sm:$0xff]
      %v2221 = vld [vmem:[#allocation4 + $0x10] sm:$0xff]
      %v2222 = vld [vmem:[%s1608] ss:$8 sm:$0x3]
      %v2224 = vlaneseq
      %v2225 = vshrl.u32 %v2224, 7
      %v2226 = vsub.s32 0, %v2225
      %v2227 = vrot.slane %v2222, %v2226
      %v2228 = vlaneseq
      %v2229 = vshrl.u32 %v2228, 7
      %v2230 = vsub.s32 1, %v2229
      %v2231 = vrot.slane %v2222, %v2230
      %2232 = vrot.lane.b32.xlu0 %v2227, 2
      %v2233 = vpop.permute.xlu0 %2232
      %2234 = vrot.lane.b32.xlu0 %v2231, 2
      %v2235 = vpop.permute.xlu0 %2234
      %v2236 = vsel %vm466, %v2233, %v2235
      %v2240 = vmul.f32 %v2219, %v2233
      %v2241 = vmul.f32 %v2220, %v2236
      %v2242 = vmul.f32 %v2221, %v2235
      %2246 = vrot.lane.b32.xlu0 %v2240, 126
      %v2247 = vpop.permute.xlu0 %2246
      %2248 = vrot.lane.b32.xlu0 %v2241, 126
      %v2249 = vpop.permute.xlu0 %2248
      %2250 = vrot.lane.b32.xlu0 %v2242, 126
      %v2251 = vpop.permute.xlu0 %2250
      %v2252 = vsel %vm481, %v2247, %v2249
      %v2253 = vsel %vm481, %v2249, %v2251
      %2256 = vst [vmem:[#allocation2 + $0x20] sm:$0xff] %v2252
      %2257 = vst [vmem:[#allocation2 + $0x28] sm:$0xff] %v2253
      %v2258 = vld [vmem:[#allocation4] sm:$0xff]
      %v2259 = vld [vmem:[#allocation4 + $0x8] sm:$0xff]
      %v2260 = vld [vmem:[#allocation4 + $0x10] sm:$0xff]
      %v2261 = vld [vmem:[%s1669] ss:$8 sm:$0x3]
      %v2263 = vlaneseq
      %v2264 = vshrl.u32 %v2263, 7
      %v2265 = vsub.s32 0, %v2264
      %v2266 = vrot.slane %v2261, %v2265
      %v2267 = vlaneseq
      %v2268 = vshrl.u32 %v2267, 7
      %v2269 = vsub.s32 1, %v2268
      %v2270 = vrot.slane %v2261, %v2269
      %2271 = vrot.lane.b32.xlu0 %v2266, 16
      %v2272 = vpop.permute.xlu0 %2271
      %2273 = vrot.lane.b32.xlu0 %v2270, 16
      %v2274 = vpop.permute.xlu0 %2273
      %v2275 = vsel %vm584, %v2272, %v2274
      %v2279 = vmul.f32 %v2258, %v2272
      %v2280 = vmul.f32 %v2259, %v2275
      %v2281 = vmul.f32 %v2260, %v2274
      %2285 = vrot.lane.b32.xlu0 %v2279, 112
      %v2286 = vpop.permute.xlu0 %2285
      %2287 = vrot.lane.b32.xlu0 %v2280, 112
      %v2288 = vpop.permute.xlu0 %2287
      %2289 = vrot.lane.b32.xlu0 %v2281, 112
      %v2290 = vpop.permute.xlu0 %2289
      %v2291 = vsel %vm600, %v2286, %v2288
      %v2292 = vsel %vm600, %v2288, %v2290
      %2295 = vst [vmem:[#allocation2 + $0x30] sm:$0xff] %v2291
      %2296 = vst [vmem:[#allocation2 + $0x38] sm:$0xff] %v2292
      %v2297 = vld [vmem:[#allocation4] sm:$0xff]
      %v2298 = vld [vmem:[#allocation4 + $0x8] sm:$0xff]
      %v2299 = vld [vmem:[#allocation4 + $0x10] sm:$0xff]
      %v2300 = vld [vmem:[%s1730] ss:$8 sm:$0x3]
      %v2302 = vlaneseq
      %v2303 = vshrl.u32 %v2302, 7
      %v2304 = vsub.s32 0, %v2303
      %v2305 = vrot.slane %v2300, %v2304
      %v2306 = vlaneseq
      %v2307 = vshrl.u32 %v2306, 7
      %v2308 = vsub.s32 1, %v2307
      %v2309 = vrot.slane %v2300, %v2308
      %2310 = vrot.lane.b32.xlu0 %v2305, 17
      %v2311 = vpop.permute.xlu0 %2310
      %2312 = vrot.lane.b32.xlu0 %v2309, 17
      %v2313 = vpop.permute.xlu0 %2312
      %v2314 = vsel %vm624, %v2311, %v2313
      %v2318 = vmul.f32 %v2297, %v2311
      %v2319 = vmul.f32 %v2298, %v2314
      %v2320 = vmul.f32 %v2299, %v2313
      %2324 = vrot.lane.b32.xlu0 %v2318, 111
      %v2325 = vpop.permute.xlu0 %2324
      %2326 = vrot.lane.b32.xlu0 %v2319, 111
      %v2327 = vpop.permute.xlu0 %2326
      %2328 = vrot.lane.b32.xlu0 %v2320, 111
      %v2329 = vpop.permute.xlu0 %2328
      %v2330 = vsel %vm639, %v2325, %v2327
      %v2331 = vsel %vm639, %v2327, %v2329
      %2334 = vst [vmem:[#allocation2 + $0x40] sm:$0xff] %v2330
      %2335 = vst [vmem:[#allocation2 + $0x48] sm:$0xff] %v2331
      %v2336 = vld [vmem:[#allocation4] sm:$0xff]
      %v2337 = vld [vmem:[#allocation4 + $0x8] sm:$0xff]
      %v2338 = vld [vmem:[#allocation4 + $0x10] sm:$0xff]
      %v2339 = vld [vmem:[%s1791] ss:$8 sm:$0x3]
      %v2341 = vlaneseq
      %v2342 = vshrl.u32 %v2341, 7
      %v2343 = vsub.s32 0, %v2342
      %v2344 = vrot.slane %v2339, %v2343
      %v2345 = vlaneseq
      %v2346 = vshrl.u32 %v2345, 7
      %v2347 = vsub.s32 1, %v2346
      %v2348 = vrot.slane %v2339, %v2347
      %2349 = vrot.lane.b32.xlu0 %v2344, 18
      %v2350 = vpop.permute.xlu0 %2349
      %2351 = vrot.lane.b32.xlu0 %v2348, 18
      %v2352 = vpop.permute.xlu0 %2351
      %v2353 = vsel %vm663, %v2350, %v2352
      %v2357 = vmul.f32 %v2336, %v2350
      %v2358 = vmul.f32 %v2337, %v2353
      %v2359 = vmul.f32 %v2338, %v2352
      %2363 = vrot.lane.b32.xlu0 %v2357, 110
      %v2364 = vpop.permute.xlu0 %2363
      %2365 = vrot.lane.b32.xlu0 %v2358, 110
      %v2366 = vpop.permute.xlu0 %2365
      %2367 = vrot.lane.b32.xlu0 %v2359, 110
      %v2368 = vpop.permute.xlu0 %2367
      %v2369 = vsel %vm679, %v2364, %v2366
      %v2370 = vsel %vm679, %v2366, %v2368
      %2373 = vst [vmem:[#allocation2 + $0x50] sm:$0xff] %v2369
      %2374 = vst [vmem:[#allocation2 + $0x58] sm:$0xff] %v2370
      %v2375 = vld [vmem:[#allocation4] sm:$0xff]
      %v2376 = vld [vmem:[#allocation4 + $0x8] sm:$0xff]
      %v2377 = vld [vmem:[#allocation4 + $0x10] sm:$0xff]
      %v2378 = vld [vmem:[%s1852] ss:$8 sm:$0x3]
      %v2380 = vlaneseq
      %v2381 = vshrl.u32 %v2380, 7
      %v2382 = vsub.s32 0, %v2381
      %v2383 = vrot.slane %v2378, %v2382
      %v2384 = vlaneseq
      %v2385 = vshrl.u32 %v2384, 7
      %v2386 = vsub.s32 1, %v2385
      %v2387 = vrot.slane %v2378, %v2386
      %2388 = vrot.lane.b32.xlu0 %v2383, 32
      %v2389 = vpop.permute.xlu0 %2388
      %2390 = vrot.lane.b32.xlu0 %v2387, 32
      %v2391 = vpop.permute.xlu0 %2390
      %v2392 = vsel %vm782, %v2389, %v2391
      %v2396 = vmul.f32 %v2375, %v2389
      %v2397 = vmul.f32 %v2376, %v2392
      %v2398 = vmul.f32 %v2377, %v2391
      %2402 = vrot.lane.b32.xlu0 %v2396, 96
      %v2403 = vpop.permute.xlu0 %2402
      %2404 = vrot.lane.b32.xlu0 %v2397, 96
      %v2405 = vpop.permute.xlu0 %2404
      %2406 = vrot.lane.b32.xlu0 %v2398, 96
      %v2407 = vpop.permute.xlu0 %2406
      %v2408 = vsel %vm797, %v2403, %v2405
      %v2409 = vsel %vm797, %v2405, %v2407
      %2412 = vst [vmem:[#allocation2 + $0x60] sm:$0xff] %v2408
      %2413 = vst [vmem:[#allocation2 + $0x68] sm:$0xff] %v2409
      %v2414 = vld [vmem:[#allocation4] sm:$0xff]
      %v2415 = vld [vmem:[#allocation4 + $0x8] sm:$0xff]
      %v2416 = vld [vmem:[#allocation4 + $0x10] sm:$0xff]
      %v2417 = vld [vmem:[%s1913] ss:$8 sm:$0x3]
      %v2419 = vlaneseq
      %v2420 = vshrl.u32 %v2419, 7
      %v2421 = vsub.s32 0, %v2420
      %v2422 = vrot.slane %v2417, %v2421
      %v2423 = vlaneseq
      %v2424 = vshrl.u32 %v2423, 7
      %v2425 = vsub.s32 1, %v2424
      %v2426 = vrot.slane %v2417, %v2425
      %2427 = vrot.lane.b32.xlu0 %v2422, 33
      %v2428 = vpop.permute.xlu0 %2427
      %2429 = vrot.lane.b32.xlu0 %v2426, 33
      %v2430 = vpop.permute.xlu0 %2429
      %v2431 = vsel %vm821, %v2428, %v2430
      %v2435 = vmul.f32 %v2414, %v2428
      %v2436 = vmul.f32 %v2415, %v2431
      %v2437 = vmul.f32 %v2416, %v2430
      %2441 = vrot.lane.b32.xlu0 %v2435, 95
      %v2442 = vpop.permute.xlu0 %2441
      %2443 = vrot.lane.b32.xlu0 %v2436, 95
      %v2444 = vpop.permute.xlu0 %2443
      %2445 = vrot.lane.b32.xlu0 %v2437, 95
      %v2446 = vpop.permute.xlu0 %2445
      %v2447 = vsel %vm837, %v2442, %v2444
      %v2448 = vsel %vm837, %v2444, %v2446
      %2451 = vst [vmem:[#allocation2 + $0x70] sm:$0xff] %v2447
      %2452 = vst [vmem:[#allocation2 + $0x78] sm:$0xff] %v2448
      %v2453 = vld [vmem:[#allocation4] sm:$0xff]
      %v2454 = vld [vmem:[#allocation4 + $0x8] sm:$0xff]
      %v2455 = vld [vmem:[#allocation4 + $0x10] sm:$0xff]
      %v2456 = vld [vmem:[%s1974] ss:$8 sm:$0x3]
      %v2458 = vlaneseq
      %v2459 = vshrl.u32 %v2458, 7
      %v2460 = vsub.s32 0, %v2459
      %v2461 = vrot.slane %v2456, %v2460
      %v2462 = vlaneseq
      %v2463 = vshrl.u32 %v2462, 7
      %v2464 = vsub.s32 1, %v2463
      %v2465 = vrot.slane %v2456, %v2464
      %2466 = vrot.lane.b32.xlu0 %v2461, 34
      %v2467 = vpop.permute.xlu0 %2466
      %2468 = vrot.lane.b32.xlu0 %v2465, 34
      %v2469 = vpop.permute.xlu0 %2468
      %v2470 = vsel %vm382, %v2467, %v2469
      %v2474 = vmul.f32 %v2453, %v2467
      %v2475 = vmul.f32 %v2454, %v2470
      %v2476 = vmul.f32 %v2455, %v2469
      %2480 = vrot.lane.b32.xlu0 %v2474, 94
      %v2481 = vpop.permute.xlu0 %2480
      %2482 = vrot.lane.b32.xlu0 %v2475, 94
      %v2483 = vpop.permute.xlu0 %2482
      %2484 = vrot.lane.b32.xlu0 %v2476, 94
      %v2485 = vpop.permute.xlu0 %2484
      %v2486 = vsel %vm875, %v2481, %v2483
      %v2487 = vsel %vm875, %v2483, %v2485
      %2490 = vst [vmem:[#allocation2 + $0x80] sm:$0xff] %v2486
      %2491 = vst [vmem:[#allocation2 + $0x88] sm:$0xff] %v2487
      %v2492 = vld [vmem:[%s4] sm:$0xff]
      %v2493 = vld [vmem:[#allocation2] sm:$0xff]
      %v2494 = vld [vmem:[#allocation2 + $0x8] sm:$0xff]
      %v2495 = vld [vmem:[#allocation2 + $0x10] sm:$0xff]
      %v2496 = vld [vmem:[#allocation2 + $0x18] sm:$0xff]
      %v2497 = vld [vmem:[#allocation2 + $0x20] sm:$0xff]
      %v2498 = vld [vmem:[#allocation2 + $0x28] sm:$0xff]
      %v2499 = vld [vmem:[#allocation2 + $0x30] sm:$0xff]
      %v2500 = vld [vmem:[#allocation2 + $0x38] sm:$0xff]
      %v2501 = vld [vmem:[#allocation2 + $0x40] sm:$0xff]
      %v2502 = vld [vmem:[#allocation2 + $0x48] sm:$0xff]
      %v2503 = vld [vmem:[#allocation2 + $0x50] sm:$0xff]
      %v2504 = vld [vmem:[#allocation2 + $0x58] sm:$0xff]
      %v2505 = vld [vmem:[#allocation2 + $0x60] sm:$0xff]
      %v2506 = vld [vmem:[#allocation2 + $0x68] sm:$0xff]
      %v2507 = vld [vmem:[#allocation2 + $0x70] sm:$0xff]
      %v2508 = vld [vmem:[#allocation2 + $0x78] sm:$0xff]
      %v2509 = vld [vmem:[#allocation2 + $0x80] sm:$0xff]
      %v2510 = vld [vmem:[#allocation2 + $0x88] sm:$0xff]
      %v2511 = vld [vmem:[%s7] sm:$0xff]
      %2513 = vset.pattern.permute.xlu0 0
      %2514 = vperm.xlu0 %2513, %v2511
      %v2515 = vpop.permute.xlu0 %2514
      %vm2517 = vcmask 588800
      %v2519 = vsel %vm2517, %v2492, 0
      %2521 = vmatprep.subr.mxu0 %v2494
      %2522 = vmatpush1.msra.mxu0 %v2493
      %2523 = vmatprep.subr.mxu0 %v2496
      %2524 = vmatpush1.msra.mxu0 %v2495
      %2525 = vmatprep.subr.mxu0 %v2498
      %2526 = vmatpush1.msra.mxu0 %v2497
      %2527 = vmatprep.subr.mxu0 %v2500
      %2528 = vmatpush1.msra.mxu0 %v2499
      %2529 = vmatprep.subr.mxu0 %v2502
      %2530 = vmatpush1.msra.mxu0 %v2501
      %2531 = vmatprep.subr.mxu0 %v2504
      %2532 = vmatpush1.msra.mxu0 %v2503
      %2533 = vmatprep.subr.mxu0 %v2506
      %2534 = vmatpush1.msra.mxu0 %v2505
      %2535 = vmatprep.subr.mxu0 %v2508
      %2536 = vmatpush1.msra.mxu0 %v2507
      %2537 = vmatprep.subr.mxu0 %v2510
      %2538 = vmatpush1.msra.mxu0 %v2509
      %2539 = vmatprep.subr.mxu0 0.0
      %2540 = vmatpush1.msra.mxu0 0.0
      %2541 = vmatprep.subr.mxu0 0.0
      %2542 = vmatpush1.msra.mxu0 0.0
      %2543 = vmatprep.subr.mxu0 0.0
      %2544 = vmatpush1.msra.mxu0 0.0
      %2545 = vmatprep.subr.mxu0 0.0
      %2546 = vmatpush1.msra.mxu0 0.0
      %2547 = vmatprep.subr.mxu0 0.0
      %2548 = vmatpush1.msra.mxu0 0.0
      %2549 = vmatprep.subr.mxu0 0.0
      %2550 = vmatpush1.msra.mxu0 0.0
      %2551 = vmatprep.subr.mxu0 0.0
      %2552 = vmatpush1.msra.mxu0 0.0
      %2553 = vmatprep.subr.mxu0 0.0
      %2554 = vmatpush1.msra.mxu0 0.0
      %2555 = vmatprep.subr.mxu0 0.0
      %2556 = vmatpush1.msra.mxu0 0.0
      %2557 = vmatprep.subr.mxu0 0.0
      %2558 = vmatpush1.msra.mxu0 0.0
      %2559 = vmatprep.subr.mxu0 0.0
      %2560 = vmatpush1.msra.mxu0 0.0
      %2561 = vmatprep.subr.mxu0 0.0
      %2562 = vmatpush1.msra.mxu0 0.0
      %2563 = vmatprep.subr.mxu0 0.0
      %2564 = vmatpush1.msra.mxu0 0.0
      %2565 = vmatprep.subr.mxu0 0.0
      %2566 = vmatpush1.msra.mxu0 0.0
      %2567 = vmatprep.subr.mxu0 0.0
      %2568 = vmatpush1.msra.mxu0 0.0
      %2569 = vmatprep.subr.mxu0 0.0
      %2570 = vmatpush1.msra.mxu0 0.0
      %2571 = vmatprep.subr.mxu0 0.0
      %2572 = vmatpush1.msra.mxu0 0.0
      %2573 = vmatprep.subr.mxu0 0.0
      %2574 = vmatpush1.msra.mxu0 0.0
      %2575 = vmatprep.subr.mxu0 0.0
      %2576 = vmatpush1.msra.mxu0 0.0
      %2577 = vmatprep.subr.mxu0 0.0
      %2578 = vmatpush1.msra.mxu0 0.0
      %2579 = vmatprep.subr.mxu0 0.0
      %2580 = vmatpush1.msra.mxu0 0.0
      %2581 = vmatprep.subr.mxu0 0.0
      %2582 = vmatpush1.msra.mxu0 0.0
      %2583 = vmatprep.subr.mxu0 0.0
      %2584 = vmatpush1.msra.mxu0 0.0
      %2585 = vmatprep.mubr.f32.mxu0 0.0
      %2586 = vmatmul.mubr.f32.gmra.mrb[0].mxu0 %v2519
      %v2587 = vpop.f32.mrb[0].mxu0
      %v2588 = vadd.f32 %v2515, %v2587
      %v2589 = vpop.f32.mrb[0].mxu0
      %v2590 = vadd.f32 %v2515, %v2589
      %2591 = vdwg.mxu0
      %v2592 = vadd.f32 %v2588, %v1482
      %v2593 = vadd.f32 %v2590, %v1484
      %v2594 = vmax.f32 %v2592, 0.0
      %v2595 = vmax.f32 %v2593, 0.0
      %2596 = vst [vmem:[%s379] sm:$0xff] %v2594
      %2597 = vst [vmem:[%s379 + $0x8] sm:$0xff] %v2595
      %p2598 = scmp.lt.s32.totalorder %s21, 1
      %s2599 = scalar_select %p2598, %s21, 1
      %s2600 = smul.addr %s2599, 2
      %s2601 = smul.addr %s2600, 8
      %s2602 = scalar_lea.vmem %s10, %s2601
      // Predicated region
      $region61: #{_lambda_.1} parent=59 // pred_check
        %p2603 = pneg %p259
      $region62: #{_lambda_.1} parent=59 // pred_check_branch
        %2605 = sbr.rel (%p2603) target = $region64
      $region63: #{_lambda_.1} parent=59 // pred_region
        _
      $region64: #{_lambda_.1} parent=59 // pred_fallthru
        _
    $region60: #{_lambda_.1} parent=5 // pred_fallthru
      _
    %p2606 = scmp.le.s32.totalorder 2, %s16
    // Predicated region
    $region65: #{_lambda_.1} parent=5 // pred_check
      %p2607 = pneg %p2606
    $region66: #{_lambda_.1} parent=5 // pred_check_branch
      %2609 = sbr.rel (%p2607) target = $region68
    $region67: #{_lambda_.1} parent=5 // pred_region
      %s2610 = ssub.s32 %s16, 2
      // Predicated region
      $region69: #{_lambda_.1} parent=67 // pred_check
        %p2611 = pneg %p265
      $region70: #{_lambda_.1} parent=67 // pred_check_branch
        %2613 = sbr.rel (%p2611) target = $region72
      $region71: #{_lambda_.1} parent=67 // pred_region
        %p2614 = scmp.lt.s32.totalorder %s22, 1
        %s2615 = scalar_select %p2614, %s22, 1
        %s2616 = smul.addr %s2615, 2
        %s2617 = smul.addr %s2616, 8
        %s2618 = scalar_lea.vmem %s10, %s2617
      $region72: #{_lambda_.1} parent=67 // pred_fallthru
        _
    $region68: #{_lambda_.1} parent=5 // pred_fallthru
      _
  $region6: #{_lambda_.1} parent=0 // loop_footer
    %s20 = sadd.s32 1, %s16
  $region7: #{_lambda_.1} parent=0 // loop_footer_branch
    %15 = sbr.rel target = $region3
  $region8: #{_lambda_.1} parent=0 // loop_exit
    _

</llo_original>
